<compile_context>
chip_gen: v6e
topology: v6e:2x2x1
jax: 0.10.0
libtpu: 0.0.40
codegen_flags: <defaults>
</compile_context>

<pallas_src>
import jax
import jax.numpy as jnp
from jax.experimental import pallas as pl
from jax.experimental.pallas import tpu as pltpu


# ---------------------------------------------------------------------------
# Kernel
# ---------------------------------------------------------------------------
def textumc_kernel(emb_ref, w1_ref, b1_ref, w2_ref, b2_ref, out_ref):
    # Cast matmul operands to bf16 *in VMEM* (no-op if already bf16); the MXU
    # accumulates in f32 via preferred_element_type.
    emb = emb_ref[...].astype(jnp.bfloat16)
    w1 = w1_ref[...].astype(jnp.bfloat16)
    w2 = w2_ref[...].astype(jnp.bfloat16)

    # Projection layer 1: Linear(E -> H) + ReLU (bias add + ReLU in f32 / VPU).
    h = jnp.dot(emb, w1, preferred_element_type=jnp.float32)
    h = jnp.maximum(h + b1_ref[...], 0.0)

    # Projection layer 2: Linear(H -> R), then the extra F.relu from forward().
    z = jnp.dot(h.astype(jnp.bfloat16), w2, preferred_element_type=jnp.float32)
    z = jnp.maximum(z + b2_ref[...], 0.0)

    # F.normalize(x, dim=1): x / max(||x||_2, 1e-12).
    # rsqrt(max(sumsq, eps^2)) == 1 / max(||x||, eps); rsqrt uses the EUP slot,
    # the divide becomes a cheap VPU multiply.
    sumsq = jnp.sum(z * z, axis=-1, keepdims=True)
    inv_norm = jax.lax.rsqrt(jnp.maximum(sumsq, 1e-24))
    y = z * inv_norm

    # torch.nan_to_num(x, nan=0.0). (Default nan_to_num also clamps +/-inf, but
    # after normalization inf rows become NaN and are zeroed in both impls.)
    y = jnp.where(jnp.isnan(y), 0.0, y)

    out_ref[...] = y.astype(out_ref.dtype)


# ---------------------------------------------------------------------------
# Tiling helpers
# ---------------------------------------------------------------------------
_ROW_ALIGN = 16  # covers bf16 (16,128) and f32 (8,128) sublane tiling


def _round_up(x: int, m: int) -> int:
    return ((x + m - 1) // m) * m


def _vmem_capacity_bytes() -> int:
    """Per-core VMEM capacity; conservative (v7x: 64 MiB) if query fails."""
    try:
        info = pltpu.get_tpu_info()
        cap = getattr(info, "vmem_capacity_bytes", None)
        if cap:
            return int(cap)
    except Exception:
        pass
    return 64 * 1024 * 1024


def _pick_tile_b(B: int, cap: int) -> int:
    """Row-tile size: aligned, capped, and >= 2 grid steps when B allows.

    * multiples of 16 (256 for large B) keep blocks legal for f32/bf16 layouts
      and keep every MXU pass full / output stores unmasked.
    * >= 2 grid steps lets v7x's two TensorCores both take tiles; the ~0.35 us
      extra step is noise on single-TC v5e/v6e.
    * cap is generation-aware (VMEM-bounded) and set by the caller.
    """
    if B < 2 * _ROW_ALIGN:
        return _round_up(B, _ROW_ALIGN)          # tiny batch: one aligned tile
    if B <= 512:
        return _round_up(pl.cdiv(B, 2), _ROW_ALIGN)   # 2 aligned tiles
    return min(_round_up(pl.cdiv(B, 2), 256), cap)    # MXU-aligned, capped


# ---------------------------------------------------------------------------
# Wrapper
# ---------------------------------------------------------------------------
def textumc_forward(embeddings, w1, b1, w2, b2, *, tile_b=None,
                    out_dtype=jnp.float32):
    """embeddings: [B, E] (f32 or bf16); w1/w2 ideally stored bf16 (see
    init_params); b1/b2: [1,H]/[1,R]. Returns [B, R] L2-normalized rows in
    `out_dtype` (pass jnp.bfloat16 to halve output writeback if acceptable)."""
    B, E = embeddings.shape
    H = w1.shape[-1]
    R = w2.shape[-1]

    vmem_cap = _vmem_capacity_bytes()
    small_vmem = vmem_cap <= 64 * 1024 * 1024          # v7x per-TC
    if tile_b is None:
        tile_b = _pick_tile_b(B, cap=1024 if small_vmem else 2048)
    vmem_limit = (40 if small_vmem else 80) * 1024 * 1024

    # Pad awkward batch sizes up to a tile multiple (rows sliced off below).
    padded_B = _round_up(B, tile_b)
    emb_in = embeddings
    if padded_B != B:
        emb_in = jnp.pad(embeddings, ((0, padded_B - B), (0, 0)))
    grid = (padded_B // tile_b,)

    # Biases stay f32 (tiny); reshape/astype are no-ops when already (1,·) f32.
    b1_in = jnp.asarray(b1, jnp.float32).reshape(1, H)
    b2_in = jnp.asarray(b2, jnp.float32).reshape(1, R)

    cost = pl.CostEstimate(
        flops=2 * padded_B * (E * H + H * R),
        transcendentals=padded_B,  # one rsqrt per row
        bytes_accessed=(emb_in.size * emb_in.dtype.itemsize
                        + w1.size * w1.dtype.itemsize
                        + w2.size * w2.dtype.itemsize
                        + (H + R) * 4
                        + padded_B * R * jnp.dtype(out_dtype).itemsize),
    )

    resident = lambda i: (0, 0)  # constant index -> loaded once
    once = pl.Buffered(buffer_count=1)

    out = pl.pallas_call(
        textumc_kernel,
        out_shape=jax.ShapeDtypeStruct((padded_B, R), out_dtype),
        grid=grid,
        in_specs=[
            # embeddings tile: streamed per grid step, double-buffered.
            pl.BlockSpec((tile_b, E), lambda i: (i, 0)),
            # resident weights / biases: single-buffered (never change).
            pl.BlockSpec((E, H), resident, pipeline_mode=once),
            pl.BlockSpec((1, H), resident, pipeline_mode=once),
            pl.BlockSpec((H, R), resident, pipeline_mode=once),
            pl.BlockSpec((1, R), resident, pipeline_mode=once),
        ],
        out_specs=pl.BlockSpec((tile_b, R), lambda i: (i, 0)),
        compiler_params=pltpu.CompilerParams(
            dimension_semantics=("parallel",),   # shard batch tiles across TCs
            vmem_limit_bytes=vmem_limit,
        ),
        cost_estimate=cost,
    )(emb_in, w1, b1_in, w2, b2_in)

    return out[:B] if padded_B != B else out


def init_params(key, embedding_dim, hidden_dim, reduced_dim):
    """PyTorch-Linear-style init. Weights are stored in bf16 once, here (so no
    per-call convert pass); biases stay f32."""
    k1, k2, k3, k4 = jax.random.split(key, 4)
    lim1 = 1.0 / (embedding_dim ** 0.5)
    lim2 = 1.0 / (hidden_dim ** 0.5)
    w1 = jax.random.uniform(k1, (embedding_dim, hidden_dim), jnp.float32,
                            -lim1, lim1).astype(jnp.bfloat16)
    b1 = jax.random.uniform(k2, (1, hidden_dim), jnp.float32, -lim1, lim1)
    w2 = jax.random.uniform(k3, (hidden_dim, reduced_dim), jnp.float32,
                            -lim2, lim2).astype(jnp.bfloat16)
    b2 = jax.random.uniform(k4, (1, reduced_dim), jnp.float32, -lim2, lim2)
    return w1, b1, w2, b2


# ---------------------------------------------------------------------------
# References
# ---------------------------------------------------------------------------
def _reference_bf16(embeddings, w1, b1, w2, b2):
    """Plain-JAX reference mirroring the kernel's bf16-operand / f32-accum math."""
    h = jnp.dot(embeddings.astype(jnp.bfloat16), w1.astype(jnp.bfloat16),
                preferred_element_type=jnp.float32)
    h = jnp.maximum(h + b1, 0.0)
    z = jnp.dot(h.astype(jnp.bfloat16), w2.astype(jnp.bfloat16),
                preferred_element_type=jnp.float32)
    z = jnp.maximum(z + b2, 0.0)
    inv = jax.lax.rsqrt(jnp.maximum(jnp.sum(z * z, axis=-1, keepdims=True), 1e-24))
    return jnp.nan_to_num(z * inv)


def _reference_f32(embeddings, w1, b1, w2, b2):
    h = jnp.maximum(embeddings @ w1.astype(jnp.float32) + b1, 0.0)
    z = jnp.maximum(h @ w2.astype(jnp.float32) + b2, 0.0)
    n = jnp.maximum(jnp.sqrt(jnp.sum(z * z, axis=-1, keepdims=True)), 1e-12)
    return jnp.nan_to_num(z / n)


if __name__ == "__main__":
    # ModelConfig dims: E=1024, H=768, R=256 (shipped batch_size=256).
    E, H, R = 1024, 768, 256

    key = jax.random.PRNGKey(0)
    k_emb1, k_emb2, k_par = jax.random.split(key, 3)
    w1, b1, w2, b2 = init_params(k_par, E, H, R)

    # Case 1: B=300 -> padded to 2 x 256-row tiles (padding + 2-step grid path).
    B1 = 300
    emb1 = jax.random.normal(k_emb1, (B1, E), dtype=jnp.float32)
    out1 = jax.block_until_ready(textumc_forward(emb1, w1, b1, w2, b2))

    # Case 2: B=16 -> single full-array tile (no padding, grid=(1,)).
    B2 = 16
    emb2 = jax.random.normal(k_emb2, (B2, E), dtype=jnp.float32)
    out2 = jax.block_until_ready(textumc_forward(emb2, w1, b1, w2, b2))

    for emb, out, B in ((emb1, out1, B1), (emb2, out2, B2)):
        assert out.shape == (B, R)
        assert bool(jnp.all(jnp.isfinite(out)))
        y_bf16 = _reference_bf16(emb, w1, b1, w2, b2)
        y_f32 = _reference_f32(emb, w1, b1, w2, b2)
        # Tight vs the bf16-operand reference (same math as the kernel).
        assert float(jnp.max(jnp.abs(out - y_bf16))) < 5e-3
        # Loose vs the full-f32 reference (bf16 operand rounding only).
        assert float(jnp.max(jnp.abs(out - y_f32))) < 5e-2

    print("KERNEL_OK")
</pallas_src>

<mosaic_0001>
module attributes {stable_mosaic.version = 11 : i64} {
  func.func @textumc_kernel(%arg0: i32, %arg1: memref<160x1024xf32, #tpu.memory_space<vmem>>, %arg2: memref<1024x768xbf16, #tpu.memory_space<vmem>>, %arg3: memref<1x768xf32, #tpu.memory_space<vmem>>, %arg4: memref<768x256xbf16, #tpu.memory_space<vmem>>, %arg5: memref<1x256xf32, #tpu.memory_space<vmem>>, %arg6: memref<160x256xf32, #tpu.memory_space<vmem>>) attributes {dimension_semantics = [#tpu.dimension_semantics<parallel>], iteration_bounds = array<i64: 2>, scalar_prefetch = 0 : i64, scratch_operands = 0 : i64, tpu.core_type = #tpu.core_type<tc>, window_params = [{transform_indices = @transform_0, window_bounds = array<i64: 160, 1024>}, {pipeline_mode = #tpu.pipeline_mode<synchronous>, transform_indices = @transform_1, window_bounds = array<i64: 1024, 768>}, {pipeline_mode = #tpu.pipeline_mode<synchronous>, transform_indices = @transform_2, window_bounds = array<i64: 1, 768>}, {pipeline_mode = #tpu.pipeline_mode<synchronous>, transform_indices = @transform_3, window_bounds = array<i64: 768, 256>}, {pipeline_mode = #tpu.pipeline_mode<synchronous>, transform_indices = @transform_4, window_bounds = array<i64: 1, 256>}, {transform_indices = @transform_5, window_bounds = array<i64: 160, 256>}]} {
    %c0 = arith.constant 0 : index
    %c0_0 = arith.constant 0 : index
    %0 = vector.load %arg1[%c0, %c0_0] : memref<160x1024xf32, #tpu.memory_space<vmem>>, vector<160x1024xf32>
    %1 = arith.truncf %0 : vector<160x1024xf32> to vector<160x1024xbf16>
    %c0_1 = arith.constant 0 : index
    %c0_2 = arith.constant 0 : index
    %2 = vector.load %arg2[%c0_1, %c0_2] : memref<1024x768xbf16, #tpu.memory_space<vmem>>, vector<1024x768xbf16>
    %c0_3 = arith.constant 0 : index
    %c0_4 = arith.constant 0 : index
    %3 = vector.load %arg4[%c0_3, %c0_4] : memref<768x256xbf16, #tpu.memory_space<vmem>>, vector<768x256xbf16>
    %cst = arith.constant dense<0.000000e+00> : vector<160x768xf32>
    %4 = tpu.matmul %1, %2, %cst {dimension_numbers = #tpu.dot_dimension_numbers<[1], [0], [0], [1], [0, 0, 1, 1], [], []>} : vector<160x1024xbf16>, vector<1024x768xbf16>, vector<160x768xf32> -> vector<160x768xf32>
    %c0_5 = arith.constant 0 : index
    %c0_6 = arith.constant 0 : index
    %5 = vector.load %arg3[%c0_5, %c0_6] : memref<1x768xf32, #tpu.memory_space<vmem>>, vector<1x768xf32>
    %6 = vector.broadcast %5 : vector<1x768xf32> to vector<160x768xf32>
    %7 = arith.addf %4, %6 : vector<160x768xf32>
    %cst_7 = arith.constant 0.000000e+00 : f32
    %8 = vector.broadcast %cst_7 : f32 to vector<160x768xf32>
    %9 = arith.maximumf %7, %8 : vector<160x768xf32>
    %10 = arith.truncf %9 : vector<160x768xf32> to vector<160x768xbf16>
    %cst_8 = arith.constant dense<0.000000e+00> : vector<160x256xf32>
    %11 = tpu.matmul %10, %3, %cst_8 {dimension_numbers = #tpu.dot_dimension_numbers<[1], [0], [0], [1], [0, 0, 1, 1], [], []>} : vector<160x768xbf16>, vector<768x256xbf16>, vector<160x256xf32> -> vector<160x256xf32>
    %c0_9 = arith.constant 0 : index
    %c0_10 = arith.constant 0 : index
    %12 = vector.load %arg5[%c0_9, %c0_10] : memref<1x256xf32, #tpu.memory_space<vmem>>, vector<1x256xf32>
    %13 = vector.broadcast %12 : vector<1x256xf32> to vector<160x256xf32>
    %14 = arith.addf %11, %13 : vector<160x256xf32>
    %cst_11 = arith.constant 0.000000e+00 : f32
    %15 = vector.broadcast %cst_11 : f32 to vector<160x256xf32>
    %16 = arith.maximumf %14, %15 : vector<160x256xf32>
    %17 = arith.mulf %16, %16 : vector<160x256xf32>
    %cst_12 = arith.constant dense<0.000000e+00> : vector<160xf32>
    %18 = vector.multi_reduction <add>, %17, %cst_12 [1] : vector<160x256xf32> to vector<160xf32>
    %19 = vector.shape_cast %18 : vector<160xf32> to vector<160x1xf32>
    %cst_13 = arith.constant 1.000000e-24 : f32
    %20 = vector.broadcast %cst_13 : f32 to vector<160x1xf32>
    %21 = arith.maximumf %19, %20 : vector<160x1xf32>
    %22 = math.rsqrt %21 : vector<160x1xf32>
    %23 = vector.broadcast %22 : vector<160x1xf32> to vector<160x256xf32>
    %24 = arith.mulf %16, %23 : vector<160x256xf32>
    %25 = arith.cmpf one, %24, %24 : vector<160x256xf32>
    %cst_14 = arith.constant 0.000000e+00 : f32
    %26 = vector.broadcast %cst_14 : f32 to vector<160x256xf32>
    %27 = arith.select %25, %26, %24 : vector<160x256xi1>, vector<160x256xf32>
    %c0_15 = arith.constant 0 : index
    %c0_16 = arith.constant 0 : index
    %28 = vector.load %arg6[%c0_15, %c0_16] : memref<160x256xf32, #tpu.memory_space<vmem>>, vector<160x256xf32>
    tpu.vector_store %arg6[%c0_15, %c0_16], %27 {strides = array<i32>} : memref<160x256xf32, #tpu.memory_space<vmem>>, vector<160x256xf32>,
    return
  }
  func.func @transform_0(%arg0: i32) -> (i32, i32) {
    %c0_i32 = arith.constant 0 : i32
    %c0_i32_0 = arith.constant 0 : i32
    return %arg0, %c0_i32 : i32, i32
  }
  func.func @transform_1(%arg0: i32) -> (i32, i32) {
    %c0_i32 = arith.constant 0 : i32
    %c0_i32_0 = arith.constant 0 : i32
    %c0_i32_1 = arith.constant 0 : i32
    return %c0_i32, %c0_i32_0 : i32, i32
  }
  func.func @transform_2(%arg0: i32) -> (i32, i32) {
    %c0_i32 = arith.constant 0 : i32
    %c0_i32_0 = arith.constant 0 : i32
    %c0_i32_1 = arith.constant 0 : i32
    return %c0_i32, %c0_i32_0 : i32, i32
  }
  func.func @transform_3(%arg0: i32) -> (i32, i32) {
    %c0_i32 = arith.constant 0 : i32
    %c0_i32_0 = arith.constant 0 : i32
    %c0_i32_1 = arith.constant 0 : i32
    return %c0_i32, %c0_i32_0 : i32, i32
  }
  func.func @transform_4(%arg0: i32) -> (i32, i32) {
    %c0_i32 = arith.constant 0 : i32
    %c0_i32_0 = arith.constant 0 : i32
    %c0_i32_1 = arith.constant 0 : i32
    return %c0_i32, %c0_i32_0 : i32, i32
  }
  func.func @transform_5(%arg0: i32) -> (i32, i32) {
    %c0_i32 = arith.constant 0 : i32
    %c0_i32_0 = arith.constant 0 : i32
    return %arg0, %c0_i32 : i32, i32
  }
}

</mosaic_0001>

<llo_original>
// kernel: tpu_custom_call.1
$region0: #{tpu_custom_call.1}
  #allocation0 [shape = 'u32[]', space=smem, size = 0x4, offset = 0x4, fixed_abs, tag = 'smem constant byte address 0x4 - core index']
  #allocation1 [shape = 'u32[144,128]{1,0:T(1,128)}', space=vmem, size = 0x12000, scoped, tag = 'internal scratch']
  %s0 = inlined_call_operand.hbm [shape: f32[320,1024], index: 0, kind: input, shape index: {}]
  %s1 = inlined_call_operand.hbm [shape: bf16[1024,768], index: 1, kind: input, shape index: {}]
  %s2 = inlined_call_operand.hbm [shape: f32[1,768], index: 2, kind: input, shape index: {}]
  %s3 = inlined_call_operand.hbm [shape: bf16[768,256], index: 3, kind: input, shape index: {}]
  %s4 = inlined_call_operand.hbm [shape: f32[1,256], index: 4, kind: input, shape index: {}]
  %s5 = inlined_call_operand.hbm [shape: f32[320,256], index: 5, kind: output, shape index: {}]
  %s6 = sld [smem:[#allocation0]]
  $region73: #{tpu_custom_call.1} parent=0
    _
  %s8 = ssub.s32 1, %s6
  %s9 = scalar_select 0, %s8, %s6
  $region1: #{tpu_custom_call.1} parent=0
    #allocation2 [shape = 'u8[1310720]{0}', space=vmem, size = 0x140000, scoped, tag = 'input window, operand 0']
    #allocation3 [shape = 's32[2]{0}', space=sflag, size = 0x8, scoped, tag = 'scoped memory for tpu_custom_call.1']
    #allocation4 [shape = 's32[2]{0}', space=sflag, size = 0x8, scoped, tag = 'scoped memory for tpu_custom_call.1']
    #allocation5 [shape = 'u8[1572864]{0}', space=vmem, size = 0x180000, scoped, tag = 'input window, operand 1, single buffered']
    #allocation6 [shape = 's32[1]{0}', space=sflag, size = 0x4, scoped, tag = 'scoped memory for tpu_custom_call.1']
    #allocation7 [shape = 'u8[3072]{0}', space=vmem, size = 0xc00, scoped, tag = 'input window, operand 2, single buffered']
    #allocation8 [shape = 'u8[393216]{0}', space=vmem, size = 0x60000, scoped, tag = 'input window, operand 3, single buffered']
    #allocation9 [shape = 's32[1]{0}', space=sflag, size = 0x4, scoped, tag = 'scoped memory for tpu_custom_call.1']
    #allocation10 [shape = 'u8[1024]{0}', space=vmem, size = 0x400, scoped, tag = 'input window, operand 4, single buffered']
    #allocation11 [shape = 'u8[327680]{0}', space=vmem, size = 0x50000, scoped, tag = 'output window, operand 0']
    %10 = vsyncpa [#allocation3], 0
    %s11 = scalar_lea.sflag [#allocation3], 1
    %12 = vsyncpa %s11, 0
    %13 = vsyncpa [#allocation6], 0
    %14 = vsyncpa [#allocation9], 0
    %15 = vsyncpa [#allocation4], 0
    %s16 = scalar_lea.sflag [#allocation4], 1
    %17 = vsyncpa %s16, 0
    loop: start=0, step=1, limit=4
    $region2: #{tpu_custom_call.1} parent=1 // loop_pre_header
      _
    $region3: #{tpu_custom_call.1} parent=1 // loop_header
      %s19 = sphi 0, %s23
      %p20 = scmp.ge.s32.totalorder %s19, 4
      %s29 = sphi 0, %s31
      %s32 = sphi 0, %s29
      %s33 = sphi 0, %s32
      %s49 = sphi 0, %s33
      %s53 = sphi 0, %s53
      %s55 = sphi 0, %s53
      %s56 = sphi 0, %s55
      %s70 = sphi 0, %s56
      %s74 = sphi 0, %s74
      %s76 = sphi 0, %s74
      %s77 = sphi 0, %s76
      %s91 = sphi 0, %s77
      %s95 = sphi 0, %s95
      %s97 = sphi 0, %s95
      %s98 = sphi 0, %s97
      %s112 = sphi 0, %s98
      %s116 = sphi 0, %s116
      %s118 = sphi 0, %s116
      %s119 = sphi 0, %s118
      %s133 = sphi 0, %s119
      %s139 = sphi 0, %s141
      %s142 = sphi 0, %s139
      %s143 = sphi 0, %s142
      %s159 = sphi 0, %s143
    $region4: #{tpu_custom_call.1} parent=1 // loop_header_branch
      %22 = sbr.rel (%p20) target = $region8
    $region5: #{tpu_custom_call.1} parent=1 // loop_body
      %s24 = ssub.s32 %s19, 1
      %s25 = ssub.s32 %s19, 2
      %s26 = sadd.s32 %s19, 1
      %s27 = ssub.s32 %s19, %s26
      %p28 = scmp.eq.s32.totalorder %s27, 0
      %s30 = sadd.s32 %s29, 1
      %s31 = scalar_select %p28, %s29, %s30
      %p34 = pneg %p28
      %p35 = scmp.eq.s32.totalorder %s19, 1
      %p36 = por %p34, %p35
      %p37 = scmp.ne.s32.totalorder %s29, %s32
      %p38 = scmp.eq.s32.totalorder %s19, 0
      %p39 = por %p37, %p38
      %p40 = scmp.ne.s32.totalorder %s29, %s32
      %p41 = scmp.eq.s32.totalorder %s24, 1
      %p42 = por %p40, %p41
      %p43 = scmp.ne.s32.totalorder %s32, %s33
      %p44 = scmp.eq.s32.totalorder %s24, 0
      %p45 = por %p43, %p44
      %p46 = scmp.ne.s32.totalorder %s32, %s33
      %p47 = scmp.eq.s32.totalorder %s25, 1
      %p48 = por %p46, %p47
      %p50 = scmp.ne.s32.totalorder %s33, %s49
      %p51 = scmp.eq.s32.totalorder %s25, 0
      %p52 = por %p50, %p51
      %s54 = sadd.s32 %s53, 1
      %p57 = scmp.eq.s32.totalorder %s19, 1
      %p58 = scmp.ne.s32.totalorder %s53, %s55
      %p59 = scmp.eq.s32.totalorder %s19, 0
      %p60 = por %p58, %p59
      %p61 = scmp.ne.s32.totalorder %s53, %s55
      %p62 = scmp.eq.s32.totalorder %s24, 1
      %p63 = por %p61, %p62
      %p64 = scmp.ne.s32.totalorder %s55, %s56
      %p65 = scmp.eq.s32.totalorder %s24, 0
      %p66 = por %p64, %p65
      %p67 = scmp.ne.s32.totalorder %s55, %s56
      %p68 = scmp.eq.s32.totalorder %s25, 1
      %p69 = por %p67, %p68
      %p71 = scmp.ne.s32.totalorder %s56, %s70
      %p72 = scmp.eq.s32.totalorder %s25, 0
      %p73 = por %p71, %p72
      %s75 = sadd.s32 %s74, 1
      %p78 = scmp.eq.s32.totalorder %s19, 1
      %p79 = scmp.ne.s32.totalorder %s74, %s76
      %p80 = scmp.eq.s32.totalorder %s19, 0
      %p81 = por %p79, %p80
      %p82 = scmp.ne.s32.totalorder %s74, %s76
      %p83 = scmp.eq.s32.totalorder %s24, 1
      %p84 = por %p82, %p83
      %p85 = scmp.ne.s32.totalorder %s76, %s77
      %p86 = scmp.eq.s32.totalorder %s24, 0
      %p87 = por %p85, %p86
      %p88 = scmp.ne.s32.totalorder %s76, %s77
      %p89 = scmp.eq.s32.totalorder %s25, 1
      %p90 = por %p88, %p89
      %p92 = scmp.ne.s32.totalorder %s77, %s91
      %p93 = scmp.eq.s32.totalorder %s25, 0
      %p94 = por %p92, %p93
      %s96 = sadd.s32 %s95, 1
      %p99 = scmp.eq.s32.totalorder %s19, 1
      %p100 = scmp.ne.s32.totalorder %s95, %s97
      %p101 = scmp.eq.s32.totalorder %s19, 0
      %p102 = por %p100, %p101
      %p103 = scmp.ne.s32.totalorder %s95, %s97
      %p104 = scmp.eq.s32.totalorder %s24, 1
      %p105 = por %p103, %p104
      %p106 = scmp.ne.s32.totalorder %s97, %s98
      %p107 = scmp.eq.s32.totalorder %s24, 0
      %p108 = por %p106, %p107
      %p109 = scmp.ne.s32.totalorder %s97, %s98
      %p110 = scmp.eq.s32.totalorder %s25, 1
      %p111 = por %p109, %p110
      %p113 = scmp.ne.s32.totalorder %s98, %s112
      %p114 = scmp.eq.s32.totalorder %s25, 0
      %p115 = por %p113, %p114
      %s117 = sadd.s32 %s116, 1
      %p120 = scmp.eq.s32.totalorder %s19, 1
      %p121 = scmp.ne.s32.totalorder %s116, %s118
      %p122 = scmp.eq.s32.totalorder %s19, 0
      %p123 = por %p121, %p122
      %p124 = scmp.ne.s32.totalorder %s116, %s118
      %p125 = scmp.eq.s32.totalorder %s24, 1
      %p126 = por %p124, %p125
      %p127 = scmp.ne.s32.totalorder %s118, %s119
      %p128 = scmp.eq.s32.totalorder %s24, 0
      %p129 = por %p127, %p128
      %p130 = scmp.ne.s32.totalorder %s118, %s119
      %p131 = scmp.eq.s32.totalorder %s25, 1
      %p132 = por %p130, %p131
      %p134 = scmp.ne.s32.totalorder %s119, %s133
      %p135 = scmp.eq.s32.totalorder %s25, 0
      %p136 = por %p134, %p135
      %s137 = ssub.s32 %s19, %s26
      %p138 = scmp.eq.s32.totalorder %s137, 0
      %s140 = sadd.s32 %s139, 1
      %s141 = scalar_select %p138, %s139, %s140
      %p144 = pneg %p138
      %p145 = scmp.eq.s32.totalorder %s19, 1
      %p146 = por %p144, %p145
      %p147 = scmp.ne.s32.totalorder %s139, %s142
      %p148 = scmp.eq.s32.totalorder %s19, 0
      %p149 = por %p147, %p148
      %p150 = scmp.ne.s32.totalorder %s139, %s142
      %p151 = scmp.eq.s32.totalorder %s24, 1
      %p152 = por %p150, %p151
      %p153 = scmp.ne.s32.totalorder %s142, %s143
      %p154 = scmp.eq.s32.totalorder %s24, 0
      %p155 = por %p153, %p154
      %p156 = scmp.ne.s32.totalorder %s142, %s143
      %p157 = scmp.eq.s32.totalorder %s25, 1
      %p158 = por %p156, %p157
      %p160 = scmp.ne.s32.totalorder %s143, %s159
      %p161 = scmp.eq.s32.totalorder %s25, 0
      %p162 = por %p160, %p161
      %p163 = scmp.le.s32.totalorder 1, %s19
      %p164 = scmp.lt.s32.totalorder %s19, 3
      %p165 = pnand %p163, %p164
      %p166 = pneg %p165
      // Predicated region
      $region9: #{tpu_custom_call.1} parent=5 // pred_check
        _
      $region10: #{tpu_custom_call.1} parent=5 // pred_check_branch
        %168 = sbr.rel (%p165) target = $region12
      $region11: #{tpu_custom_call.1} parent=5 // pred_region
        %s169 = ssub.s32 %s19, 1
        // Predicated region
        $region13: #{tpu_custom_call.1} parent=11 // pred_check
          %p170 = pneg %p66
        $region14: #{tpu_custom_call.1} parent=11 // pred_check_branch
          %172 = sbr.rel (%p170) target = $region16
        $region15: #{tpu_custom_call.1} parent=11 // pred_region
          %s174 = ssub.s32 49152, 49152
          %175 = vsyncadd [#allocation6], %s174
          %s176 = sshll.u32 [#allocation5], 4
          %s177 = int_to_ptr.vmem [resolvable:$true] %s176
          %182 = dma.hbm_to_vmem [thread:$0]  %s1, 49152, %s177, [#allocation6], 384, 384, 24
        $region16: #{tpu_custom_call.1} parent=11 // pred_fallthru
          _
        // Predicated region
        $region17: #{tpu_custom_call.1} parent=11 // pred_check
          %p183 = pneg %p87
        $region18: #{tpu_custom_call.1} parent=11 // pred_check_branch
          %185 = sbr.rel (%p183) target = $region20
        $region19: #{tpu_custom_call.1} parent=11 // pred_region
          %s187 = ssub.s32 96, 96
          %188 = vsyncadd [#allocation6], %s187
          %s190 = sshll.u32 [#allocation7], 4
          %s191 = int_to_ptr.vmem [resolvable:$true] %s190
          %193 = dma.hbm_to_vmem [thread:$0]  %s2, 96, %s191, [#allocation6]
        $region20: #{tpu_custom_call.1} parent=11 // pred_fallthru
          _
        // Predicated region
        $region21: #{tpu_custom_call.1} parent=11 // pred_check
          %p194 = pneg %p108
        $region22: #{tpu_custom_call.1} parent=11 // pred_check_branch
          %196 = sbr.rel (%p194) target = $region24
        $region23: #{tpu_custom_call.1} parent=11 // pred_region
          %s198 = ssub.s32 12288, 12288
          %199 = vsyncadd [#allocation9], %s198
          %s200 = sshll.u32 [#allocation8], 4
          %s201 = int_to_ptr.vmem [resolvable:$true] %s200
          %206 = dma.hbm_to_vmem [thread:$0]  %s3, 12288, %s201, [#allocation9], 128, 128, 8
        $region24: #{tpu_custom_call.1} parent=11 // pred_fallthru
          _
        // Predicated region
        $region25: #{tpu_custom_call.1} parent=11 // pred_check
          %p207 = pneg %p129
        $region26: #{tpu_custom_call.1} parent=11 // pred_check_branch
          %209 = sbr.rel (%p207) target = $region28
        $region27: #{tpu_custom_call.1} parent=11 // pred_region
          %s211 = ssub.s32 32, 32
          %212 = vsyncadd [#allocation9], %s211
          %s214 = sshll.u32 [#allocation10], 4
          %s215 = int_to_ptr.vmem [resolvable:$true] %s214
          %217 = dma.hbm_to_vmem [thread:$0]  %s4, 32, %s215, [#allocation9]
        $region28: #{tpu_custom_call.1} parent=11 // pred_fallthru
          _
      $region12: #{tpu_custom_call.1} parent=5 // pred_fallthru
        _
      %p218 = scmp.lt.s32.totalorder %s19, 2
      // Predicated region
      $region29: #{tpu_custom_call.1} parent=5 // pred_check
        %p219 = pneg %p218
      $region30: #{tpu_custom_call.1} parent=5 // pred_check_branch
        %221 = sbr.rel (%p219) target = $region32
      $region31: #{tpu_custom_call.1} parent=5 // pred_region
        // Predicated region
        $region33: #{tpu_custom_call.1} parent=31 // pred_check
          %p222 = pneg %p39
        $region34: #{tpu_custom_call.1} parent=31 // pred_check_branch
          %224 = sbr.rel (%p222) target = $region36
        $region35: #{tpu_custom_call.1} parent=31 // pred_region
          %s225 = sand.u32 %s29, 1
          %s226 = scalar_lea.sflag [#allocation3], %s225
          %s227 = sand.u32 %s29, 1
          %s228 = smul.addr %s227, 1280
          %s229 = scalar_lea.vmem [#allocation2], %s228
          %s230 = smul.u32 20, %s19
          %s232 = ssub.s32 20480, 20480
          %233 = vsyncadd %s226, %s232
          %s234 = smul.addr %s230, 8
          %s235 = smul.addr %s234, 128
          %s236 = scalar_lea.hbm %s0, %s235
          %s237 = sshll.u32 %s229, 4
          %s238 = int_to_ptr.vmem [resolvable:$true] %s237
          %243 = dma.hbm_to_vmem [thread:$0]  %s236, 20480, %s238, %s226, 1024, 1024, 64
        $region36: #{tpu_custom_call.1} parent=31 // pred_fallthru
          _
      $region32: #{tpu_custom_call.1} parent=5 // pred_fallthru
        _
      %p244 = scmp.le.s32.totalorder 1, %s19
      %p245 = scmp.lt.s32.totalorder %s19, 3
      %p246 = pnand %p244, %p245
      %p247 = pneg %p246
      // Predicated region
      $region37: #{tpu_custom_call.1} parent=5 // pred_check
        _
      $region38: #{tpu_custom_call.1} parent=5 // pred_check_branch
        %249 = sbr.rel (%p246) target = $region40
      $region39: #{tpu_custom_call.1} parent=5 // pred_region
        %s250 = ssub.s32 %s19, 1
        %s251 = sand.u32 %s32, 1
        %s252 = scalar_lea.sflag [#allocation3], %s251
        %s253 = sand.u32 %s32, 1
        %s254 = smul.addr %s253, 1280
        %s255 = scalar_lea.vmem [#allocation2], %s254
        // Predicated region
        $region41: #{tpu_custom_call.1} parent=39 // pred_check
          %p256 = pneg %p45
        $region42: #{tpu_custom_call.1} parent=39 // pred_check_branch
          %258 = sbr.rel (%p256) target = $region44
        $region43: #{tpu_custom_call.1} parent=39 // pred_region
          %259 = dma.done %s252, 20480
        $region44: #{tpu_custom_call.1} parent=39 // pred_fallthru
          _
        // Predicated region
        $region45: #{tpu_custom_call.1} parent=39 // pred_check
          %p260 = pneg %p66
        $region46: #{tpu_custom_call.1} parent=39 // pred_check_branch
          %262 = sbr.rel (%p260) target = $region48
        $region47: #{tpu_custom_call.1} parent=39 // pred_region
          %263 = dma.done [#allocation6], 49152
        $region48: #{tpu_custom_call.1} parent=39 // pred_fallthru
          _
        // Predicated region
        $region49: #{tpu_custom_call.1} parent=39 // pred_check
          %p264 = pneg %p87
        $region50: #{tpu_custom_call.1} parent=39 // pred_check_branch
          %266 = sbr.rel (%p264) target = $region52
        $region51: #{tpu_custom_call.1} parent=39 // pred_region
          %267 = dma.done [#allocation6], 96
        $region52: #{tpu_custom_call.1} parent=39 // pred_fallthru
          _
        // Predicated region
        $region53: #{tpu_custom_call.1} parent=39 // pred_check
          %p268 = pneg %p108
        $region54: #{tpu_custom_call.1} parent=39 // pred_check_branch
          %270 = sbr.rel (%p268) target = $region56
        $region55: #{tpu_custom_call.1} parent=39 // pred_region
          %271 = dma.done [#allocation9], 12288
        $region56: #{tpu_custom_call.1} parent=39 // pred_fallthru
          _
        // Predicated region
        $region57: #{tpu_custom_call.1} parent=39 // pred_check
          %p272 = pneg %p129
        $region58: #{tpu_custom_call.1} parent=39 // pred_check_branch
          %274 = sbr.rel (%p272) target = $region60
        $region59: #{tpu_custom_call.1} parent=39 // pred_region
          %275 = dma.done [#allocation9], 32
        $region60: #{tpu_custom_call.1} parent=39 // pred_fallthru
          _
        %s276 = sand.u32 %s32, 1
        %s277 = scalar_lea.sflag [#allocation3], %s276
        %s278 = sand.u32 %s32, 1
        %s279 = smul.addr %s278, 1280
        %s280 = scalar_lea.vmem [#allocation2], %s279
        %p281 = pneg %p45
        %p282 = pneg %p42
        %p283 = pneg %p66
        %p284 = pneg %p63
        %p285 = pneg %p87
        %p286 = pneg %p84
        %p287 = pneg %p108
        %p288 = pneg %p105
        %p289 = pneg %p129
        %p290 = pneg %p126
        %p291 = pneg %p155
        %p292 = pneg %p152
        %s293 = sand.u32 %s142, 1
        %s294 = scalar_lea.sflag [#allocation4], %s293
        %s295 = sand.u32 %s142, 1
        %s296 = smul.addr %s295, 320
        %s297 = scalar_lea.vmem [#allocation11], %s296
        %s298 = smul.u32 20, %s24
        %s299 = smul.u32 20, %s24
        %v300 = vld [vmem:[%s255] sm:$0xff]
        %v301 = vld [vmem:[%s255 + $0x8] sm:$0xff]
        %v302 = vld [vmem:[%s255 + $0x10] sm:$0xff]
        %v303 = vld [vmem:[%s255 + $0x18] sm:$0xff]
        %v304 = vld [vmem:[%s255 + $0x20] sm:$0xff]
        %v305 = vld [vmem:[%s255 + $0x28] sm:$0xff]
        %v306 = vld [vmem:[%s255 + $0x30] sm:$0xff]
        %v307 = vld [vmem:[%s255 + $0x38] sm:$0xff]
        %v308 = vld [vmem:[%s255 + $0x40] sm:$0xff]
        %v309 = vld [vmem:[%s255 + $0x48] sm:$0xff]
        %v310 = vld [vmem:[%s255 + $0x50] sm:$0xff]
        %v311 = vld [vmem:[%s255 + $0x58] sm:$0xff]
        %v312 = vld [vmem:[%s255 + $0x60] sm:$0xff]
        %v313 = vld [vmem:[%s255 + $0x68] sm:$0xff]
        %v314 = vld [vmem:[%s255 + $0x70] sm:$0xff]
        %v315 = vld [vmem:[%s255 + $0x78] sm:$0xff]
        %v316 = vld [vmem:[%s255 + $0x80] sm:$0xff]
        %v317 = vld [vmem:[%s255 + $0x88] sm:$0xff]
        %v318 = vld [vmem:[%s255 + $0x90] sm:$0xff]
        %v319 = vld [vmem:[%s255 + $0x98] sm:$0xff]
        %v320 = vld [vmem:[%s255 + $0xa0] sm:$0xff]
        %v321 = vld [vmem:[%s255 + $0xa8] sm:$0xff]
        %v322 = vld [vmem:[%s255 + $0xb0] sm:$0xff]
        %v323 = vld [vmem:[%s255 + $0xb8] sm:$0xff]
        %v324 = vld [vmem:[%s255 + $0xc0] sm:$0xff]
        %v325 = vld [vmem:[%s255 + $0xc8] sm:$0xff]
        %v326 = vld [vmem:[%s255 + $0xd0] sm:$0xff]
        %v327 = vld [vmem:[%s255 + $0xd8] sm:$0xff]
        %v328 = vld [vmem:[%s255 + $0xe0] sm:$0xff]
        %v329 = vld [vmem:[%s255 + $0xe8] sm:$0xff]
        %v330 = vld [vmem:[%s255 + $0xf0] sm:$0xff]
        %v331 = vld [vmem:[%s255 + $0xf8] sm:$0xff]
        %v332 = vld [vmem:[%s255 + $0x100] sm:$0xff]
        %v333 = vld [vmem:[%s255 + $0x108] sm:$0xff]
        %v334 = vld [vmem:[%s255 + $0x110] sm:$0xff]
        %v335 = vld [vmem:[%s255 + $0x118] sm:$0xff]
        %v336 = vld [vmem:[%s255 + $0x120] sm:$0xff]
        %v337 = vld [vmem:[%s255 + $0x128] sm:$0xff]
        %v338 = vld [vmem:[%s255 + $0x130] sm:$0xff]
        %v339 = vld [vmem:[%s255 + $0x138] sm:$0xff]
        %v340 = vld [vmem:[%s255 + $0x140] sm:$0xff]
        %v341 = vld [vmem:[%s255 + $0x148] sm:$0xff]
        %v342 = vld [vmem:[%s255 + $0x150] sm:$0xff]
        %v343 = vld [vmem:[%s255 + $0x158] sm:$0xff]
        %v344 = vld [vmem:[%s255 + $0x160] sm:$0xff]
        %v345 = vld [vmem:[%s255 + $0x168] sm:$0xff]
        %v346 = vld [vmem:[%s255 + $0x170] sm:$0xff]
        %v347 = vld [vmem:[%s255 + $0x178] sm:$0xff]
        %v348 = vld [vmem:[%s255 + $0x180] sm:$0xff]
        %v349 = vld [vmem:[%s255 + $0x188] sm:$0xff]
        %v350 = vld [vmem:[%s255 + $0x190] sm:$0xff]
        %v351 = vld [vmem:[%s255 + $0x198] sm:$0xff]
        %v352 = vld [vmem:[%s255 + $0x1a0] sm:$0xff]
        %v353 = vld [vmem:[%s255 + $0x1a8] sm:$0xff]
        %v354 = vld [vmem:[%s255 + $0x1b0] sm:$0xff]
        %v355 = vld [vmem:[%s255 + $0x1b8] sm:$0xff]
        %v356 = vld [vmem:[%s255 + $0x1c0] sm:$0xff]
        %v357 = vld [vmem:[%s255 + $0x1c8] sm:$0xff]
        %v358 = vld [vmem:[%s255 + $0x1d0] sm:$0xff]
        %v359 = vld [vmem:[%s255 + $0x1d8] sm:$0xff]
        %v360 = vld [vmem:[%s255 + $0x1e0] sm:$0xff]
        %v361 = vld [vmem:[%s255 + $0x1e8] sm:$0xff]
        %v362 = vld [vmem:[%s255 + $0x1f0] sm:$0xff]
        %v363 = vld [vmem:[%s255 + $0x1f8] sm:$0xff]
        %v364 = vld [vmem:[%s255 + $0x200] sm:$0xff]
        %v365 = vld [vmem:[%s255 + $0x208] sm:$0xff]
        %v366 = vld [vmem:[%s255 + $0x210] sm:$0xff]
        %v367 = vld [vmem:[%s255 + $0x218] sm:$0xff]
        %v368 = vld [vmem:[%s255 + $0x220] sm:$0xff]
        %v369 = vld [vmem:[%s255 + $0x228] sm:$0xff]
        %v370 = vld [vmem:[%s255 + $0x230] sm:$0xff]
        %v371 = vld [vmem:[%s255 + $0x238] sm:$0xff]
        %v372 = vld [vmem:[%s255 + $0x240] sm:$0xff]
        %v373 = vld [vmem:[%s255 + $0x248] sm:$0xff]
        %v374 = vld [vmem:[%s255 + $0x250] sm:$0xff]
        %v375 = vld [vmem:[%s255 + $0x258] sm:$0xff]
        %v376 = vld [vmem:[%s255 + $0x260] sm:$0xff]
        %v377 = vld [vmem:[%s255 + $0x268] sm:$0xff]
        %v378 = vld [vmem:[%s255 + $0x270] sm:$0xff]
        %v379 = vld [vmem:[%s255 + $0x278] sm:$0xff]
        %v380 = vld [vmem:[%s255 + $0x280] sm:$0xff]
        %v381 = vld [vmem:[%s255 + $0x288] sm:$0xff]
        %v382 = vld [vmem:[%s255 + $0x290] sm:$0xff]
        %v383 = vld [vmem:[%s255 + $0x298] sm:$0xff]
        %v384 = vld [vmem:[%s255 + $0x2a0] sm:$0xff]
        %v385 = vld [vmem:[%s255 + $0x2a8] sm:$0xff]
        %v386 = vld [vmem:[%s255 + $0x2b0] sm:$0xff]
        %v387 = vld [vmem:[%s255 + $0x2b8] sm:$0xff]
        %v388 = vld [vmem:[%s255 + $0x2c0] sm:$0xff]
        %v389 = vld [vmem:[%s255 + $0x2c8] sm:$0xff]
        %v390 = vld [vmem:[%s255 + $0x2d0] sm:$0xff]
        %v391 = vld [vmem:[%s255 + $0x2d8] sm:$0xff]
        %v392 = vld [vmem:[%s255 + $0x2e0] sm:$0xff]
        %v393 = vld [vmem:[%s255 + $0x2e8] sm:$0xff]
        %v394 = vld [vmem:[%s255 + $0x2f0] sm:$0xff]
        %v395 = vld [vmem:[%s255 + $0x2f8] sm:$0xff]
        %v396 = vld [vmem:[%s255 + $0x300] sm:$0xff]
        %v397 = vld [vmem:[%s255 + $0x308] sm:$0xff]
        %v398 = vld [vmem:[%s255 + $0x310] sm:$0xff]
        %v399 = vld [vmem:[%s255 + $0x318] sm:$0xff]
        %v400 = vld [vmem:[%s255 + $0x320] sm:$0xff]
        %v401 = vld [vmem:[%s255 + $0x328] sm:$0xff]
        %v402 = vld [vmem:[%s255 + $0x330] sm:$0xff]
        %v403 = vld [vmem:[%s255 + $0x338] sm:$0xff]
        %v404 = vld [vmem:[%s255 + $0x340] sm:$0xff]
        %v405 = vld [vmem:[%s255 + $0x348] sm:$0xff]
        %v406 = vld [vmem:[%s255 + $0x350] sm:$0xff]
        %v407 = vld [vmem:[%s255 + $0x358] sm:$0xff]
        %v408 = vld [vmem:[%s255 + $0x360] sm:$0xff]
        %v409 = vld [vmem:[%s255 + $0x368] sm:$0xff]
        %v410 = vld [vmem:[%s255 + $0x370] sm:$0xff]
        %v411 = vld [vmem:[%s255 + $0x378] sm:$0xff]
        %v412 = vld [vmem:[%s255 + $0x380] sm:$0xff]
        %v413 = vld [vmem:[%s255 + $0x388] sm:$0xff]
        %v414 = vld [vmem:[%s255 + $0x390] sm:$0xff]
        %v415 = vld [vmem:[%s255 + $0x398] sm:$0xff]
        %v416 = vld [vmem:[%s255 + $0x3a0] sm:$0xff]
        %v417 = vld [vmem:[%s255 + $0x3a8] sm:$0xff]
        %v418 = vld [vmem:[%s255 + $0x3b0] sm:$0xff]
        %v419 = vld [vmem:[%s255 + $0x3b8] sm:$0xff]
        %v420 = vld [vmem:[%s255 + $0x3c0] sm:$0xff]
        %v421 = vld [vmem:[%s255 + $0x3c8] sm:$0xff]
        %v422 = vld [vmem:[%s255 + $0x3d0] sm:$0xff]
        %v423 = vld [vmem:[%s255 + $0x3d8] sm:$0xff]
        %v424 = vld [vmem:[%s255 + $0x3e0] sm:$0xff]
        %v425 = vld [vmem:[%s255 + $0x3e8] sm:$0xff]
        %v426 = vld [vmem:[%s255 + $0x3f0] sm:$0xff]
        %v427 = vld [vmem:[%s255 + $0x3f8] sm:$0xff]
        %v428 = vld [vmem:[%s255 + $0x400] sm:$0xff]
        %v429 = vld [vmem:[%s255 + $0x408] sm:$0xff]
        %v430 = vld [vmem:[%s255 + $0x410] sm:$0xff]
        %v431 = vld [vmem:[%s255 + $0x418] sm:$0xff]
        %v432 = vld [vmem:[%s255 + $0x420] sm:$0xff]
        %v433 = vld [vmem:[%s255 + $0x428] sm:$0xff]
        %v434 = vld [vmem:[%s255 + $0x430] sm:$0xff]
        %v435 = vld [vmem:[%s255 + $0x438] sm:$0xff]
        %v436 = vld [vmem:[%s255 + $0x440] sm:$0xff]
        %v437 = vld [vmem:[%s255 + $0x448] sm:$0xff]
        %v438 = vld [vmem:[%s255 + $0x450] sm:$0xff]
        %v439 = vld [vmem:[%s255 + $0x458] sm:$0xff]
        %v440 = vld [vmem:[%s255 + $0x460] sm:$0xff]
        %v441 = vld [vmem:[%s255 + $0x468] sm:$0xff]
        %v442 = vld [vmem:[%s255 + $0x470] sm:$0xff]
        %v443 = vld [vmem:[%s255 + $0x478] sm:$0xff]
        %v444 = vld [vmem:[%s255 + $0x480] sm:$0xff]
        %v445 = vld [vmem:[%s255 + $0x488] sm:$0xff]
        %v446 = vld [vmem:[%s255 + $0x490] sm:$0xff]
        %v447 = vld [vmem:[%s255 + $0x498] sm:$0xff]
        %v448 = vld [vmem:[%s255 + $0x4a0] sm:$0xff]
        %v449 = vld [vmem:[%s255 + $0x4a8] sm:$0xff]
        %v450 = vld [vmem:[%s255 + $0x4b0] sm:$0xff]
        %v451 = vld [vmem:[%s255 + $0x4b8] sm:$0xff]
        %v452 = vld [vmem:[%s255 + $0x4c0] sm:$0xff]
        %v453 = vld [vmem:[%s255 + $0x4c8] sm:$0xff]
        %v454 = vld [vmem:[%s255 + $0x4d0] sm:$0xff]
        %v455 = vld [vmem:[%s255 + $0x4d8] sm:$0xff]
        %v456 = vld [vmem:[%s255 + $0x4e0] sm:$0xff]
        %v457 = vld [vmem:[%s255 + $0x4e8] sm:$0xff]
        %v458 = vld [vmem:[%s255 + $0x4f0] sm:$0xff]
        %v459 = vld [vmem:[%s255 + $0x4f8] sm:$0xff]
        %v460 = vpack.c.bf16 %v308, %v300
        %v461 = vpack.c.bf16 %v309, %v301
        %v462 = vpack.c.bf16 %v310, %v302
        %v463 = vpack.c.bf16 %v311, %v303
        %v464 = vpack.c.bf16 %v312, %v304
        %v465 = vpack.c.bf16 %v313, %v305
        %v466 = vpack.c.bf16 %v314, %v306
        %v467 = vpack.c.bf16 %v315, %v307
        %v468 = vpack.c.bf16 %v324, %v316
        %v469 = vpack.c.bf16 %v325, %v317
        %v470 = vpack.c.bf16 %v326, %v318
        %v471 = vpack.c.bf16 %v327, %v319
        %v472 = vpack.c.bf16 %v328, %v320
        %v473 = vpack.c.bf16 %v329, %v321
        %v474 = vpack.c.bf16 %v330, %v322
        %v475 = vpack.c.bf16 %v331, %v323
        %v476 = vpack.c.bf16 %v340, %v332
        %v477 = vpack.c.bf16 %v341, %v333
        %v478 = vpack.c.bf16 %v342, %v334
        %v479 = vpack.c.bf16 %v343, %v335
        %v480 = vpack.c.bf16 %v344, %v336
        %v481 = vpack.c.bf16 %v345, %v337
        %v482 = vpack.c.bf16 %v346, %v338
        %v483 = vpack.c.bf16 %v347, %v339
        %v484 = vpack.c.bf16 %v356, %v348
        %v485 = vpack.c.bf16 %v357, %v349
        %v486 = vpack.c.bf16 %v358, %v350
        %v487 = vpack.c.bf16 %v359, %v351
        %v488 = vpack.c.bf16 %v360, %v352
        %v489 = vpack.c.bf16 %v361, %v353
        %v490 = vpack.c.bf16 %v362, %v354
        %v491 = vpack.c.bf16 %v363, %v355
        %v492 = vpack.c.bf16 %v372, %v364
        %v493 = vpack.c.bf16 %v373, %v365
        %v494 = vpack.c.bf16 %v374, %v366
        %v495 = vpack.c.bf16 %v375, %v367
        %v496 = vpack.c.bf16 %v376, %v368
        %v497 = vpack.c.bf16 %v377, %v369
        %v498 = vpack.c.bf16 %v378, %v370
        %v499 = vpack.c.bf16 %v379, %v371
        %v500 = vpack.c.bf16 %v388, %v380
        %v501 = vpack.c.bf16 %v389, %v381
        %v502 = vpack.c.bf16 %v390, %v382
        %v503 = vpack.c.bf16 %v391, %v383
        %v504 = vpack.c.bf16 %v392, %v384
        %v505 = vpack.c.bf16 %v393, %v385
        %v506 = vpack.c.bf16 %v394, %v386
        %v507 = vpack.c.bf16 %v395, %v387
        %v508 = vpack.c.bf16 %v404, %v396
        %v509 = vpack.c.bf16 %v405, %v397
        %v510 = vpack.c.bf16 %v406, %v398
        %v511 = vpack.c.bf16 %v407, %v399
        %v512 = vpack.c.bf16 %v408, %v400
        %v513 = vpack.c.bf16 %v409, %v401
        %v514 = vpack.c.bf16 %v410, %v402
        %v515 = vpack.c.bf16 %v411, %v403
        %v516 = vpack.c.bf16 %v420, %v412
        %v517 = vpack.c.bf16 %v421, %v413
        %v518 = vpack.c.bf16 %v422, %v414
        %v519 = vpack.c.bf16 %v423, %v415
        %v520 = vpack.c.bf16 %v424, %v416
        %v521 = vpack.c.bf16 %v425, %v417
        %v522 = vpack.c.bf16 %v426, %v418
        %v523 = vpack.c.bf16 %v427, %v419
        %v524 = vpack.c.bf16 %v436, %v428
        %v525 = vpack.c.bf16 %v437, %v429
        %v526 = vpack.c.bf16 %v438, %v430
        %v527 = vpack.c.bf16 %v439, %v431
        %v528 = vpack.c.bf16 %v440, %v432
        %v529 = vpack.c.bf16 %v441, %v433
        %v530 = vpack.c.bf16 %v442, %v434
        %v531 = vpack.c.bf16 %v443, %v435
        %v532 = vpack.c.bf16 %v452, %v444
        %v533 = vpack.c.bf16 %v453, %v445
        %v534 = vpack.c.bf16 %v454, %v446
        %v535 = vpack.c.bf16 %v455, %v447
        %v536 = vpack.c.bf16 %v456, %v448
        %v537 = vpack.c.bf16 %v457, %v449
        %v538 = vpack.c.bf16 %v458, %v450
        %v539 = vpack.c.bf16 %v459, %v451
        %v540 = vld [vmem:[#allocation5] sm:$0xff]
        %v541 = vld [vmem:[#allocation5 + $0x8] sm:$0xff]
        %v542 = vld [vmem:[#allocation5 + $0x10] sm:$0xff]
        %v543 = vld [vmem:[#allocation5 + $0x18] sm:$0xff]
        %v544 = vld [vmem:[#allocation5 + $0x20] sm:$0xff]
        %v545 = vld [vmem:[#allocation5 + $0x28] sm:$0xff]
        %v546 = vld [vmem:[#allocation5 + $0x30] sm:$0xff]
        %v547 = vld [vmem:[#allocation5 + $0x38] sm:$0xff]
        %v548 = vld [vmem:[#allocation5 + $0x40] sm:$0xff]
        %v549 = vld [vmem:[#allocation5 + $0x48] sm:$0xff]
        %v550 = vld [vmem:[#allocation5 + $0x50] sm:$0xff]
        %v551 = vld [vmem:[#allocation5 + $0x58] sm:$0xff]
        %v552 = vld [vmem:[#allocation5 + $0x60] sm:$0xff]
        %v553 = vld [vmem:[#allocation5 + $0x68] sm:$0xff]
        %v554 = vld [vmem:[#allocation5 + $0x70] sm:$0xff]
        %v555 = vld [vmem:[#allocation5 + $0x78] sm:$0xff]
        %v556 = vld [vmem:[#allocation5 + $0x80] sm:$0xff]
        %v557 = vld [vmem:[#allocation5 + $0x88] sm:$0xff]
        %v558 = vld [vmem:[#allocation5 + $0x90] sm:$0xff]
        %v559 = vld [vmem:[#allocation5 + $0x98] sm:$0xff]
        %v560 = vld [vmem:[#allocation5 + $0xa0] sm:$0xff]
        %v561 = vld [vmem:[#allocation5 + $0xa8] sm:$0xff]
        %v562 = vld [vmem:[#allocation5 + $0xb0] sm:$0xff]
        %v563 = vld [vmem:[#allocation5 + $0xb8] sm:$0xff]
        %v564 = vld [vmem:[#allocation5 + $0xc0] sm:$0xff]
        %v565 = vld [vmem:[#allocation5 + $0xc8] sm:$0xff]
        %v566 = vld [vmem:[#allocation5 + $0xd0] sm:$0xff]
        %v567 = vld [vmem:[#allocation5 + $0xd8] sm:$0xff]
        %v568 = vld [vmem:[#allocation5 + $0xe0] sm:$0xff]
        %v569 = vld [vmem:[#allocation5 + $0xe8] sm:$0xff]
        %v570 = vld [vmem:[#allocation5 + $0xf0] sm:$0xff]
        %v571 = vld [vmem:[#allocation5 + $0xf8] sm:$0xff]
        %v572 = vld [vmem:[#allocation5 + $0x100] sm:$0xff]
        %v573 = vld [vmem:[#allocation5 + $0x108] sm:$0xff]
        %v574 = vld [vmem:[#allocation5 + $0x110] sm:$0xff]
        %v575 = vld [vmem:[#allocation5 + $0x118] sm:$0xff]
        %v576 = vld [vmem:[#allocation5 + $0x120] sm:$0xff]
        %v577 = vld [vmem:[#allocation5 + $0x128] sm:$0xff]
        %v578 = vld [vmem:[#allocation5 + $0x130] sm:$0xff]
        %v579 = vld [vmem:[#allocation5 + $0x138] sm:$0xff]
        %v580 = vld [vmem:[#allocation5 + $0x140] sm:$0xff]
        %v581 = vld [vmem:[#allocation5 + $0x148] sm:$0xff]
        %v582 = vld [vmem:[#allocation5 + $0x150] sm:$0xff]
        %v583 = vld [vmem:[#allocation5 + $0x158] sm:$0xff]
        %v584 = vld [vmem:[#allocation5 + $0x160] sm:$0xff]
        %v585 = vld [vmem:[#allocation5 + $0x168] sm:$0xff]
        %v586 = vld [vmem:[#allocation5 + $0x170] sm:$0xff]
        %v587 = vld [vmem:[#allocation5 + $0x178] sm:$0xff]
        %v588 = vld [vmem:[#allocation5 + $0x180] sm:$0xff]
        %v589 = vld [vmem:[#allocation5 + $0x188] sm:$0xff]
        %v590 = vld [vmem:[#allocation5 + $0x190] sm:$0xff]
        %v591 = vld [vmem:[#allocation5 + $0x198] sm:$0xff]
        %v592 = vld [vmem:[#allocation5 + $0x1a0] sm:$0xff]
        %v593 = vld [vmem:[#allocation5 + $0x1a8] sm:$0xff]
        %v594 = vld [vmem:[#allocation5 + $0x1b0] sm:$0xff]
        %v595 = vld [vmem:[#allocation5 + $0x1b8] sm:$0xff]
        %v596 = vld [vmem:[#allocation5 + $0x1c0] sm:$0xff]
        %v597 = vld [vmem:[#allocation5 + $0x1c8] sm:$0xff]
        %v598 = vld [vmem:[#allocation5 + $0x1d0] sm:$0xff]
        %v599 = vld [vmem:[#allocation5 + $0x1d8] sm:$0xff]
        %v600 = vld [vmem:[#allocation5 + $0x1e0] sm:$0xff]
        %v601 = vld [vmem:[#allocation5 + $0x1e8] sm:$0xff]
        %v602 = vld [vmem:[#allocation5 + $0x1f0] sm:$0xff]
        %v603 = vld [vmem:[#allocation5 + $0x1f8] sm:$0xff]
        %v604 = vld [vmem:[#allocation5 + $0x200] sm:$0xff]
        %v605 = vld [vmem:[#allocation5 + $0x208] sm:$0xff]
        %v606 = vld [vmem:[#allocation5 + $0x210] sm:$0xff]
        %v607 = vld [vmem:[#allocation5 + $0x218] sm:$0xff]
        %v608 = vld [vmem:[#allocation5 + $0x220] sm:$0xff]
        %v609 = vld [vmem:[#allocation5 + $0x228] sm:$0xff]
        %v610 = vld [vmem:[#allocation5 + $0x230] sm:$0xff]
        %v611 = vld [vmem:[#allocation5 + $0x238] sm:$0xff]
        %v612 = vld [vmem:[#allocation5 + $0x240] sm:$0xff]
        %v613 = vld [vmem:[#allocation5 + $0x248] sm:$0xff]
        %v614 = vld [vmem:[#allocation5 + $0x250] sm:$0xff]
        %v615 = vld [vmem:[#allocation5 + $0x258] sm:$0xff]
        %v616 = vld [vmem:[#allocation5 + $0x260] sm:$0xff]
        %v617 = vld [vmem:[#allocation5 + $0x268] sm:$0xff]
        %v618 = vld [vmem:[#allocation5 + $0x270] sm:$0xff]
        %v619 = vld [vmem:[#allocation5 + $0x278] sm:$0xff]
        %v620 = vld [vmem:[#allocation5 + $0x280] sm:$0xff]
        %v621 = vld [vmem:[#allocation5 + $0x288] sm:$0xff]
        %v622 = vld [vmem:[#allocation5 + $0x290] sm:$0xff]
        %v623 = vld [vmem:[#allocation5 + $0x298] sm:$0xff]
        %v624 = vld [vmem:[#allocation5 + $0x2a0] sm:$0xff]
        %v625 = vld [vmem:[#allocation5 + $0x2a8] sm:$0xff]
        %v626 = vld [vmem:[#allocation5 + $0x2b0] sm:$0xff]
        %v627 = vld [vmem:[#allocation5 + $0x2b8] sm:$0xff]
        %v628 = vld [vmem:[#allocation5 + $0x2c0] sm:$0xff]
        %v629 = vld [vmem:[#allocation5 + $0x2c8] sm:$0xff]
        %v630 = vld [vmem:[#allocation5 + $0x2d0] sm:$0xff]
        %v631 = vld [vmem:[#allocation5 + $0x2d8] sm:$0xff]
        %v632 = vld [vmem:[#allocation5 + $0x2e0] sm:$0xff]
        %v633 = vld [vmem:[#allocation5 + $0x2e8] sm:$0xff]
        %v634 = vld [vmem:[#allocation5 + $0x2f0] sm:$0xff]
        %v635 = vld [vmem:[#allocation5 + $0x2f8] sm:$0xff]
        %v636 = vld [vmem:[#allocation5 + $0x300] sm:$0xff]
        %v637 = vld [vmem:[#allocation5 + $0x308] sm:$0xff]
        %v638 = vld [vmem:[#allocation5 + $0x310] sm:$0xff]
        %v639 = vld [vmem:[#allocation5 + $0x318] sm:$0xff]
        %v640 = vld [vmem:[#allocation5 + $0x320] sm:$0xff]
        %v641 = vld [vmem:[#allocation5 + $0x328] sm:$0xff]
        %v642 = vld [vmem:[#allocation5 + $0x330] sm:$0xff]
        %v643 = vld [vmem:[#allocation5 + $0x338] sm:$0xff]
        %v644 = vld [vmem:[#allocation5 + $0x340] sm:$0xff]
        %v645 = vld [vmem:[#allocation5 + $0x348] sm:$0xff]
        %v646 = vld [vmem:[#allocation5 + $0x350] sm:$0xff]
        %v647 = vld [vmem:[#allocation5 + $0x358] sm:$0xff]
        %v648 = vld [vmem:[#allocation5 + $0x360] sm:$0xff]
        %v649 = vld [vmem:[#allocation5 + $0x368] sm:$0xff]
        %v650 = vld [vmem:[#allocation5 + $0x370] sm:$0xff]
        %v651 = vld [vmem:[#allocation5 + $0x378] sm:$0xff]
        %v652 = vld [vmem:[#allocation5 + $0x380] sm:$0xff]
        %v653 = vld [vmem:[#allocation5 + $0x388] sm:$0xff]
        %v654 = vld [vmem:[#allocation5 + $0x390] sm:$0xff]
        %v655 = vld [vmem:[#allocation5 + $0x398] sm:$0xff]
        %v656 = vld [vmem:[#allocation5 + $0x3a0] sm:$0xff]
        %v657 = vld [vmem:[#allocation5 + $0x3a8] sm:$0xff]
        %v658 = vld [vmem:[#allocation5 + $0x3b0] sm:$0xff]
        %v659 = vld [vmem:[#allocation5 + $0x3b8] sm:$0xff]
        %v660 = vld [vmem:[#allocation5 + $0x3c0] sm:$0xff]
        %v661 = vld [vmem:[#allocation5 + $0x3c8] sm:$0xff]
        %v662 = vld [vmem:[#allocation5 + $0x3d0] sm:$0xff]
        %v663 = vld [vmem:[#allocation5 + $0x3d8] sm:$0xff]
        %v664 = vld [vmem:[#allocation5 + $0x3e0] sm:$0xff]
        %v665 = vld [vmem:[#allocation5 + $0x3e8] sm:$0xff]
        %v666 = vld [vmem:[#allocation5 + $0x3f0] sm:$0xff]
        %v667 = vld [vmem:[#allocation5 + $0x3f8] sm:$0xff]
        %v668 = vld [vmem:[#allocation5 + $0x400] sm:$0xff]
        %v669 = vld [vmem:[#allocation5 + $0x408] sm:$0xff]
        %v670 = vld [vmem:[#allocation5 + $0x410] sm:$0xff]
        %v671 = vld [vmem:[#allocation5 + $0x418] sm:$0xff]
        %v672 = vld [vmem:[#allocation5 + $0x420] sm:$0xff]
        %v673 = vld [vmem:[#allocation5 + $0x428] sm:$0xff]
        %v674 = vld [vmem:[#allocation5 + $0x430] sm:$0xff]
        %v675 = vld [vmem:[#allocation5 + $0x438] sm:$0xff]
        %v676 = vld [vmem:[#allocation5 + $0x440] sm:$0xff]
        %v677 = vld [vmem:[#allocation5 + $0x448] sm:$0xff]
        %v678 = vld [vmem:[#allocation5 + $0x450] sm:$0xff]
        %v679 = vld [vmem:[#allocation5 + $0x458] sm:$0xff]
        %v680 = vld [vmem:[#allocation5 + $0x460] sm:$0xff]
        %v681 = vld [vmem:[#allocation5 + $0x468] sm:$0xff]
        %v682 = vld [vmem:[#allocation5 + $0x470] sm:$0xff]
        %v683 = vld [vmem:[#allocation5 + $0x478] sm:$0xff]
        %v684 = vld [vmem:[#allocation5 + $0x480] sm:$0xff]
        %v685 = vld [vmem:[#allocation5 + $0x488] sm:$0xff]
        %v686 = vld [vmem:[#allocation5 + $0x490] sm:$0xff]
        %v687 = vld [vmem:[#allocation5 + $0x498] sm:$0xff]
        %v688 = vld [vmem:[#allocation5 + $0x4a0] sm:$0xff]
        %v689 = vld [vmem:[#allocation5 + $0x4a8] sm:$0xff]
        %v690 = vld [vmem:[#allocation5 + $0x4b0] sm:$0xff]
        %v691 = vld [vmem:[#allocation5 + $0x4b8] sm:$0xff]
        %v692 = vld [vmem:[#allocation5 + $0x4c0] sm:$0xff]
        %v693 = vld [vmem:[#allocation5 + $0x4c8] sm:$0xff]
        %v694 = vld [vmem:[#allocation5 + $0x4d0] sm:$0xff]
        %v695 = vld [vmem:[#allocation5 + $0x4d8] sm:$0xff]
        %v696 = vld [vmem:[#allocation5 + $0x4e0] sm:$0xff]
        %v697 = vld [vmem:[#allocation5 + $0x4e8] sm:$0xff]
        %v698 = vld [vmem:[#allocation5 + $0x4f0] sm:$0xff]
        %v699 = vld [vmem:[#allocation5 + $0x4f8] sm:$0xff]
        %v700 = vld [vmem:[#allocation5 + $0x500] sm:$0xff]
        %v701 = vld [vmem:[#allocation5 + $0x508] sm:$0xff]
        %v702 = vld [vmem:[#allocation5 + $0x510] sm:$0xff]
        %v703 = vld [vmem:[#allocation5 + $0x518] sm:$0xff]
        %v704 = vld [vmem:[#allocation5 + $0x520] sm:$0xff]
        %v705 = vld [vmem:[#allocation5 + $0x528] sm:$0xff]
        %v706 = vld [vmem:[#allocation5 + $0x530] sm:$0xff]
        %v707 = vld [vmem:[#allocation5 + $0x538] sm:$0xff]
        %v708 = vld [vmem:[#allocation5 + $0x540] sm:$0xff]
        %v709 = vld [vmem:[#allocation5 + $0x548] sm:$0xff]
        %v710 = vld [vmem:[#allocation5 + $0x550] sm:$0xff]
        %v711 = vld [vmem:[#allocation5 + $0x558] sm:$0xff]
        %v712 = vld [vmem:[#allocation5 + $0x560] sm:$0xff]
        %v713 = vld [vmem:[#allocation5 + $0x568] sm:$0xff]
        %v714 = vld [vmem:[#allocation5 + $0x570] sm:$0xff]
        %v715 = vld [vmem:[#allocation5 + $0x578] sm:$0xff]
        %v716 = vld [vmem:[#allocation5 + $0x580] sm:$0xff]
        %v717 = vld [vmem:[#allocation5 + $0x588] sm:$0xff]
        %v718 = vld [vmem:[#allocation5 + $0x590] sm:$0xff]
        %v719 = vld [vmem:[#allocation5 + $0x598] sm:$0xff]
        %v720 = vld [vmem:[#allocation5 + $0x5a0] sm:$0xff]
        %v721 = vld [vmem:[#allocation5 + $0x5a8] sm:$0xff]
        %v722 = vld [vmem:[#allocation5 + $0x5b0] sm:$0xff]
        %v723 = vld [vmem:[#allocation5 + $0x5b8] sm:$0xff]
        %v724 = vld [vmem:[#allocation5 + $0x5c0] sm:$0xff]
        %v725 = vld [vmem:[#allocation5 + $0x5c8] sm:$0xff]
        %v726 = vld [vmem:[#allocation5 + $0x5d0] sm:$0xff]
        %v727 = vld [vmem:[#allocation5 + $0x5d8] sm:$0xff]
        %v728 = vld [vmem:[#allocation5 + $0x5e0] sm:$0xff]
        %v729 = vld [vmem:[#allocation5 + $0x5e8] sm:$0xff]
        %v730 = vld [vmem:[#allocation5 + $0x5f0] sm:$0xff]
        %v731 = vld [vmem:[#allocation5 + $0x5f8] sm:$0xff]
        %v732 = vld [vmem:[#allocation5 + $0x600] sm:$0xff]
        %v733 = vld [vmem:[#allocation5 + $0x608] sm:$0xff]
        %v734 = vld [vmem:[#allocation5 + $0x610] sm:$0xff]
        %v735 = vld [vmem:[#allocation5 + $0x618] sm:$0xff]
        %v736 = vld [vmem:[#allocation5 + $0x620] sm:$0xff]
        %v737 = vld [vmem:[#allocation5 + $0x628] sm:$0xff]
        %v738 = vld [vmem:[#allocation5 + $0x630] sm:$0xff]
        %v739 = vld [vmem:[#allocation5 + $0x638] sm:$0xff]
        %v740 = vld [vmem:[#allocation5 + $0x640] sm:$0xff]
        %v741 = vld [vmem:[#allocation5 + $0x648] sm:$0xff]
        %v742 = vld [vmem:[#allocation5 + $0x650] sm:$0xff]
        %v743 = vld [vmem:[#allocation5 + $0x658] sm:$0xff]
        %v744 = vld [vmem:[#allocation5 + $0x660] sm:$0xff]
        %v745 = vld [vmem:[#allocation5 + $0x668] sm:$0xff]
        %v746 = vld [vmem:[#allocation5 + $0x670] sm:$0xff]
        %v747 = vld [vmem:[#allocation5 + $0x678] sm:$0xff]
        %v748 = vld [vmem:[#allocation5 + $0x680] sm:$0xff]
        %v749 = vld [vmem:[#allocation5 + $0x688] sm:$0xff]
        %v750 = vld [vmem:[#allocation5 + $0x690] sm:$0xff]
        %v751 = vld [vmem:[#allocation5 + $0x698] sm:$0xff]
        %v752 = vld [vmem:[#allocation5 + $0x6a0] sm:$0xff]
        %v753 = vld [vmem:[#allocation5 + $0x6a8] sm:$0xff]
        %v754 = vld [vmem:[#allocation5 + $0x6b0] sm:$0xff]
        %v755 = vld [vmem:[#allocation5 + $0x6b8] sm:$0xff]
        %v756 = vld [vmem:[#allocation5 + $0x6c0] sm:$0xff]
        %v757 = vld [vmem:[#allocation5 + $0x6c8] sm:$0xff]
        %v758 = vld [vmem:[#allocation5 + $0x6d0] sm:$0xff]
        %v759 = vld [vmem:[#allocation5 + $0x6d8] sm:$0xff]
        %v760 = vld [vmem:[#allocation5 + $0x6e0] sm:$0xff]
        %v761 = vld [vmem:[#allocation5 + $0x6e8] sm:$0xff]
        %v762 = vld [vmem:[#allocation5 + $0x6f0] sm:$0xff]
        %v763 = vld [vmem:[#allocation5 + $0x6f8] sm:$0xff]
        %v764 = vld [vmem:[#allocation5 + $0x700] sm:$0xff]
        %v765 = vld [vmem:[#allocation5 + $0x708] sm:$0xff]
        %v766 = vld [vmem:[#allocation5 + $0x710] sm:$0xff]
        %v767 = vld [vmem:[#allocation5 + $0x718] sm:$0xff]
        %v768 = vld [vmem:[#allocation5 + $0x720] sm:$0xff]
        %v769 = vld [vmem:[#allocation5 + $0x728] sm:$0xff]
        %v770 = vld [vmem:[#allocation5 + $0x730] sm:$0xff]
        %v771 = vld [vmem:[#allocation5 + $0x738] sm:$0xff]
        %v772 = vld [vmem:[#allocation5 + $0x740] sm:$0xff]
        %v773 = vld [vmem:[#allocation5 + $0x748] sm:$0xff]
        %v774 = vld [vmem:[#allocation5 + $0x750] sm:$0xff]
        %v775 = vld [vmem:[#allocation5 + $0x758] sm:$0xff]
        %v776 = vld [vmem:[#allocation5 + $0x760] sm:$0xff]
        %v777 = vld [vmem:[#allocation5 + $0x768] sm:$0xff]
        %v778 = vld [vmem:[#allocation5 + $0x770] sm:$0xff]
        %v779 = vld [vmem:[#allocation5 + $0x778] sm:$0xff]
        %v780 = vld [vmem:[#allocation5 + $0x780] sm:$0xff]
        %v781 = vld [vmem:[#allocation5 + $0x788] sm:$0xff]
        %v782 = vld [vmem:[#allocation5 + $0x790] sm:$0xff]
        %v783 = vld [vmem:[#allocation5 + $0x798] sm:$0xff]
        %v784 = vld [vmem:[#allocation5 + $0x7a0] sm:$0xff]
        %v785 = vld [vmem:[#allocation5 + $0x7a8] sm:$0xff]
        %v786 = vld [vmem:[#allocation5 + $0x7b0] sm:$0xff]
        %v787 = vld [vmem:[#allocation5 + $0x7b8] sm:$0xff]
        %v788 = vld [vmem:[#allocation5 + $0x7c0] sm:$0xff]
        %v789 = vld [vmem:[#allocation5 + $0x7c8] sm:$0xff]
        %v790 = vld [vmem:[#allocation5 + $0x7d0] sm:$0xff]
        %v791 = vld [vmem:[#allocation5 + $0x7d8] sm:$0xff]
        %v792 = vld [vmem:[#allocation5 + $0x7e0] sm:$0xff]
        %v793 = vld [vmem:[#allocation5 + $0x7e8] sm:$0xff]
        %v794 = vld [vmem:[#allocation5 + $0x7f0] sm:$0xff]
        %v795 = vld [vmem:[#allocation5 + $0x7f8] sm:$0xff]
        %v796 = vld [vmem:[#allocation5 + $0x800] sm:$0xff]
        %v797 = vld [vmem:[#allocation5 + $0x808] sm:$0xff]
        %v798 = vld [vmem:[#allocation5 + $0x810] sm:$0xff]
        %v799 = vld [vmem:[#allocation5 + $0x818] sm:$0xff]
        %v800 = vld [vmem:[#allocation5 + $0x820] sm:$0xff]
        %v801 = vld [vmem:[#allocation5 + $0x828] sm:$0xff]
        %v802 = vld [vmem:[#allocation5 + $0x830] sm:$0xff]
        %v803 = vld [vmem:[#allocation5 + $0x838] sm:$0xff]
        %v804 = vld [vmem:[#allocation5 + $0x840] sm:$0xff]
        %v805 = vld [vmem:[#allocation5 + $0x848] sm:$0xff]
        %v806 = vld [vmem:[#allocation5 + $0x850] sm:$0xff]
        %v807 = vld [vmem:[#allocation5 + $0x858] sm:$0xff]
        %v808 = vld [vmem:[#allocation5 + $0x860] sm:$0xff]
        %v809 = vld [vmem:[#allocation5 + $0x868] sm:$0xff]
        %v810 = vld [vmem:[#allocation5 + $0x870] sm:$0xff]
        %v811 = vld [vmem:[#allocation5 + $0x878] sm:$0xff]
        %v812 = vld [vmem:[#allocation5 + $0x880] sm:$0xff]
        %v813 = vld [vmem:[#allocation5 + $0x888] sm:$0xff]
        %v814 = vld [vmem:[#allocation5 + $0x890] sm:$0xff]
        %v815 = vld [vmem:[#allocation5 + $0x898] sm:$0xff]
        %v816 = vld [vmem:[#allocation5 + $0x8a0] sm:$0xff]
        %v817 = vld [vmem:[#allocation5 + $0x8a8] sm:$0xff]
        %v818 = vld [vmem:[#allocation5 + $0x8b0] sm:$0xff]
        %v819 = vld [vmem:[#allocation5 + $0x8b8] sm:$0xff]
        %v820 = vld [vmem:[#allocation5 + $0x8c0] sm:$0xff]
        %v821 = vld [vmem:[#allocation5 + $0x8c8] sm:$0xff]
        %v822 = vld [vmem:[#allocation5 + $0x8d0] sm:$0xff]
        %v823 = vld [vmem:[#allocation5 + $0x8d8] sm:$0xff]
        %v824 = vld [vmem:[#allocation5 + $0x8e0] sm:$0xff]
        %v825 = vld [vmem:[#allocation5 + $0x8e8] sm:$0xff]
        %v826 = vld [vmem:[#allocation5 + $0x8f0] sm:$0xff]
        %v827 = vld [vmem:[#allocation5 + $0x8f8] sm:$0xff]
        %v828 = vld [vmem:[#allocation5 + $0x900] sm:$0xff]
        %v829 = vld [vmem:[#allocation5 + $0x908] sm:$0xff]
        %v830 = vld [vmem:[#allocation5 + $0x910] sm:$0xff]
        %v831 = vld [vmem:[#allocation5 + $0x918] sm:$0xff]
        %v832 = vld [vmem:[#allocation5 + $0x920] sm:$0xff]
        %v833 = vld [vmem:[#allocation5 + $0x928] sm:$0xff]
        %v834 = vld [vmem:[#allocation5 + $0x930] sm:$0xff]
        %v835 = vld [vmem:[#allocation5 + $0x938] sm:$0xff]
        %v836 = vld [vmem:[#allocation5 + $0x940] sm:$0xff]
        %v837 = vld [vmem:[#allocation5 + $0x948] sm:$0xff]
        %v838 = vld [vmem:[#allocation5 + $0x950] sm:$0xff]
        %v839 = vld [vmem:[#allocation5 + $0x958] sm:$0xff]
        %v840 = vld [vmem:[#allocation5 + $0x960] sm:$0xff]
        %v841 = vld [vmem:[#allocation5 + $0x968] sm:$0xff]
        %v842 = vld [vmem:[#allocation5 + $0x970] sm:$0xff]
        %v843 = vld [vmem:[#allocation5 + $0x978] sm:$0xff]
        %v844 = vld [vmem:[#allocation5 + $0x980] sm:$0xff]
        %v845 = vld [vmem:[#allocation5 + $0x988] sm:$0xff]
        %v846 = vld [vmem:[#allocation5 + $0x990] sm:$0xff]
        %v847 = vld [vmem:[#allocation5 + $0x998] sm:$0xff]
        %v848 = vld [vmem:[#allocation5 + $0x9a0] sm:$0xff]
        %v849 = vld [vmem:[#allocation5 + $0x9a8] sm:$0xff]
        %v850 = vld [vmem:[#allocation5 + $0x9b0] sm:$0xff]
        %v851 = vld [vmem:[#allocation5 + $0x9b8] sm:$0xff]
        %v852 = vld [vmem:[#allocation5 + $0x9c0] sm:$0xff]
        %v853 = vld [vmem:[#allocation5 + $0x9c8] sm:$0xff]
        %v854 = vld [vmem:[#allocation5 + $0x9d0] sm:$0xff]
        %v855 = vld [vmem:[#allocation5 + $0x9d8] sm:$0xff]
        %v856 = vld [vmem:[#allocation5 + $0x9e0] sm:$0xff]
        %v857 = vld [vmem:[#allocation5 + $0x9e8] sm:$0xff]
        %v858 = vld [vmem:[#allocation5 + $0x9f0] sm:$0xff]
        %v859 = vld [vmem:[#allocation5 + $0x9f8] sm:$0xff]
        %v860 = vld [vmem:[#allocation5 + $0xa00] sm:$0xff]
        %v861 = vld [vmem:[#allocation5 + $0xa08] sm:$0xff]
        %v862 = vld [vmem:[#allocation5 + $0xa10] sm:$0xff]
        %v863 = vld [vmem:[#allocation5 + $0xa18] sm:$0xff]
        %v864 = vld [vmem:[#allocation5 + $0xa20] sm:$0xff]
        %v865 = vld [vmem:[#allocation5 + $0xa28] sm:$0xff]
        %v866 = vld [vmem:[#allocation5 + $0xa30] sm:$0xff]
        %v867 = vld [vmem:[#allocation5 + $0xa38] sm:$0xff]
        %v868 = vld [vmem:[#allocation5 + $0xa40] sm:$0xff]
        %v869 = vld [vmem:[#allocation5 + $0xa48] sm:$0xff]
        %v870 = vld [vmem:[#allocation5 + $0xa50] sm:$0xff]
        %v871 = vld [vmem:[#allocation5 + $0xa58] sm:$0xff]
        %v872 = vld [vmem:[#allocation5 + $0xa60] sm:$0xff]
        %v873 = vld [vmem:[#allocation5 + $0xa68] sm:$0xff]
        %v874 = vld [vmem:[#allocation5 + $0xa70] sm:$0xff]
        %v875 = vld [vmem:[#allocation5 + $0xa78] sm:$0xff]
        %v876 = vld [vmem:[#allocation5 + $0xa80] sm:$0xff]
        %v877 = vld [vmem:[#allocation5 + $0xa88] sm:$0xff]
        %v878 = vld [vmem:[#allocation5 + $0xa90] sm:$0xff]
        %v879 = vld [vmem:[#allocation5 + $0xa98] sm:$0xff]
        %v880 = vld [vmem:[#allocation5 + $0xaa0] sm:$0xff]
        %v881 = vld [vmem:[#allocation5 + $0xaa8] sm:$0xff]
        %v882 = vld [vmem:[#allocation5 + $0xab0] sm:$0xff]
        %v883 = vld [vmem:[#allocation5 + $0xab8] sm:$0xff]
        %v884 = vld [vmem:[#allocation5 + $0xac0] sm:$0xff]
        %v885 = vld [vmem:[#allocation5 + $0xac8] sm:$0xff]
        %v886 = vld [vmem:[#allocation5 + $0xad0] sm:$0xff]
        %v887 = vld [vmem:[#allocation5 + $0xad8] sm:$0xff]
        %v888 = vld [vmem:[#allocation5 + $0xae0] sm:$0xff]
        %v889 = vld [vmem:[#allocation5 + $0xae8] sm:$0xff]
        %v890 = vld [vmem:[#allocation5 + $0xaf0] sm:$0xff]
        %v891 = vld [vmem:[#allocation5 + $0xaf8] sm:$0xff]
        %v892 = vld [vmem:[#allocation5 + $0xb00] sm:$0xff]
        %v893 = vld [vmem:[#allocation5 + $0xb08] sm:$0xff]
        %v894 = vld [vmem:[#allocation5 + $0xb10] sm:$0xff]
        %v895 = vld [vmem:[#allocation5 + $0xb18] sm:$0xff]
        %v896 = vld [vmem:[#allocation5 + $0xb20] sm:$0xff]
        %v897 = vld [vmem:[#allocation5 + $0xb28] sm:$0xff]
        %v898 = vld [vmem:[#allocation5 + $0xb30] sm:$0xff]
        %v899 = vld [vmem:[#allocation5 + $0xb38] sm:$0xff]
        %v900 = vld [vmem:[#allocation5 + $0xb40] sm:$0xff]
        %v901 = vld [vmem:[#allocation5 + $0xb48] sm:$0xff]
        %v902 = vld [vmem:[#allocation5 + $0xb50] sm:$0xff]
        %v903 = vld [vmem:[#allocation5 + $0xb58] sm:$0xff]
        %v904 = vld [vmem:[#allocation5 + $0xb60] sm:$0xff]
        %v905 = vld [vmem:[#allocation5 + $0xb68] sm:$0xff]
        %v906 = vld [vmem:[#allocation5 + $0xb70] sm:$0xff]
        %v907 = vld [vmem:[#allocation5 + $0xb78] sm:$0xff]
        %v908 = vld [vmem:[#allocation5 + $0xb80] sm:$0xff]
        %v909 = vld [vmem:[#allocation5 + $0xb88] sm:$0xff]
        %v910 = vld [vmem:[#allocation5 + $0xb90] sm:$0xff]
        %v911 = vld [vmem:[#allocation5 + $0xb98] sm:$0xff]
        %v912 = vld [vmem:[#allocation5 + $0xba0] sm:$0xff]
        %v913 = vld [vmem:[#allocation5 + $0xba8] sm:$0xff]
        %v914 = vld [vmem:[#allocation5 + $0xbb0] sm:$0xff]
        %v915 = vld [vmem:[#allocation5 + $0xbb8] sm:$0xff]
        %v916 = vld [vmem:[#allocation5 + $0xbc0] sm:$0xff]
        %v917 = vld [vmem:[#allocation5 + $0xbc8] sm:$0xff]
        %v918 = vld [vmem:[#allocation5 + $0xbd0] sm:$0xff]
        %v919 = vld [vmem:[#allocation5 + $0xbd8] sm:$0xff]
        %v920 = vld [vmem:[#allocation5 + $0xbe0] sm:$0xff]
        %v921 = vld [vmem:[#allocation5 + $0xbe8] sm:$0xff]
        %v922 = vld [vmem:[#allocation5 + $0xbf0] sm:$0xff]
        %v923 = vld [vmem:[#allocation5 + $0xbf8] sm:$0xff]
        %v924 = vld [vmem:[#allocation8] sm:$0xff]
        %v925 = vld [vmem:[#allocation8 + $0x8] sm:$0xff]
        %v926 = vld [vmem:[#allocation8 + $0x10] sm:$0xff]
        %v927 = vld [vmem:[#allocation8 + $0x18] sm:$0xff]
        %v928 = vld [vmem:[#allocation8 + $0x20] sm:$0xff]
        %v929 = vld [vmem:[#allocation8 + $0x28] sm:$0xff]
        %v930 = vld [vmem:[#allocation8 + $0x30] sm:$0xff]
        %v931 = vld [vmem:[#allocation8 + $0x38] sm:$0xff]
        %v932 = vld [vmem:[#allocation8 + $0x40] sm:$0xff]
        %v933 = vld [vmem:[#allocation8 + $0x48] sm:$0xff]
        %v934 = vld [vmem:[#allocation8 + $0x50] sm:$0xff]
        %v935 = vld [vmem:[#allocation8 + $0x58] sm:$0xff]
        %v936 = vld [vmem:[#allocation8 + $0x60] sm:$0xff]
        %v937 = vld [vmem:[#allocation8 + $0x68] sm:$0xff]
        %v938 = vld [vmem:[#allocation8 + $0x70] sm:$0xff]
        %v939 = vld [vmem:[#allocation8 + $0x78] sm:$0xff]
        %v940 = vld [vmem:[#allocation8 + $0x80] sm:$0xff]
        %v941 = vld [vmem:[#allocation8 + $0x88] sm:$0xff]
        %v942 = vld [vmem:[#allocation8 + $0x90] sm:$0xff]
        %v943 = vld [vmem:[#allocation8 + $0x98] sm:$0xff]
        %v944 = vld [vmem:[#allocation8 + $0xa0] sm:$0xff]
        %v945 = vld [vmem:[#allocation8 + $0xa8] sm:$0xff]
        %v946 = vld [vmem:[#allocation8 + $0xb0] sm:$0xff]
        %v947 = vld [vmem:[#allocation8 + $0xb8] sm:$0xff]
        %v948 = vld [vmem:[#allocation8 + $0xc0] sm:$0xff]
        %v949 = vld [vmem:[#allocation8 + $0xc8] sm:$0xff]
        %v950 = vld [vmem:[#allocation8 + $0xd0] sm:$0xff]
        %v951 = vld [vmem:[#allocation8 + $0xd8] sm:$0xff]
        %v952 = vld [vmem:[#allocation8 + $0xe0] sm:$0xff]
        %v953 = vld [vmem:[#allocation8 + $0xe8] sm:$0xff]
        %v954 = vld [vmem:[#allocation8 + $0xf0] sm:$0xff]
        %v955 = vld [vmem:[#allocation8 + $0xf8] sm:$0xff]
        %v956 = vld [vmem:[#allocation8 + $0x100] sm:$0xff]
        %v957 = vld [vmem:[#allocation8 + $0x108] sm:$0xff]
        %v958 = vld [vmem:[#allocation8 + $0x110] sm:$0xff]
        %v959 = vld [vmem:[#allocation8 + $0x118] sm:$0xff]
        %v960 = vld [vmem:[#allocation8 + $0x120] sm:$0xff]
        %v961 = vld [vmem:[#allocation8 + $0x128] sm:$0xff]
        %v962 = vld [vmem:[#allocation8 + $0x130] sm:$0xff]
        %v963 = vld [vmem:[#allocation8 + $0x138] sm:$0xff]
        %v964 = vld [vmem:[#allocation8 + $0x140] sm:$0xff]
        %v965 = vld [vmem:[#allocation8 + $0x148] sm:$0xff]
        %v966 = vld [vmem:[#allocation8 + $0x150] sm:$0xff]
        %v967 = vld [vmem:[#allocation8 + $0x158] sm:$0xff]
        %v968 = vld [vmem:[#allocation8 + $0x160] sm:$0xff]
        %v969 = vld [vmem:[#allocation8 + $0x168] sm:$0xff]
        %v970 = vld [vmem:[#allocation8 + $0x170] sm:$0xff]
        %v971 = vld [vmem:[#allocation8 + $0x178] sm:$0xff]
        %v972 = vld [vmem:[#allocation8 + $0x180] sm:$0xff]
        %v973 = vld [vmem:[#allocation8 + $0x188] sm:$0xff]
        %v974 = vld [vmem:[#allocation8 + $0x190] sm:$0xff]
        %v975 = vld [vmem:[#allocation8 + $0x198] sm:$0xff]
        %v976 = vld [vmem:[#allocation8 + $0x1a0] sm:$0xff]
        %v977 = vld [vmem:[#allocation8 + $0x1a8] sm:$0xff]
        %v978 = vld [vmem:[#allocation8 + $0x1b0] sm:$0xff]
        %v979 = vld [vmem:[#allocation8 + $0x1b8] sm:$0xff]
        %v980 = vld [vmem:[#allocation8 + $0x1c0] sm:$0xff]
        %v981 = vld [vmem:[#allocation8 + $0x1c8] sm:$0xff]
        %v982 = vld [vmem:[#allocation8 + $0x1d0] sm:$0xff]
        %v983 = vld [vmem:[#allocation8 + $0x1d8] sm:$0xff]
        %v984 = vld [vmem:[#allocation8 + $0x1e0] sm:$0xff]
        %v985 = vld [vmem:[#allocation8 + $0x1e8] sm:$0xff]
        %v986 = vld [vmem:[#allocation8 + $0x1f0] sm:$0xff]
        %v987 = vld [vmem:[#allocation8 + $0x1f8] sm:$0xff]
        %v988 = vld [vmem:[#allocation8 + $0x200] sm:$0xff]
        %v989 = vld [vmem:[#allocation8 + $0x208] sm:$0xff]
        %v990 = vld [vmem:[#allocation8 + $0x210] sm:$0xff]
        %v991 = vld [vmem:[#allocation8 + $0x218] sm:$0xff]
        %v992 = vld [vmem:[#allocation8 + $0x220] sm:$0xff]
        %v993 = vld [vmem:[#allocation8 + $0x228] sm:$0xff]
        %v994 = vld [vmem:[#allocation8 + $0x230] sm:$0xff]
        %v995 = vld [vmem:[#allocation8 + $0x238] sm:$0xff]
        %v996 = vld [vmem:[#allocation8 + $0x240] sm:$0xff]
        %v997 = vld [vmem:[#allocation8 + $0x248] sm:$0xff]
        %v998 = vld [vmem:[#allocation8 + $0x250] sm:$0xff]
        %v999 = vld [vmem:[#allocation8 + $0x258] sm:$0xff]
        %v1000 = vld [vmem:[#allocation8 + $0x260] sm:$0xff]
        %v1001 = vld [vmem:[#allocation8 + $0x268] sm:$0xff]
        %v1002 = vld [vmem:[#allocation8 + $0x270] sm:$0xff]
        %v1003 = vld [vmem:[#allocation8 + $0x278] sm:$0xff]
        %v1004 = vld [vmem:[#allocation8 + $0x280] sm:$0xff]
        %v1005 = vld [vmem:[#allocation8 + $0x288] sm:$0xff]
        %v1006 = vld [vmem:[#allocation8 + $0x290] sm:$0xff]
        %v1007 = vld [vmem:[#allocation8 + $0x298] sm:$0xff]
        %v1008 = vld [vmem:[#allocation8 + $0x2a0] sm:$0xff]
        %v1009 = vld [vmem:[#allocation8 + $0x2a8] sm:$0xff]
        %v1010 = vld [vmem:[#allocation8 + $0x2b0] sm:$0xff]
        %v1011 = vld [vmem:[#allocation8 + $0x2b8] sm:$0xff]
        %v1012 = vld [vmem:[#allocation8 + $0x2c0] sm:$0xff]
        %v1013 = vld [vmem:[#allocation8 + $0x2c8] sm:$0xff]
        %v1014 = vld [vmem:[#allocation8 + $0x2d0] sm:$0xff]
        %v1015 = vld [vmem:[#allocation8 + $0x2d8] sm:$0xff]
        %v1016 = vld [vmem:[#allocation8 + $0x2e0] sm:$0xff]
        %v1017 = vld [vmem:[#allocation8 + $0x2e8] sm:$0xff]
        %v1018 = vld [vmem:[#allocation8 + $0x2f0] sm:$0xff]
        %v1019 = vld [vmem:[#allocation8 + $0x2f8] sm:$0xff]
        %v1020 = vld [vmem:[#allocation7] sm:$0x3f]
        %v1022 = vlaneseq
        %v1023 = vshrl.u32 %v1022, 7
        %v1024 = vsub.s32 0, %v1023
        %v1025 = vrot.slane %v1020, %v1024
        %v1026 = vlaneseq
        %v1027 = vshrl.u32 %v1026, 7
        %v1028 = vsub.s32 1, %v1027
        %v1029 = vrot.slane %v1020, %v1028
        %v1030 = vlaneseq
        %v1031 = vshrl.u32 %v1030, 7
        %v1032 = vsub.s32 2, %v1031
        %v1033 = vrot.slane %v1020, %v1032
        %v1034 = vlaneseq
        %v1035 = vshrl.u32 %v1034, 7
        %v1036 = vsub.s32 3, %v1035
        %v1037 = vrot.slane %v1020, %v1036
        %v1038 = vlaneseq
        %v1039 = vshrl.u32 %v1038, 7
        %v1040 = vsub.s32 4, %v1039
        %v1041 = vrot.slane %v1020, %v1040
        %v1042 = vlaneseq
        %v1043 = vshrl.u32 %v1042, 7
        %v1044 = vsub.s32 5, %v1043
        %v1045 = vrot.slane %v1020, %v1044
        %v1436 = vunpack.c.l.b16 %v540
        %v1437 = vunpack.c.h.b16 %v540
        %v1438 = vunpack.c.l.b16 %v541
        %v1439 = vunpack.c.h.b16 %v541
        %v1440 = vunpack.c.l.b16 %v542
        %v1441 = vunpack.c.h.b16 %v542
        %v1442 = vunpack.c.l.b16 %v543
        %v1443 = vunpack.c.h.b16 %v543
        %v1444 = vunpack.c.l.b16 %v544
        %v1445 = vunpack.c.h.b16 %v544
        %v1446 = vunpack.c.l.b16 %v545
        %v1447 = vunpack.c.h.b16 %v545
        %v1448 = vunpack.c.l.b16 %v546
        %v1449 = vunpack.c.h.b16 %v546
        %v1450 = vunpack.c.l.b16 %v547
        %v1451 = vunpack.c.h.b16 %v547
        %v1452 = vunpack.c.l.b16 %v548
        %v1453 = vunpack.c.h.b16 %v548
        %v1454 = vunpack.c.l.b16 %v549
        %v1455 = vunpack.c.h.b16 %v549
        %v1456 = vunpack.c.l.b16 %v550
        %v1457 = vunpack.c.h.b16 %v550
        %v1458 = vunpack.c.l.b16 %v551
        %v1459 = vunpack.c.h.b16 %v551
        %v1460 = vunpack.c.l.b16 %v552
        %v1461 = vunpack.c.h.b16 %v552
        %v1462 = vunpack.c.l.b16 %v553
        %v1463 = vunpack.c.h.b16 %v553
        %v1464 = vunpack.c.l.b16 %v554
        %v1465 = vunpack.c.h.b16 %v554
        %v1466 = vunpack.c.l.b16 %v555
        %v1467 = vunpack.c.h.b16 %v555
        %v1468 = vunpack.c.l.b16 %v556
        %v1469 = vunpack.c.h.b16 %v556
        %v1470 = vunpack.c.l.b16 %v557
        %v1471 = vunpack.c.h.b16 %v557
        %v1472 = vunpack.c.l.b16 %v558
        %v1473 = vunpack.c.h.b16 %v558
        %v1474 = vunpack.c.l.b16 %v559
        %v1475 = vunpack.c.h.b16 %v559
        %v1476 = vunpack.c.l.b16 %v560
        %v1477 = vunpack.c.h.b16 %v560
        %v1478 = vunpack.c.l.b16 %v561
        %v1479 = vunpack.c.h.b16 %v561
        %v1480 = vunpack.c.l.b16 %v562
        %v1481 = vunpack.c.h.b16 %v562
        %v1482 = vunpack.c.l.b16 %v563
        %v1483 = vunpack.c.h.b16 %v563
        %v1484 = vunpack.c.l.b16 %v564
        %v1485 = vunpack.c.h.b16 %v564
        %v1486 = vunpack.c.l.b16 %v565
        %v1487 = vunpack.c.h.b16 %v565
        %v1488 = vunpack.c.l.b16 %v566
        %v1489 = vunpack.c.h.b16 %v566
        %v1490 = vunpack.c.l.b16 %v567
        %v1491 = vunpack.c.h.b16 %v567
        %v1492 = vunpack.c.l.b16 %v568
        %v1493 = vunpack.c.h.b16 %v568
        %v1494 = vunpack.c.l.b16 %v569
        %v1495 = vunpack.c.h.b16 %v569
        %v1496 = vunpack.c.l.b16 %v570
        %v1497 = vunpack.c.h.b16 %v570
        %v1498 = vunpack.c.l.b16 %v571
        %v1499 = vunpack.c.h.b16 %v571
        %v1500 = vunpack.c.l.b16 %v572
        %v1501 = vunpack.c.h.b16 %v572
        %v1502 = vunpack.c.l.b16 %v573
        %v1503 = vunpack.c.h.b16 %v573
        %v1504 = vunpack.c.l.b16 %v574
        %v1505 = vunpack.c.h.b16 %v574
        %v1506 = vunpack.c.l.b16 %v575
        %v1507 = vunpack.c.h.b16 %v575
        %v1508 = vunpack.c.l.b16 %v576
        %v1509 = vunpack.c.h.b16 %v576
        %v1510 = vunpack.c.l.b16 %v577
        %v1511 = vunpack.c.h.b16 %v577
        %v1512 = vunpack.c.l.b16 %v578
        %v1513 = vunpack.c.h.b16 %v578
        %v1514 = vunpack.c.l.b16 %v579
        %v1515 = vunpack.c.h.b16 %v579
        %v1516 = vunpack.c.l.b16 %v580
        %v1517 = vunpack.c.h.b16 %v580
        %v1518 = vunpack.c.l.b16 %v581
        %v1519 = vunpack.c.h.b16 %v581
        %v1520 = vunpack.c.l.b16 %v582
        %v1521 = vunpack.c.h.b16 %v582
        %v1522 = vunpack.c.l.b16 %v583
        %v1523 = vunpack.c.h.b16 %v583
        %v1524 = vunpack.c.l.b16 %v584
        %v1525 = vunpack.c.h.b16 %v584
        %v1526 = vunpack.c.l.b16 %v585
        %v1527 = vunpack.c.h.b16 %v585
        %v1528 = vunpack.c.l.b16 %v586
        %v1529 = vunpack.c.h.b16 %v586
        %v1530 = vunpack.c.l.b16 %v587
        %v1531 = vunpack.c.h.b16 %v587
        %v1532 = vunpack.c.l.b16 %v588
        %v1533 = vunpack.c.h.b16 %v588
        %v1534 = vunpack.c.l.b16 %v589
        %v1535 = vunpack.c.h.b16 %v589
        %v1536 = vunpack.c.l.b16 %v590
        %v1537 = vunpack.c.h.b16 %v590
        %v1538 = vunpack.c.l.b16 %v591
        %v1539 = vunpack.c.h.b16 %v591
        %v1540 = vunpack.c.l.b16 %v592
        %v1541 = vunpack.c.h.b16 %v592
        %v1542 = vunpack.c.l.b16 %v593
        %v1543 = vunpack.c.h.b16 %v593
        %v1544 = vunpack.c.l.b16 %v594
        %v1545 = vunpack.c.h.b16 %v594
        %v1546 = vunpack.c.l.b16 %v595
        %v1547 = vunpack.c.h.b16 %v595
        %v1548 = vunpack.c.l.b16 %v596
        %v1549 = vunpack.c.h.b16 %v596
        %v1550 = vunpack.c.l.b16 %v597
        %v1551 = vunpack.c.h.b16 %v597
        %v1552 = vunpack.c.l.b16 %v598
        %v1553 = vunpack.c.h.b16 %v598
        %v1554 = vunpack.c.l.b16 %v599
        %v1555 = vunpack.c.h.b16 %v599
        %v1556 = vunpack.c.l.b16 %v600
        %v1557 = vunpack.c.h.b16 %v600
        %v1558 = vunpack.c.l.b16 %v601
        %v1559 = vunpack.c.h.b16 %v601
        %v1560 = vunpack.c.l.b16 %v602
        %v1561 = vunpack.c.h.b16 %v602
        %v1562 = vunpack.c.l.b16 %v603
        %v1563 = vunpack.c.h.b16 %v603
        %v1564 = vunpack.c.l.b16 %v604
        %v1565 = vunpack.c.h.b16 %v604
        %v1566 = vunpack.c.l.b16 %v605
        %v1567 = vunpack.c.h.b16 %v605
        %v1568 = vunpack.c.l.b16 %v606
        %v1569 = vunpack.c.h.b16 %v606
        %v1570 = vunpack.c.l.b16 %v607
        %v1571 = vunpack.c.h.b16 %v607
        %v1572 = vunpack.c.l.b16 %v608
        %v1573 = vunpack.c.h.b16 %v608
        %v1574 = vunpack.c.l.b16 %v609
        %v1575 = vunpack.c.h.b16 %v609
        %v1576 = vunpack.c.l.b16 %v610
        %v1577 = vunpack.c.h.b16 %v610
        %v1578 = vunpack.c.l.b16 %v611
        %v1579 = vunpack.c.h.b16 %v611
        %v1580 = vunpack.c.l.b16 %v612
        %v1581 = vunpack.c.h.b16 %v612
        %v1582 = vunpack.c.l.b16 %v613
        %v1583 = vunpack.c.h.b16 %v613
        %v1584 = vunpack.c.l.b16 %v614
        %v1585 = vunpack.c.h.b16 %v614
        %v1586 = vunpack.c.l.b16 %v615
        %v1587 = vunpack.c.h.b16 %v615
        %v1588 = vunpack.c.l.b16 %v616
        %v1589 = vunpack.c.h.b16 %v616
        %v1590 = vunpack.c.l.b16 %v617
        %v1591 = vunpack.c.h.b16 %v617
        %v1592 = vunpack.c.l.b16 %v618
        %v1593 = vunpack.c.h.b16 %v618
        %v1594 = vunpack.c.l.b16 %v619
        %v1595 = vunpack.c.h.b16 %v619
        %v1596 = vunpack.c.l.b16 %v620
        %v1597 = vunpack.c.h.b16 %v620
        %v1598 = vunpack.c.l.b16 %v621
        %v1599 = vunpack.c.h.b16 %v621
        %v1600 = vunpack.c.l.b16 %v622
        %v1601 = vunpack.c.h.b16 %v622
        %v1602 = vunpack.c.l.b16 %v623
        %v1603 = vunpack.c.h.b16 %v623
        %v1604 = vunpack.c.l.b16 %v624
        %v1605 = vunpack.c.h.b16 %v624
        %v1606 = vunpack.c.l.b16 %v625
        %v1607 = vunpack.c.h.b16 %v625
        %v1608 = vunpack.c.l.b16 %v626
        %v1609 = vunpack.c.h.b16 %v626
        %v1610 = vunpack.c.l.b16 %v627
        %v1611 = vunpack.c.h.b16 %v627
        %v1612 = vunpack.c.l.b16 %v628
        %v1613 = vunpack.c.h.b16 %v628
        %v1614 = vunpack.c.l.b16 %v629
        %v1615 = vunpack.c.h.b16 %v629
        %v1616 = vunpack.c.l.b16 %v630
        %v1617 = vunpack.c.h.b16 %v630
        %v1618 = vunpack.c.l.b16 %v631
        %v1619 = vunpack.c.h.b16 %v631
        %v1620 = vunpack.c.l.b16 %v632
        %v1621 = vunpack.c.h.b16 %v632
        %v1622 = vunpack.c.l.b16 %v633
        %v1623 = vunpack.c.h.b16 %v633
        %v1624 = vunpack.c.l.b16 %v634
        %v1625 = vunpack.c.h.b16 %v634
        %v1626 = vunpack.c.l.b16 %v635
        %v1627 = vunpack.c.h.b16 %v635
        %v1628 = vunpack.c.l.b16 %v636
        %v1629 = vunpack.c.h.b16 %v636
        %v1630 = vunpack.c.l.b16 %v637
        %v1631 = vunpack.c.h.b16 %v637
        %v1632 = vunpack.c.l.b16 %v638
        %v1633 = vunpack.c.h.b16 %v638
        %v1634 = vunpack.c.l.b16 %v639
        %v1635 = vunpack.c.h.b16 %v639
        %v1636 = vunpack.c.l.b16 %v640
        %v1637 = vunpack.c.h.b16 %v640
        %v1638 = vunpack.c.l.b16 %v641
        %v1639 = vunpack.c.h.b16 %v641
        %v1640 = vunpack.c.l.b16 %v642
        %v1641 = vunpack.c.h.b16 %v642
        %v1642 = vunpack.c.l.b16 %v643
        %v1643 = vunpack.c.h.b16 %v643
        %v1644 = vunpack.c.l.b16 %v644
        %v1645 = vunpack.c.h.b16 %v644
        %v1646 = vunpack.c.l.b16 %v645
        %v1647 = vunpack.c.h.b16 %v645
        %v1648 = vunpack.c.l.b16 %v646
        %v1649 = vunpack.c.h.b16 %v646
        %v1650 = vunpack.c.l.b16 %v647
        %v1651 = vunpack.c.h.b16 %v647
        %v1652 = vunpack.c.l.b16 %v648
        %v1653 = vunpack.c.h.b16 %v648
        %v1654 = vunpack.c.l.b16 %v649
        %v1655 = vunpack.c.h.b16 %v649
        %v1656 = vunpack.c.l.b16 %v650
        %v1657 = vunpack.c.h.b16 %v650
        %v1658 = vunpack.c.l.b16 %v651
        %v1659 = vunpack.c.h.b16 %v651
        %v1660 = vunpack.c.l.b16 %v652
        %v1661 = vunpack.c.h.b16 %v652
        %v1662 = vunpack.c.l.b16 %v653
        %v1663 = vunpack.c.h.b16 %v653
        %v1664 = vunpack.c.l.b16 %v654
        %v1665 = vunpack.c.h.b16 %v654
        %v1666 = vunpack.c.l.b16 %v655
        %v1667 = vunpack.c.h.b16 %v655
        %v1668 = vunpack.c.l.b16 %v656
        %v1669 = vunpack.c.h.b16 %v656
        %v1670 = vunpack.c.l.b16 %v657
        %v1671 = vunpack.c.h.b16 %v657
        %v1672 = vunpack.c.l.b16 %v658
        %v1673 = vunpack.c.h.b16 %v658
        %v1674 = vunpack.c.l.b16 %v659
        %v1675 = vunpack.c.h.b16 %v659
        %v1676 = vunpack.c.l.b16 %v660
        %v1677 = vunpack.c.h.b16 %v660
        %v1678 = vunpack.c.l.b16 %v661
        %v1679 = vunpack.c.h.b16 %v661
        %v1680 = vunpack.c.l.b16 %v662
        %v1681 = vunpack.c.h.b16 %v662
        %v1682 = vunpack.c.l.b16 %v663
        %v1683 = vunpack.c.h.b16 %v663
        %v1684 = vunpack.c.l.b16 %v664
        %v1685 = vunpack.c.h.b16 %v664
        %v1686 = vunpack.c.l.b16 %v665
        %v1687 = vunpack.c.h.b16 %v665
        %v1688 = vunpack.c.l.b16 %v666
        %v1689 = vunpack.c.h.b16 %v666
        %v1690 = vunpack.c.l.b16 %v667
        %v1691 = vunpack.c.h.b16 %v667
        %v1692 = vunpack.c.l.b16 %v668
        %v1693 = vunpack.c.h.b16 %v668
        %v1694 = vunpack.c.l.b16 %v669
        %v1695 = vunpack.c.h.b16 %v669
        %v1696 = vunpack.c.l.b16 %v670
        %v1697 = vunpack.c.h.b16 %v670
        %v1698 = vunpack.c.l.b16 %v671
        %v1699 = vunpack.c.h.b16 %v671
        %v1700 = vunpack.c.l.b16 %v672
        %v1701 = vunpack.c.h.b16 %v672
        %v1702 = vunpack.c.l.b16 %v673
        %v1703 = vunpack.c.h.b16 %v673
        %v1704 = vunpack.c.l.b16 %v674
        %v1705 = vunpack.c.h.b16 %v674
        %v1706 = vunpack.c.l.b16 %v675
        %v1707 = vunpack.c.h.b16 %v675
        %v1708 = vunpack.c.l.b16 %v676
        %v1709 = vunpack.c.h.b16 %v676
        %v1710 = vunpack.c.l.b16 %v677
        %v1711 = vunpack.c.h.b16 %v677
        %v1712 = vunpack.c.l.b16 %v678
        %v1713 = vunpack.c.h.b16 %v678
        %v1714 = vunpack.c.l.b16 %v679
        %v1715 = vunpack.c.h.b16 %v679
        %v1716 = vunpack.c.l.b16 %v680
        %v1717 = vunpack.c.h.b16 %v680
        %v1718 = vunpack.c.l.b16 %v681
        %v1719 = vunpack.c.h.b16 %v681
        %v1720 = vunpack.c.l.b16 %v682
        %v1721 = vunpack.c.h.b16 %v682
        %v1722 = vunpack.c.l.b16 %v683
        %v1723 = vunpack.c.h.b16 %v683
        %v1724 = vunpack.c.l.b16 %v684
        %v1725 = vunpack.c.h.b16 %v684
        %v1726 = vunpack.c.l.b16 %v685
        %v1727 = vunpack.c.h.b16 %v685
        %v1728 = vunpack.c.l.b16 %v686
        %v1729 = vunpack.c.h.b16 %v686
        %v1730 = vunpack.c.l.b16 %v687
        %v1731 = vunpack.c.h.b16 %v687
        %v1732 = vunpack.c.l.b16 %v688
        %v1733 = vunpack.c.h.b16 %v688
        %v1734 = vunpack.c.l.b16 %v689
        %v1735 = vunpack.c.h.b16 %v689
        %v1736 = vunpack.c.l.b16 %v690
        %v1737 = vunpack.c.h.b16 %v690
        %v1738 = vunpack.c.l.b16 %v691
        %v1739 = vunpack.c.h.b16 %v691
        %v1740 = vunpack.c.l.b16 %v692
        %v1741 = vunpack.c.h.b16 %v692
        %v1742 = vunpack.c.l.b16 %v693
        %v1743 = vunpack.c.h.b16 %v693
        %v1744 = vunpack.c.l.b16 %v694
        %v1745 = vunpack.c.h.b16 %v694
        %v1746 = vunpack.c.l.b16 %v695
        %v1747 = vunpack.c.h.b16 %v695
        %v1748 = vunpack.c.l.b16 %v696
        %v1749 = vunpack.c.h.b16 %v696
        %v1750 = vunpack.c.l.b16 %v697
        %v1751 = vunpack.c.h.b16 %v697
        %v1752 = vunpack.c.l.b16 %v698
        %v1753 = vunpack.c.h.b16 %v698
        %v1754 = vunpack.c.l.b16 %v699
        %v1755 = vunpack.c.h.b16 %v699
        %v1756 = vunpack.c.l.b16 %v700
        %v1757 = vunpack.c.h.b16 %v700
        %v1758 = vunpack.c.l.b16 %v701
        %v1759 = vunpack.c.h.b16 %v701
        %v1760 = vunpack.c.l.b16 %v702
        %v1761 = vunpack.c.h.b16 %v702
        %v1762 = vunpack.c.l.b16 %v703
        %v1763 = vunpack.c.h.b16 %v703
        %v1764 = vunpack.c.l.b16 %v704
        %v1765 = vunpack.c.h.b16 %v704
        %v1766 = vunpack.c.l.b16 %v705
        %v1767 = vunpack.c.h.b16 %v705
        %v1768 = vunpack.c.l.b16 %v706
        %v1769 = vunpack.c.h.b16 %v706
        %v1770 = vunpack.c.l.b16 %v707
        %v1771 = vunpack.c.h.b16 %v707
        %v1772 = vunpack.c.l.b16 %v708
        %v1773 = vunpack.c.h.b16 %v708
        %v1774 = vunpack.c.l.b16 %v709
        %v1775 = vunpack.c.h.b16 %v709
        %v1776 = vunpack.c.l.b16 %v710
        %v1777 = vunpack.c.h.b16 %v710
        %v1778 = vunpack.c.l.b16 %v711
        %v1779 = vunpack.c.h.b16 %v711
        %v1780 = vunpack.c.l.b16 %v712
        %v1781 = vunpack.c.h.b16 %v712
        %v1782 = vunpack.c.l.b16 %v713
        %v1783 = vunpack.c.h.b16 %v713
        %v1784 = vunpack.c.l.b16 %v714
        %v1785 = vunpack.c.h.b16 %v714
        %v1786 = vunpack.c.l.b16 %v715
        %v1787 = vunpack.c.h.b16 %v715
        %v1788 = vunpack.c.l.b16 %v716
        %v1789 = vunpack.c.h.b16 %v716
        %v1790 = vunpack.c.l.b16 %v717
        %v1791 = vunpack.c.h.b16 %v717
        %v1792 = vunpack.c.l.b16 %v718
        %v1793 = vunpack.c.h.b16 %v718
        %v1794 = vunpack.c.l.b16 %v719
        %v1795 = vunpack.c.h.b16 %v719
        %v1796 = vunpack.c.l.b16 %v720
        %v1797 = vunpack.c.h.b16 %v720
        %v1798 = vunpack.c.l.b16 %v721
        %v1799 = vunpack.c.h.b16 %v721
        %v1800 = vunpack.c.l.b16 %v722
        %v1801 = vunpack.c.h.b16 %v722
        %v1802 = vunpack.c.l.b16 %v723
        %v1803 = vunpack.c.h.b16 %v723
        %v1804 = vunpack.c.l.b16 %v724
        %v1805 = vunpack.c.h.b16 %v724
        %v1806 = vunpack.c.l.b16 %v725
        %v1807 = vunpack.c.h.b16 %v725
        %v1808 = vunpack.c.l.b16 %v726
        %v1809 = vunpack.c.h.b16 %v726
        %v1810 = vunpack.c.l.b16 %v727
        %v1811 = vunpack.c.h.b16 %v727
        %v1812 = vunpack.c.l.b16 %v728
        %v1813 = vunpack.c.h.b16 %v728
        %v1814 = vunpack.c.l.b16 %v729
        %v1815 = vunpack.c.h.b16 %v729
        %v1816 = vunpack.c.l.b16 %v730
        %v1817 = vunpack.c.h.b16 %v730
        %v1818 = vunpack.c.l.b16 %v731
        %v1819 = vunpack.c.h.b16 %v731
        %v1820 = vunpack.c.l.b16 %v732
        %v1821 = vunpack.c.h.b16 %v732
        %v1822 = vunpack.c.l.b16 %v733
        %v1823 = vunpack.c.h.b16 %v733
        %v1824 = vunpack.c.l.b16 %v734
        %v1825 = vunpack.c.h.b16 %v734
        %v1826 = vunpack.c.l.b16 %v735
        %v1827 = vunpack.c.h.b16 %v735
        %v1828 = vunpack.c.l.b16 %v736
        %v1829 = vunpack.c.h.b16 %v736
        %v1830 = vunpack.c.l.b16 %v737
        %v1831 = vunpack.c.h.b16 %v737
        %v1832 = vunpack.c.l.b16 %v738
        %v1833 = vunpack.c.h.b16 %v738
        %v1834 = vunpack.c.l.b16 %v739
        %v1835 = vunpack.c.h.b16 %v739
        %v1836 = vunpack.c.l.b16 %v740
        %v1837 = vunpack.c.h.b16 %v740
        %v1838 = vunpack.c.l.b16 %v741
        %v1839 = vunpack.c.h.b16 %v741
        %v1840 = vunpack.c.l.b16 %v742
        %v1841 = vunpack.c.h.b16 %v742
        %v1842 = vunpack.c.l.b16 %v743
        %v1843 = vunpack.c.h.b16 %v743
        %v1844 = vunpack.c.l.b16 %v744
        %v1845 = vunpack.c.h.b16 %v744
        %v1846 = vunpack.c.l.b16 %v745
        %v1847 = vunpack.c.h.b16 %v745
        %v1848 = vunpack.c.l.b16 %v746
        %v1849 = vunpack.c.h.b16 %v746
        %v1850 = vunpack.c.l.b16 %v747
        %v1851 = vunpack.c.h.b16 %v747
        %v1852 = vunpack.c.l.b16 %v748
        %v1853 = vunpack.c.h.b16 %v748
        %v1854 = vunpack.c.l.b16 %v749
        %v1855 = vunpack.c.h.b16 %v749
        %v1856 = vunpack.c.l.b16 %v750
        %v1857 = vunpack.c.h.b16 %v750
        %v1858 = vunpack.c.l.b16 %v751
        %v1859 = vunpack.c.h.b16 %v751
        %v1860 = vunpack.c.l.b16 %v752
        %v1861 = vunpack.c.h.b16 %v752
        %v1862 = vunpack.c.l.b16 %v753
        %v1863 = vunpack.c.h.b16 %v753
        %v1864 = vunpack.c.l.b16 %v754
        %v1865 = vunpack.c.h.b16 %v754
        %v1866 = vunpack.c.l.b16 %v755
        %v1867 = vunpack.c.h.b16 %v755
        %v1868 = vunpack.c.l.b16 %v756
        %v1869 = vunpack.c.h.b16 %v756
        %v1870 = vunpack.c.l.b16 %v757
        %v1871 = vunpack.c.h.b16 %v757
        %v1872 = vunpack.c.l.b16 %v758
        %v1873 = vunpack.c.h.b16 %v758
        %v1874 = vunpack.c.l.b16 %v759
        %v1875 = vunpack.c.h.b16 %v759
        %v1876 = vunpack.c.l.b16 %v760
        %v1877 = vunpack.c.h.b16 %v760
        %v1878 = vunpack.c.l.b16 %v761
        %v1879 = vunpack.c.h.b16 %v761
        %v1880 = vunpack.c.l.b16 %v762
        %v1881 = vunpack.c.h.b16 %v762
        %v1882 = vunpack.c.l.b16 %v763
        %v1883 = vunpack.c.h.b16 %v763
        %v1884 = vunpack.c.l.b16 %v764
        %v1885 = vunpack.c.h.b16 %v764
        %v1886 = vunpack.c.l.b16 %v765
        %v1887 = vunpack.c.h.b16 %v765
        %v1888 = vunpack.c.l.b16 %v766
        %v1889 = vunpack.c.h.b16 %v766
        %v1890 = vunpack.c.l.b16 %v767
        %v1891 = vunpack.c.h.b16 %v767
        %v1892 = vunpack.c.l.b16 %v768
        %v1893 = vunpack.c.h.b16 %v768
        %v1894 = vunpack.c.l.b16 %v769
        %v1895 = vunpack.c.h.b16 %v769
        %v1896 = vunpack.c.l.b16 %v770
        %v1897 = vunpack.c.h.b16 %v770
        %v1898 = vunpack.c.l.b16 %v771
        %v1899 = vunpack.c.h.b16 %v771
        %v1900 = vunpack.c.l.b16 %v772
        %v1901 = vunpack.c.h.b16 %v772
        %v1902 = vunpack.c.l.b16 %v773
        %v1903 = vunpack.c.h.b16 %v773
        %v1904 = vunpack.c.l.b16 %v774
        %v1905 = vunpack.c.h.b16 %v774
        %v1906 = vunpack.c.l.b16 %v775
        %v1907 = vunpack.c.h.b16 %v775
        %v1908 = vunpack.c.l.b16 %v776
        %v1909 = vunpack.c.h.b16 %v776
        %v1910 = vunpack.c.l.b16 %v777
        %v1911 = vunpack.c.h.b16 %v777
        %v1912 = vunpack.c.l.b16 %v778
        %v1913 = vunpack.c.h.b16 %v778
        %v1914 = vunpack.c.l.b16 %v779
        %v1915 = vunpack.c.h.b16 %v779
        %v1916 = vunpack.c.l.b16 %v780
        %v1917 = vunpack.c.h.b16 %v780
        %v1918 = vunpack.c.l.b16 %v781
        %v1919 = vunpack.c.h.b16 %v781
        %v1920 = vunpack.c.l.b16 %v782
        %v1921 = vunpack.c.h.b16 %v782
        %v1922 = vunpack.c.l.b16 %v783
        %v1923 = vunpack.c.h.b16 %v783
        %v1924 = vunpack.c.l.b16 %v784
        %v1925 = vunpack.c.h.b16 %v784
        %v1926 = vunpack.c.l.b16 %v785
        %v1927 = vunpack.c.h.b16 %v785
        %v1928 = vunpack.c.l.b16 %v786
        %v1929 = vunpack.c.h.b16 %v786
        %v1930 = vunpack.c.l.b16 %v787
        %v1931 = vunpack.c.h.b16 %v787
        %v1932 = vunpack.c.l.b16 %v788
        %v1933 = vunpack.c.h.b16 %v788
        %v1934 = vunpack.c.l.b16 %v789
        %v1935 = vunpack.c.h.b16 %v789
        %v1936 = vunpack.c.l.b16 %v790
        %v1937 = vunpack.c.h.b16 %v790
        %v1938 = vunpack.c.l.b16 %v791
        %v1939 = vunpack.c.h.b16 %v791
        %v1940 = vunpack.c.l.b16 %v792
        %v1941 = vunpack.c.h.b16 %v792
        %v1942 = vunpack.c.l.b16 %v793
        %v1943 = vunpack.c.h.b16 %v793
        %v1944 = vunpack.c.l.b16 %v794
        %v1945 = vunpack.c.h.b16 %v794
        %v1946 = vunpack.c.l.b16 %v795
        %v1947 = vunpack.c.h.b16 %v795
        %v1948 = vunpack.c.l.b16 %v796
        %v1949 = vunpack.c.h.b16 %v796
        %v1950 = vunpack.c.l.b16 %v797
        %v1951 = vunpack.c.h.b16 %v797
        %v1952 = vunpack.c.l.b16 %v798
        %v1953 = vunpack.c.h.b16 %v798
        %v1954 = vunpack.c.l.b16 %v799
        %v1955 = vunpack.c.h.b16 %v799
        %v1956 = vunpack.c.l.b16 %v800
        %v1957 = vunpack.c.h.b16 %v800
        %v1958 = vunpack.c.l.b16 %v801
        %v1959 = vunpack.c.h.b16 %v801
        %v1960 = vunpack.c.l.b16 %v802
        %v1961 = vunpack.c.h.b16 %v802
        %v1962 = vunpack.c.l.b16 %v803
        %v1963 = vunpack.c.h.b16 %v803
        %v1964 = vunpack.c.l.b16 %v804
        %v1965 = vunpack.c.h.b16 %v804
        %v1966 = vunpack.c.l.b16 %v805
        %v1967 = vunpack.c.h.b16 %v805
        %v1968 = vunpack.c.l.b16 %v806
        %v1969 = vunpack.c.h.b16 %v806
        %v1970 = vunpack.c.l.b16 %v807
        %v1971 = vunpack.c.h.b16 %v807
        %v1972 = vunpack.c.l.b16 %v808
        %v1973 = vunpack.c.h.b16 %v808
        %v1974 = vunpack.c.l.b16 %v809
        %v1975 = vunpack.c.h.b16 %v809
        %v1976 = vunpack.c.l.b16 %v810
        %v1977 = vunpack.c.h.b16 %v810
        %v1978 = vunpack.c.l.b16 %v811
        %v1979 = vunpack.c.h.b16 %v811
        %v1980 = vunpack.c.l.b16 %v812
        %v1981 = vunpack.c.h.b16 %v812
        %v1982 = vunpack.c.l.b16 %v813
        %v1983 = vunpack.c.h.b16 %v813
        %v1984 = vunpack.c.l.b16 %v814
        %v1985 = vunpack.c.h.b16 %v814
        %v1986 = vunpack.c.l.b16 %v815
        %v1987 = vunpack.c.h.b16 %v815
        %v1988 = vunpack.c.l.b16 %v816
        %v1989 = vunpack.c.h.b16 %v816
        %v1990 = vunpack.c.l.b16 %v817
        %v1991 = vunpack.c.h.b16 %v817
        %v1992 = vunpack.c.l.b16 %v818
        %v1993 = vunpack.c.h.b16 %v818
        %v1994 = vunpack.c.l.b16 %v819
        %v1995 = vunpack.c.h.b16 %v819
        %v1996 = vunpack.c.l.b16 %v820
        %v1997 = vunpack.c.h.b16 %v820
        %v1998 = vunpack.c.l.b16 %v821
        %v1999 = vunpack.c.h.b16 %v821
        %v2000 = vunpack.c.l.b16 %v822
        %v2001 = vunpack.c.h.b16 %v822
        %v2002 = vunpack.c.l.b16 %v823
        %v2003 = vunpack.c.h.b16 %v823
        %v2004 = vunpack.c.l.b16 %v824
        %v2005 = vunpack.c.h.b16 %v824
        %v2006 = vunpack.c.l.b16 %v825
        %v2007 = vunpack.c.h.b16 %v825
        %v2008 = vunpack.c.l.b16 %v826
        %v2009 = vunpack.c.h.b16 %v826
        %v2010 = vunpack.c.l.b16 %v827
        %v2011 = vunpack.c.h.b16 %v827
        %v2012 = vunpack.c.l.b16 %v828
        %v2013 = vunpack.c.h.b16 %v828
        %v2014 = vunpack.c.l.b16 %v829
        %v2015 = vunpack.c.h.b16 %v829
        %v2016 = vunpack.c.l.b16 %v830
        %v2017 = vunpack.c.h.b16 %v830
        %v2018 = vunpack.c.l.b16 %v831
        %v2019 = vunpack.c.h.b16 %v831
        %v2020 = vunpack.c.l.b16 %v832
        %v2021 = vunpack.c.h.b16 %v832
        %v2022 = vunpack.c.l.b16 %v833
        %v2023 = vunpack.c.h.b16 %v833
        %v2024 = vunpack.c.l.b16 %v834
        %v2025 = vunpack.c.h.b16 %v834
        %v2026 = vunpack.c.l.b16 %v835
        %v2027 = vunpack.c.h.b16 %v835
        %v2028 = vunpack.c.l.b16 %v836
        %v2029 = vunpack.c.h.b16 %v836
        %v2030 = vunpack.c.l.b16 %v837
        %v2031 = vunpack.c.h.b16 %v837
        %v2032 = vunpack.c.l.b16 %v838
        %v2033 = vunpack.c.h.b16 %v838
        %v2034 = vunpack.c.l.b16 %v839
        %v2035 = vunpack.c.h.b16 %v839
        %v2036 = vunpack.c.l.b16 %v840
        %v2037 = vunpack.c.h.b16 %v840
        %v2038 = vunpack.c.l.b16 %v841
        %v2039 = vunpack.c.h.b16 %v841
        %v2040 = vunpack.c.l.b16 %v842
        %v2041 = vunpack.c.h.b16 %v842
        %v2042 = vunpack.c.l.b16 %v843
        %v2043 = vunpack.c.h.b16 %v843
        %v2044 = vunpack.c.l.b16 %v844
        %v2045 = vunpack.c.h.b16 %v844
        %v2046 = vunpack.c.l.b16 %v845
        %v2047 = vunpack.c.h.b16 %v845
        %v2048 = vunpack.c.l.b16 %v846
        %v2049 = vunpack.c.h.b16 %v846
        %v2050 = vunpack.c.l.b16 %v847
        %v2051 = vunpack.c.h.b16 %v847
        %v2052 = vunpack.c.l.b16 %v848
        %v2053 = vunpack.c.h.b16 %v848
        %v2054 = vunpack.c.l.b16 %v849
        %v2055 = vunpack.c.h.b16 %v849
        %v2056 = vunpack.c.l.b16 %v850
        %v2057 = vunpack.c.h.b16 %v850
        %v2058 = vunpack.c.l.b16 %v851
        %v2059 = vunpack.c.h.b16 %v851
        %v2060 = vunpack.c.l.b16 %v852
        %v2061 = vunpack.c.h.b16 %v852
        %v2062 = vunpack.c.l.b16 %v853
        %v2063 = vunpack.c.h.b16 %v853
        %v2064 = vunpack.c.l.b16 %v854
        %v2065 = vunpack.c.h.b16 %v854
        %v2066 = vunpack.c.l.b16 %v855
        %v2067 = vunpack.c.h.b16 %v855
        %v2068 = vunpack.c.l.b16 %v856
        %v2069 = vunpack.c.h.b16 %v856
        %v2070 = vunpack.c.l.b16 %v857
        %v2071 = vunpack.c.h.b16 %v857
        %v2072 = vunpack.c.l.b16 %v858
        %v2073 = vunpack.c.h.b16 %v858
        %v2074 = vunpack.c.l.b16 %v859
        %v2075 = vunpack.c.h.b16 %v859
        %v2076 = vunpack.c.l.b16 %v860
        %v2077 = vunpack.c.h.b16 %v860
        %v2078 = vunpack.c.l.b16 %v861
        %v2079 = vunpack.c.h.b16 %v861
        %v2080 = vunpack.c.l.b16 %v862
        %v2081 = vunpack.c.h.b16 %v862
        %v2082 = vunpack.c.l.b16 %v863
        %v2083 = vunpack.c.h.b16 %v863
        %v2084 = vunpack.c.l.b16 %v864
        %v2085 = vunpack.c.h.b16 %v864
        %v2086 = vunpack.c.l.b16 %v865
        %v2087 = vunpack.c.h.b16 %v865
        %v2088 = vunpack.c.l.b16 %v866
        %v2089 = vunpack.c.h.b16 %v866
        %v2090 = vunpack.c.l.b16 %v867
        %v2091 = vunpack.c.h.b16 %v867
        %v2092 = vunpack.c.l.b16 %v868
        %v2093 = vunpack.c.h.b16 %v868
        %v2094 = vunpack.c.l.b16 %v869
        %v2095 = vunpack.c.h.b16 %v869
        %v2096 = vunpack.c.l.b16 %v870
        %v2097 = vunpack.c.h.b16 %v870
        %v2098 = vunpack.c.l.b16 %v871
        %v2099 = vunpack.c.h.b16 %v871
        %v2100 = vunpack.c.l.b16 %v872
        %v2101 = vunpack.c.h.b16 %v872
        %v2102 = vunpack.c.l.b16 %v873
        %v2103 = vunpack.c.h.b16 %v873
        %v2104 = vunpack.c.l.b16 %v874
        %v2105 = vunpack.c.h.b16 %v874
        %v2106 = vunpack.c.l.b16 %v875
        %v2107 = vunpack.c.h.b16 %v875
        %v2108 = vunpack.c.l.b16 %v876
        %v2109 = vunpack.c.h.b16 %v876
        %v2110 = vunpack.c.l.b16 %v877
        %v2111 = vunpack.c.h.b16 %v877
        %v2112 = vunpack.c.l.b16 %v878
        %v2113 = vunpack.c.h.b16 %v878
        %v2114 = vunpack.c.l.b16 %v879
        %v2115 = vunpack.c.h.b16 %v879
        %v2116 = vunpack.c.l.b16 %v880
        %v2117 = vunpack.c.h.b16 %v880
        %v2118 = vunpack.c.l.b16 %v881
        %v2119 = vunpack.c.h.b16 %v881
        %v2120 = vunpack.c.l.b16 %v882
        %v2121 = vunpack.c.h.b16 %v882
        %v2122 = vunpack.c.l.b16 %v883
        %v2123 = vunpack.c.h.b16 %v883
        %v2124 = vunpack.c.l.b16 %v884
        %v2125 = vunpack.c.h.b16 %v884
        %v2126 = vunpack.c.l.b16 %v885
        %v2127 = vunpack.c.h.b16 %v885
        %v2128 = vunpack.c.l.b16 %v886
        %v2129 = vunpack.c.h.b16 %v886
        %v2130 = vunpack.c.l.b16 %v887
        %v2131 = vunpack.c.h.b16 %v887
        %v2132 = vunpack.c.l.b16 %v888
        %v2133 = vunpack.c.h.b16 %v888
        %v2134 = vunpack.c.l.b16 %v889
        %v2135 = vunpack.c.h.b16 %v889
        %v2136 = vunpack.c.l.b16 %v890
        %v2137 = vunpack.c.h.b16 %v890
        %v2138 = vunpack.c.l.b16 %v891
        %v2139 = vunpack.c.h.b16 %v891
        %v2140 = vunpack.c.l.b16 %v892
        %v2141 = vunpack.c.h.b16 %v892
        %v2142 = vunpack.c.l.b16 %v893
        %v2143 = vunpack.c.h.b16 %v893
        %v2144 = vunpack.c.l.b16 %v894
        %v2145 = vunpack.c.h.b16 %v894
        %v2146 = vunpack.c.l.b16 %v895
        %v2147 = vunpack.c.h.b16 %v895
        %v2148 = vunpack.c.l.b16 %v896
        %v2149 = vunpack.c.h.b16 %v896
        %v2150 = vunpack.c.l.b16 %v897
        %v2151 = vunpack.c.h.b16 %v897
        %v2152 = vunpack.c.l.b16 %v898
        %v2153 = vunpack.c.h.b16 %v898
        %v2154 = vunpack.c.l.b16 %v899
        %v2155 = vunpack.c.h.b16 %v899
        %v2156 = vunpack.c.l.b16 %v900
        %v2157 = vunpack.c.h.b16 %v900
        %v2158 = vunpack.c.l.b16 %v901
        %v2159 = vunpack.c.h.b16 %v901
        %v2160 = vunpack.c.l.b16 %v902
        %v2161 = vunpack.c.h.b16 %v902
        %v2162 = vunpack.c.l.b16 %v903
        %v2163 = vunpack.c.h.b16 %v903
        %v2164 = vunpack.c.l.b16 %v904
        %v2165 = vunpack.c.h.b16 %v904
        %v2166 = vunpack.c.l.b16 %v905
        %v2167 = vunpack.c.h.b16 %v905
        %v2168 = vunpack.c.l.b16 %v906
        %v2169 = vunpack.c.h.b16 %v906
        %v2170 = vunpack.c.l.b16 %v907
        %v2171 = vunpack.c.h.b16 %v907
        %v2172 = vunpack.c.l.b16 %v908
        %v2173 = vunpack.c.h.b16 %v908
        %v2174 = vunpack.c.l.b16 %v909
        %v2175 = vunpack.c.h.b16 %v909
        %v2176 = vunpack.c.l.b16 %v910
        %v2177 = vunpack.c.h.b16 %v910
        %v2178 = vunpack.c.l.b16 %v911
        %v2179 = vunpack.c.h.b16 %v911
        %v2180 = vunpack.c.l.b16 %v912
        %v2181 = vunpack.c.h.b16 %v912
        %v2182 = vunpack.c.l.b16 %v913
        %v2183 = vunpack.c.h.b16 %v913
        %v2184 = vunpack.c.l.b16 %v914
        %v2185 = vunpack.c.h.b16 %v914
        %v2186 = vunpack.c.l.b16 %v915
        %v2187 = vunpack.c.h.b16 %v915
        %v2188 = vunpack.c.l.b16 %v916
        %v2189 = vunpack.c.h.b16 %v916
        %v2190 = vunpack.c.l.b16 %v917
        %v2191 = vunpack.c.h.b16 %v917
        %v2192 = vunpack.c.l.b16 %v918
        %v2193 = vunpack.c.h.b16 %v918
        %v2194 = vunpack.c.l.b16 %v919
        %v2195 = vunpack.c.h.b16 %v919
        %v2196 = vunpack.c.l.b16 %v920
        %v2197 = vunpack.c.h.b16 %v920
        %v2198 = vunpack.c.l.b16 %v921
        %v2199 = vunpack.c.h.b16 %v921
        %v2200 = vunpack.c.l.b16 %v922
        %v2201 = vunpack.c.h.b16 %v922
        %v2202 = vunpack.c.l.b16 %v923
        %v2203 = vunpack.c.h.b16 %v923
        %v2204 = vpack.c.b16 %v1442, %v1436
        %v2205 = vpack.c.b16 %v1443, %v1437
        %v2206 = vpack.c.b16 %v1444, %v1438
        %v2207 = vpack.c.b16 %v1445, %v1439
        %v2208 = vpack.c.b16 %v1446, %v1440
        %v2209 = vpack.c.b16 %v1447, %v1441
        %v2210 = vpack.c.b16 %v1454, %v1448
        %v2211 = vpack.c.b16 %v1455, %v1449
        %v2212 = vpack.c.b16 %v1456, %v1450
        %v2213 = vpack.c.b16 %v1457, %v1451
        %v2214 = vpack.c.b16 %v1458, %v1452
        %v2215 = vpack.c.b16 %v1459, %v1453
        %v2216 = vpack.c.b16 %v1466, %v1460
        %v2217 = vpack.c.b16 %v1467, %v1461
        %v2218 = vpack.c.b16 %v1468, %v1462
        %v2219 = vpack.c.b16 %v1469, %v1463
        %v2220 = vpack.c.b16 %v1470, %v1464
        %v2221 = vpack.c.b16 %v1471, %v1465
        %v2222 = vpack.c.b16 %v1478, %v1472
        %v2223 = vpack.c.b16 %v1479, %v1473
        %v2224 = vpack.c.b16 %v1480, %v1474
        %v2225 = vpack.c.b16 %v1481, %v1475
        %v2226 = vpack.c.b16 %v1482, %v1476
        %v2227 = vpack.c.b16 %v1483, %v1477
        %v2228 = vpack.c.b16 %v1490, %v1484
        %v2229 = vpack.c.b16 %v1491, %v1485
        %v2230 = vpack.c.b16 %v1492, %v1486
        %v2231 = vpack.c.b16 %v1493, %v1487
        %v2232 = vpack.c.b16 %v1494, %v1488
        %v2233 = vpack.c.b16 %v1495, %v1489
        %v2234 = vpack.c.b16 %v1502, %v1496
        %v2235 = vpack.c.b16 %v1503, %v1497
        %v2236 = vpack.c.b16 %v1504, %v1498
        %v2237 = vpack.c.b16 %v1505, %v1499
        %v2238 = vpack.c.b16 %v1506, %v1500
        %v2239 = vpack.c.b16 %v1507, %v1501
        %v2240 = vpack.c.b16 %v1514, %v1508
        %v2241 = vpack.c.b16 %v1515, %v1509
        %v2242 = vpack.c.b16 %v1516, %v1510
        %v2243 = vpack.c.b16 %v1517, %v1511
        %v2244 = vpack.c.b16 %v1518, %v1512
        %v2245 = vpack.c.b16 %v1519, %v1513
        %v2246 = vpack.c.b16 %v1526, %v1520
        %v2247 = vpack.c.b16 %v1527, %v1521
        %v2248 = vpack.c.b16 %v1528, %v1522
        %v2249 = vpack.c.b16 %v1529, %v1523
        %v2250 = vpack.c.b16 %v1530, %v1524
        %v2251 = vpack.c.b16 %v1531, %v1525
        %v2252 = vpack.c.b16 %v1538, %v1532
        %v2253 = vpack.c.b16 %v1539, %v1533
        %v2254 = vpack.c.b16 %v1540, %v1534
        %v2255 = vpack.c.b16 %v1541, %v1535
        %v2256 = vpack.c.b16 %v1542, %v1536
        %v2257 = vpack.c.b16 %v1543, %v1537
        %v2258 = vpack.c.b16 %v1550, %v1544
        %v2259 = vpack.c.b16 %v1551, %v1545
        %v2260 = vpack.c.b16 %v1552, %v1546
        %v2261 = vpack.c.b16 %v1553, %v1547
        %v2262 = vpack.c.b16 %v1554, %v1548
        %v2263 = vpack.c.b16 %v1555, %v1549
        %v2264 = vpack.c.b16 %v1562, %v1556
        %v2265 = vpack.c.b16 %v1563, %v1557
        %v2266 = vpack.c.b16 %v1564, %v1558
        %v2267 = vpack.c.b16 %v1565, %v1559
        %v2268 = vpack.c.b16 %v1566, %v1560
        %v2269 = vpack.c.b16 %v1567, %v1561
        %v2270 = vpack.c.b16 %v1574, %v1568
        %v2271 = vpack.c.b16 %v1575, %v1569
        %v2272 = vpack.c.b16 %v1576, %v1570
        %v2273 = vpack.c.b16 %v1577, %v1571
        %v2274 = vpack.c.b16 %v1578, %v1572
        %v2275 = vpack.c.b16 %v1579, %v1573
        %v2276 = vpack.c.b16 %v1586, %v1580
        %v2277 = vpack.c.b16 %v1587, %v1581
        %v2278 = vpack.c.b16 %v1588, %v1582
        %v2279 = vpack.c.b16 %v1589, %v1583
        %v2280 = vpack.c.b16 %v1590, %v1584
        %v2281 = vpack.c.b16 %v1591, %v1585
        %v2282 = vpack.c.b16 %v1598, %v1592
        %v2283 = vpack.c.b16 %v1599, %v1593
        %v2284 = vpack.c.b16 %v1600, %v1594
        %v2285 = vpack.c.b16 %v1601, %v1595
        %v2286 = vpack.c.b16 %v1602, %v1596
        %v2287 = vpack.c.b16 %v1603, %v1597
        %v2288 = vpack.c.b16 %v1610, %v1604
        %v2289 = vpack.c.b16 %v1611, %v1605
        %v2290 = vpack.c.b16 %v1612, %v1606
        %v2291 = vpack.c.b16 %v1613, %v1607
        %v2292 = vpack.c.b16 %v1614, %v1608
        %v2293 = vpack.c.b16 %v1615, %v1609
        %v2294 = vpack.c.b16 %v1622, %v1616
        %v2295 = vpack.c.b16 %v1623, %v1617
        %v2296 = vpack.c.b16 %v1624, %v1618
        %v2297 = vpack.c.b16 %v1625, %v1619
        %v2298 = vpack.c.b16 %v1626, %v1620
        %v2299 = vpack.c.b16 %v1627, %v1621
        %v2300 = vpack.c.b16 %v1634, %v1628
        %v2301 = vpack.c.b16 %v1635, %v1629
        %v2302 = vpack.c.b16 %v1636, %v1630
        %v2303 = vpack.c.b16 %v1637, %v1631
        %v2304 = vpack.c.b16 %v1638, %v1632
        %v2305 = vpack.c.b16 %v1639, %v1633
        %v2306 = vpack.c.b16 %v1646, %v1640
        %v2307 = vpack.c.b16 %v1647, %v1641
        %v2308 = vpack.c.b16 %v1648, %v1642
        %v2309 = vpack.c.b16 %v1649, %v1643
        %v2310 = vpack.c.b16 %v1650, %v1644
        %v2311 = vpack.c.b16 %v1651, %v1645
        %v2312 = vpack.c.b16 %v1658, %v1652
        %v2313 = vpack.c.b16 %v1659, %v1653
        %v2314 = vpack.c.b16 %v1660, %v1654
        %v2315 = vpack.c.b16 %v1661, %v1655
        %v2316 = vpack.c.b16 %v1662, %v1656
        %v2317 = vpack.c.b16 %v1663, %v1657
        %v2318 = vpack.c.b16 %v1670, %v1664
        %v2319 = vpack.c.b16 %v1671, %v1665
        %v2320 = vpack.c.b16 %v1672, %v1666
        %v2321 = vpack.c.b16 %v1673, %v1667
        %v2322 = vpack.c.b16 %v1674, %v1668
        %v2323 = vpack.c.b16 %v1675, %v1669
        %v2324 = vpack.c.b16 %v1682, %v1676
        %v2325 = vpack.c.b16 %v1683, %v1677
        %v2326 = vpack.c.b16 %v1684, %v1678
        %v2327 = vpack.c.b16 %v1685, %v1679
        %v2328 = vpack.c.b16 %v1686, %v1680
        %v2329 = vpack.c.b16 %v1687, %v1681
        %v2330 = vpack.c.b16 %v1694, %v1688
        %v2331 = vpack.c.b16 %v1695, %v1689
        %v2332 = vpack.c.b16 %v1696, %v1690
        %v2333 = vpack.c.b16 %v1697, %v1691
        %v2334 = vpack.c.b16 %v1698, %v1692
        %v2335 = vpack.c.b16 %v1699, %v1693
        %v2336 = vpack.c.b16 %v1706, %v1700
        %v2337 = vpack.c.b16 %v1707, %v1701
        %v2338 = vpack.c.b16 %v1708, %v1702
        %v2339 = vpack.c.b16 %v1709, %v1703
        %v2340 = vpack.c.b16 %v1710, %v1704
        %v2341 = vpack.c.b16 %v1711, %v1705
        %v2342 = vpack.c.b16 %v1718, %v1712
        %v2343 = vpack.c.b16 %v1719, %v1713
        %v2344 = vpack.c.b16 %v1720, %v1714
        %v2345 = vpack.c.b16 %v1721, %v1715
        %v2346 = vpack.c.b16 %v1722, %v1716
        %v2347 = vpack.c.b16 %v1723, %v1717
        %v2348 = vpack.c.b16 %v1730, %v1724
        %v2349 = vpack.c.b16 %v1731, %v1725
        %v2350 = vpack.c.b16 %v1732, %v1726
        %v2351 = vpack.c.b16 %v1733, %v1727
        %v2352 = vpack.c.b16 %v1734, %v1728
        %v2353 = vpack.c.b16 %v1735, %v1729
        %v2354 = vpack.c.b16 %v1742, %v1736
        %v2355 = vpack.c.b16 %v1743, %v1737
        %v2356 = vpack.c.b16 %v1744, %v1738
        %v2357 = vpack.c.b16 %v1745, %v1739
        %v2358 = vpack.c.b16 %v1746, %v1740
        %v2359 = vpack.c.b16 %v1747, %v1741
        %v2360 = vpack.c.b16 %v1754, %v1748
        %v2361 = vpack.c.b16 %v1755, %v1749
        %v2362 = vpack.c.b16 %v1756, %v1750
        %v2363 = vpack.c.b16 %v1757, %v1751
        %v2364 = vpack.c.b16 %v1758, %v1752
        %v2365 = vpack.c.b16 %v1759, %v1753
        %v2366 = vpack.c.b16 %v1766, %v1760
        %v2367 = vpack.c.b16 %v1767, %v1761
        %v2368 = vpack.c.b16 %v1768, %v1762
        %v2369 = vpack.c.b16 %v1769, %v1763
        %v2370 = vpack.c.b16 %v1770, %v1764
        %v2371 = vpack.c.b16 %v1771, %v1765
        %v2372 = vpack.c.b16 %v1778, %v1772
        %v2373 = vpack.c.b16 %v1779, %v1773
        %v2374 = vpack.c.b16 %v1780, %v1774
        %v2375 = vpack.c.b16 %v1781, %v1775
        %v2376 = vpack.c.b16 %v1782, %v1776
        %v2377 = vpack.c.b16 %v1783, %v1777
        %v2378 = vpack.c.b16 %v1790, %v1784
        %v2379 = vpack.c.b16 %v1791, %v1785
        %v2380 = vpack.c.b16 %v1792, %v1786
        %v2381 = vpack.c.b16 %v1793, %v1787
        %v2382 = vpack.c.b16 %v1794, %v1788
        %v2383 = vpack.c.b16 %v1795, %v1789
        %v2384 = vpack.c.b16 %v1802, %v1796
        %v2385 = vpack.c.b16 %v1803, %v1797
        %v2386 = vpack.c.b16 %v1804, %v1798
        %v2387 = vpack.c.b16 %v1805, %v1799
        %v2388 = vpack.c.b16 %v1806, %v1800
        %v2389 = vpack.c.b16 %v1807, %v1801
        %v2390 = vpack.c.b16 %v1814, %v1808
        %v2391 = vpack.c.b16 %v1815, %v1809
        %v2392 = vpack.c.b16 %v1816, %v1810
        %v2393 = vpack.c.b16 %v1817, %v1811
        %v2394 = vpack.c.b16 %v1818, %v1812
        %v2395 = vpack.c.b16 %v1819, %v1813
        %v2396 = vpack.c.b16 %v1826, %v1820
        %v2397 = vpack.c.b16 %v1827, %v1821
        %v2398 = vpack.c.b16 %v1828, %v1822
        %v2399 = vpack.c.b16 %v1829, %v1823
        %v2400 = vpack.c.b16 %v1830, %v1824
        %v2401 = vpack.c.b16 %v1831, %v1825
        %v2402 = vpack.c.b16 %v1838, %v1832
        %v2403 = vpack.c.b16 %v1839, %v1833
        %v2404 = vpack.c.b16 %v1840, %v1834
        %v2405 = vpack.c.b16 %v1841, %v1835
        %v2406 = vpack.c.b16 %v1842, %v1836
        %v2407 = vpack.c.b16 %v1843, %v1837
        %v2408 = vpack.c.b16 %v1850, %v1844
        %v2409 = vpack.c.b16 %v1851, %v1845
        %v2410 = vpack.c.b16 %v1852, %v1846
        %v2411 = vpack.c.b16 %v1853, %v1847
        %v2412 = vpack.c.b16 %v1854, %v1848
        %v2413 = vpack.c.b16 %v1855, %v1849
        %v2414 = vpack.c.b16 %v1862, %v1856
        %v2415 = vpack.c.b16 %v1863, %v1857
        %v2416 = vpack.c.b16 %v1864, %v1858
        %v2417 = vpack.c.b16 %v1865, %v1859
        %v2418 = vpack.c.b16 %v1866, %v1860
        %v2419 = vpack.c.b16 %v1867, %v1861
        %v2420 = vpack.c.b16 %v1874, %v1868
        %v2421 = vpack.c.b16 %v1875, %v1869
        %v2422 = vpack.c.b16 %v1876, %v1870
        %v2423 = vpack.c.b16 %v1877, %v1871
        %v2424 = vpack.c.b16 %v1878, %v1872
        %v2425 = vpack.c.b16 %v1879, %v1873
        %v2426 = vpack.c.b16 %v1886, %v1880
        %v2427 = vpack.c.b16 %v1887, %v1881
        %v2428 = vpack.c.b16 %v1888, %v1882
        %v2429 = vpack.c.b16 %v1889, %v1883
        %v2430 = vpack.c.b16 %v1890, %v1884
        %v2431 = vpack.c.b16 %v1891, %v1885
        %v2432 = vpack.c.b16 %v1898, %v1892
        %v2433 = vpack.c.b16 %v1899, %v1893
        %v2434 = vpack.c.b16 %v1900, %v1894
        %v2435 = vpack.c.b16 %v1901, %v1895
        %v2436 = vpack.c.b16 %v1902, %v1896
        %v2437 = vpack.c.b16 %v1903, %v1897
        %v2438 = vpack.c.b16 %v1910, %v1904
        %v2439 = vpack.c.b16 %v1911, %v1905
        %v2440 = vpack.c.b16 %v1912, %v1906
        %v2441 = vpack.c.b16 %v1913, %v1907
        %v2442 = vpack.c.b16 %v1914, %v1908
        %v2443 = vpack.c.b16 %v1915, %v1909
        %v2444 = vpack.c.b16 %v1922, %v1916
        %v2445 = vpack.c.b16 %v1923, %v1917
        %v2446 = vpack.c.b16 %v1924, %v1918
        %v2447 = vpack.c.b16 %v1925, %v1919
        %v2448 = vpack.c.b16 %v1926, %v1920
        %v2449 = vpack.c.b16 %v1927, %v1921
        %v2450 = vpack.c.b16 %v1934, %v1928
        %v2451 = vpack.c.b16 %v1935, %v1929
        %v2452 = vpack.c.b16 %v1936, %v1930
        %v2453 = vpack.c.b16 %v1937, %v1931
        %v2454 = vpack.c.b16 %v1938, %v1932
        %v2455 = vpack.c.b16 %v1939, %v1933
        %v2456 = vpack.c.b16 %v1946, %v1940
        %v2457 = vpack.c.b16 %v1947, %v1941
        %v2458 = vpack.c.b16 %v1948, %v1942
        %v2459 = vpack.c.b16 %v1949, %v1943
        %v2460 = vpack.c.b16 %v1950, %v1944
        %v2461 = vpack.c.b16 %v1951, %v1945
        %v2462 = vpack.c.b16 %v1958, %v1952
        %v2463 = vpack.c.b16 %v1959, %v1953
        %v2464 = vpack.c.b16 %v1960, %v1954
        %v2465 = vpack.c.b16 %v1961, %v1955
        %v2466 = vpack.c.b16 %v1962, %v1956
        %v2467 = vpack.c.b16 %v1963, %v1957
        %v2468 = vpack.c.b16 %v1970, %v1964
        %v2469 = vpack.c.b16 %v1971, %v1965
        %v2470 = vpack.c.b16 %v1972, %v1966
        %v2471 = vpack.c.b16 %v1973, %v1967
        %v2472 = vpack.c.b16 %v1974, %v1968
        %v2473 = vpack.c.b16 %v1975, %v1969
        %v2474 = vpack.c.b16 %v1982, %v1976
        %v2475 = vpack.c.b16 %v1983, %v1977
        %v2476 = vpack.c.b16 %v1984, %v1978
        %v2477 = vpack.c.b16 %v1985, %v1979
        %v2478 = vpack.c.b16 %v1986, %v1980
        %v2479 = vpack.c.b16 %v1987, %v1981
        %v2480 = vpack.c.b16 %v1994, %v1988
        %v2481 = vpack.c.b16 %v1995, %v1989
        %v2482 = vpack.c.b16 %v1996, %v1990
        %v2483 = vpack.c.b16 %v1997, %v1991
        %v2484 = vpack.c.b16 %v1998, %v1992
        %v2485 = vpack.c.b16 %v1999, %v1993
        %v2486 = vpack.c.b16 %v2006, %v2000
        %v2487 = vpack.c.b16 %v2007, %v2001
        %v2488 = vpack.c.b16 %v2008, %v2002
        %v2489 = vpack.c.b16 %v2009, %v2003
        %v2490 = vpack.c.b16 %v2010, %v2004
        %v2491 = vpack.c.b16 %v2011, %v2005
        %v2492 = vpack.c.b16 %v2018, %v2012
        %v2493 = vpack.c.b16 %v2019, %v2013
        %v2494 = vpack.c.b16 %v2020, %v2014
        %v2495 = vpack.c.b16 %v2021, %v2015
        %v2496 = vpack.c.b16 %v2022, %v2016
        %v2497 = vpack.c.b16 %v2023, %v2017
        %v2498 = vpack.c.b16 %v2030, %v2024
        %v2499 = vpack.c.b16 %v2031, %v2025
        %v2500 = vpack.c.b16 %v2032, %v2026
        %v2501 = vpack.c.b16 %v2033, %v2027
        %v2502 = vpack.c.b16 %v2034, %v2028
        %v2503 = vpack.c.b16 %v2035, %v2029
        %v2504 = vpack.c.b16 %v2042, %v2036
        %v2505 = vpack.c.b16 %v2043, %v2037
        %v2506 = vpack.c.b16 %v2044, %v2038
        %v2507 = vpack.c.b16 %v2045, %v2039
        %v2508 = vpack.c.b16 %v2046, %v2040
        %v2509 = vpack.c.b16 %v2047, %v2041
        %v2510 = vpack.c.b16 %v2054, %v2048
        %v2511 = vpack.c.b16 %v2055, %v2049
        %v2512 = vpack.c.b16 %v2056, %v2050
        %v2513 = vpack.c.b16 %v2057, %v2051
        %v2514 = vpack.c.b16 %v2058, %v2052
        %v2515 = vpack.c.b16 %v2059, %v2053
        %v2516 = vpack.c.b16 %v2066, %v2060
        %v2517 = vpack.c.b16 %v2067, %v2061
        %v2518 = vpack.c.b16 %v2068, %v2062
        %v2519 = vpack.c.b16 %v2069, %v2063
        %v2520 = vpack.c.b16 %v2070, %v2064
        %v2521 = vpack.c.b16 %v2071, %v2065
        %v2522 = vpack.c.b16 %v2078, %v2072
        %v2523 = vpack.c.b16 %v2079, %v2073
        %v2524 = vpack.c.b16 %v2080, %v2074
        %v2525 = vpack.c.b16 %v2081, %v2075
        %v2526 = vpack.c.b16 %v2082, %v2076
        %v2527 = vpack.c.b16 %v2083, %v2077
        %v2528 = vpack.c.b16 %v2090, %v2084
        %v2529 = vpack.c.b16 %v2091, %v2085
        %v2530 = vpack.c.b16 %v2092, %v2086
        %v2531 = vpack.c.b16 %v2093, %v2087
        %v2532 = vpack.c.b16 %v2094, %v2088
        %v2533 = vpack.c.b16 %v2095, %v2089
        %v2534 = vpack.c.b16 %v2102, %v2096
        %v2535 = vpack.c.b16 %v2103, %v2097
        %v2536 = vpack.c.b16 %v2104, %v2098
        %v2537 = vpack.c.b16 %v2105, %v2099
        %v2538 = vpack.c.b16 %v2106, %v2100
        %v2539 = vpack.c.b16 %v2107, %v2101
        %v2540 = vpack.c.b16 %v2114, %v2108
        %v2541 = vpack.c.b16 %v2115, %v2109
        %v2542 = vpack.c.b16 %v2116, %v2110
        %v2543 = vpack.c.b16 %v2117, %v2111
        %v2544 = vpack.c.b16 %v2118, %v2112
        %v2545 = vpack.c.b16 %v2119, %v2113
        %v2546 = vpack.c.b16 %v2126, %v2120
        %v2547 = vpack.c.b16 %v2127, %v2121
        %v2548 = vpack.c.b16 %v2128, %v2122
        %v2549 = vpack.c.b16 %v2129, %v2123
        %v2550 = vpack.c.b16 %v2130, %v2124
        %v2551 = vpack.c.b16 %v2131, %v2125
        %v2552 = vpack.c.b16 %v2138, %v2132
        %v2553 = vpack.c.b16 %v2139, %v2133
        %v2554 = vpack.c.b16 %v2140, %v2134
        %v2555 = vpack.c.b16 %v2141, %v2135
        %v2556 = vpack.c.b16 %v2142, %v2136
        %v2557 = vpack.c.b16 %v2143, %v2137
        %v2558 = vpack.c.b16 %v2150, %v2144
        %v2559 = vpack.c.b16 %v2151, %v2145
        %v2560 = vpack.c.b16 %v2152, %v2146
        %v2561 = vpack.c.b16 %v2153, %v2147
        %v2562 = vpack.c.b16 %v2154, %v2148
        %v2563 = vpack.c.b16 %v2155, %v2149
        %v2564 = vpack.c.b16 %v2162, %v2156
        %v2565 = vpack.c.b16 %v2163, %v2157
        %v2566 = vpack.c.b16 %v2164, %v2158
        %v2567 = vpack.c.b16 %v2165, %v2159
        %v2568 = vpack.c.b16 %v2166, %v2160
        %v2569 = vpack.c.b16 %v2167, %v2161
        %v2570 = vpack.c.b16 %v2174, %v2168
        %v2571 = vpack.c.b16 %v2175, %v2169
        %v2572 = vpack.c.b16 %v2176, %v2170
        %v2573 = vpack.c.b16 %v2177, %v2171
        %v2574 = vpack.c.b16 %v2178, %v2172
        %v2575 = vpack.c.b16 %v2179, %v2173
        %v2576 = vpack.c.b16 %v2186, %v2180
        %v2577 = vpack.c.b16 %v2187, %v2181
        %v2578 = vpack.c.b16 %v2188, %v2182
        %v2579 = vpack.c.b16 %v2189, %v2183
        %v2580 = vpack.c.b16 %v2190, %v2184
        %v2581 = vpack.c.b16 %v2191, %v2185
        %v2582 = vpack.c.b16 %v2198, %v2192
        %v2583 = vpack.c.b16 %v2199, %v2193
        %v2584 = vpack.c.b16 %v2200, %v2194
        %v2585 = vpack.c.b16 %v2201, %v2195
        %v2586 = vpack.c.b16 %v2202, %v2196
        %v2587 = vpack.c.b16 %v2203, %v2197
        %2972 = vmatprep.subr.bf16.mxu0 %v2247
        %2973 = vmatpush1.bf16.msra.mxu0 %v2246
        %2974 = vmatprep.subr.bf16.mxu0 %v2241
        %2975 = vmatpush1.bf16.msra.mxu0 %v2240
        %2976 = vmatprep.subr.bf16.mxu0 %v2235
        %2977 = vmatpush1.bf16.msra.mxu0 %v2234
        %2978 = vmatprep.subr.bf16.mxu0 %v2229
        %2979 = vmatpush1.bf16.msra.mxu0 %v2228
        %2980 = vmatprep.subr.bf16.mxu0 %v2223
        %2981 = vmatpush1.bf16.msra.mxu0 %v2222
        %2982 = vmatprep.subr.bf16.mxu0 %v2217
        %2983 = vmatpush1.bf16.msra.mxu0 %v2216
        %2984 = vmatprep.subr.bf16.mxu0 %v2211
        %2985 = vmatpush1.bf16.msra.mxu0 %v2210
        %2986 = vmatprep.subr.bf16.mxu0 %v2205
        %2987 = vmatpush1.bf16.msra.mxu0 %v2204
        %2988 = vmatprep.subr.bf16.mxu0 %v2295
        %2989 = vmatpush2.bf16.msra.mxu0 %v2294
        %2990 = vmatprep.subr.bf16.mxu0 %v2289
        %2991 = vmatpush2.bf16.msra.mxu0 %v2288
        %2992 = vmatprep.subr.bf16.mxu0 %v2283
        %2993 = vmatpush2.bf16.msra.mxu0 %v2282
        %2994 = vmatprep.subr.bf16.mxu0 %v2277
        %2995 = vmatpush2.bf16.msra.mxu0 %v2276
        %2996 = vmatprep.subr.bf16.mxu0 %v2271
        %2997 = vmatpush2.bf16.msra.mxu0 %v2270
        %2998 = vmatprep.subr.bf16.mxu0 %v2265
        %2999 = vmatpush2.bf16.msra.mxu0 %v2264
        %3000 = vmatprep.subr.bf16.mxu0 %v2259
        %3001 = vmatpush2.bf16.msra.mxu0 %v2258
        %3002 = vmatprep.subr.bf16.mxu0 %v2253
        %3003 = vmatpush2.bf16.msra.mxu0 %v2252
        %3004 = vmatprep.mubr.bf16.mxu0 %v461
        %3005 = vmatmul.mubr.bf16.gmra.mxu0 %v460
        %v3006 = vpop.f32.mrf.mxu0
        %v3007 = vadd.f32 %v1025, %v3006
        %v3008 = vpop.f32.mrf.mxu0
        %v3009 = vadd.f32 %v1029, %v3008
        %v3010 = vpop.f32.mrf.mxu0
        %v3011 = vadd.f32 %v1025, %v3010
        %v3012 = vpop.f32.mrf.mxu0
        %v3013 = vadd.f32 %v1029, %v3012
        %3014 = vmatprep.mubr.bf16.mxu0 %v469
        %3015 = vmatmul.mubr.bf16.gmra.mxu0 %v468
        %v3016 = vpop.f32.mrf.mxu0
        %v3017 = vadd.f32 %v1025, %v3016
        %v3018 = vpop.f32.mrf.mxu0
        %v3019 = vadd.f32 %v1029, %v3018
        %v3020 = vpop.f32.mrf.mxu0
        %v3021 = vadd.f32 %v1025, %v3020
        %v3022 = vpop.f32.mrf.mxu0
        %v3023 = vadd.f32 %v1029, %v3022
        %3024 = vmatprep.mubr.bf16.mxu0 %v477
        %3025 = vmatmul.mubr.bf16.gmra.mxu0 %v476
        %v3026 = vpop.f32.mrf.mxu0
        %v3027 = vadd.f32 %v1025, %v3026
        %v3028 = vpop.f32.mrf.mxu0
        %v3029 = vadd.f32 %v1029, %v3028
        %v3030 = vpop.f32.mrf.mxu0
        %v3031 = vadd.f32 %v1025, %v3030
        %v3032 = vpop.f32.mrf.mxu0
        %v3033 = vadd.f32 %v1029, %v3032
        %3034 = vmatprep.mubr.bf16.mxu0 %v485
        %3035 = vmatmul.mubr.bf16.gmra.mxu0 %v484
        %v3036 = vpop.f32.mrf.mxu0
        %v3037 = vadd.f32 %v1025, %v3036
        %v3038 = vpop.f32.mrf.mxu0
        %v3039 = vadd.f32 %v1029, %v3038
        %v3040 = vpop.f32.mrf.mxu0
        %v3041 = vadd.f32 %v1025, %v3040
        %v3042 = vpop.f32.mrf.mxu0
        %v3043 = vadd.f32 %v1029, %v3042
        %3044 = vmatprep.mubr.bf16.mxu0 %v493
        %3045 = vmatmul.mubr.bf16.gmra.mxu0 %v492
        %v3046 = vpop.f32.mrf.mxu0
        %v3047 = vadd.f32 %v1025, %v3046
        %v3048 = vpop.f32.mrf.mxu0
        %v3049 = vadd.f32 %v1029, %v3048
        %v3050 = vpop.f32.mrf.mxu0
        %v3051 = vadd.f32 %v1025, %v3050
        %v3052 = vpop.f32.mrf.mxu0
        %v3053 = vadd.f32 %v1029, %v3052
        %3054 = vmatprep.mubr.bf16.mxu0 %v501
        %3055 = vmatmul.mubr.bf16.gmra.mxu0 %v500
        %v3056 = vpop.f32.mrf.mxu0
        %v3057 = vadd.f32 %v1025, %v3056
        %v3058 = vpop.f32.mrf.mxu0
        %v3059 = vadd.f32 %v1029, %v3058
        %v3060 = vpop.f32.mrf.mxu0
        %v3061 = vadd.f32 %v1025, %v3060
        %v3062 = vpop.f32.mrf.mxu0
        %v3063 = vadd.f32 %v1029, %v3062
        %3064 = vmatprep.mubr.bf16.mxu0 %v509
        %3065 = vmatmul.mubr.bf16.gmra.mxu0 %v508
        %v3066 = vpop.f32.mrf.mxu0
        %v3067 = vadd.f32 %v1025, %v3066
        %v3068 = vpop.f32.mrf.mxu0
        %v3069 = vadd.f32 %v1029, %v3068
        %v3070 = vpop.f32.mrf.mxu0
        %v3071 = vadd.f32 %v1025, %v3070
        %v3072 = vpop.f32.mrf.mxu0
        %v3073 = vadd.f32 %v1029, %v3072
        %3074 = vmatprep.mubr.bf16.mxu0 %v517
        %3075 = vmatmul.mubr.bf16.gmra.mxu0 %v516
        %v3076 = vpop.f32.mrf.mxu0
        %v3077 = vadd.f32 %v1025, %v3076
        %v3078 = vpop.f32.mrf.mxu0
        %v3079 = vadd.f32 %v1029, %v3078
        %v3080 = vpop.f32.mrf.mxu0
        %v3081 = vadd.f32 %v1025, %v3080
        %v3082 = vpop.f32.mrf.mxu0
        %v3083 = vadd.f32 %v1029, %v3082
        %3084 = vmatprep.mubr.bf16.mxu0 %v525
        %3085 = vmatmul.mubr.bf16.gmra.mxu0 %v524
        %v3086 = vpop.f32.mrf.mxu0
        %v3087 = vadd.f32 %v1025, %v3086
        %v3088 = vpop.f32.mrf.mxu0
        %v3089 = vadd.f32 %v1029, %v3088
        %v3090 = vpop.f32.mrf.mxu0
        %v3091 = vadd.f32 %v1025, %v3090
        %v3092 = vpop.f32.mrf.mxu0
        %v3093 = vadd.f32 %v1029, %v3092
        %3094 = vmatprep.mubr.bf16.mxu0 %v533
        %3095 = vmatmul.mubr.bf16.gmra.mxu0 %v532
        %v3096 = vpop.f32.mrf.mxu0
        %v3097 = vadd.f32 %v1025, %v3096
        %v3098 = vpop.f32.mrf.mxu0
        %v3099 = vadd.f32 %v1029, %v3098
        %v3100 = vpop.f32.mrf.mxu0
        %v3101 = vadd.f32 %v1025, %v3100
        %v3102 = vpop.f32.mrf.mxu0
        %v3103 = vadd.f32 %v1029, %v3102
        %3104 = vdwg.mxu0
        %3105 = vmatprep.subr.bf16.mxu0 %v2343
        %3106 = vmatpush1.bf16.msra.mxu0 %v2342
        %3107 = vmatprep.subr.bf16.mxu0 %v2337
        %3108 = vmatpush1.bf16.msra.mxu0 %v2336
        %3109 = vmatprep.subr.bf16.mxu0 %v2331
        %3110 = vmatpush1.bf16.msra.mxu0 %v2330
        %3111 = vmatprep.subr.bf16.mxu0 %v2325
        %3112 = vmatpush1.bf16.msra.mxu0 %v2324
        %3113 = vmatprep.subr.bf16.mxu0 %v2319
        %3114 = vmatpush1.bf16.msra.mxu0 %v2318
        %3115 = vmatprep.subr.bf16.mxu0 %v2313
        %3116 = vmatpush1.bf16.msra.mxu0 %v2312
        %3117 = vmatprep.subr.bf16.mxu0 %v2307
        %3118 = vmatpush1.bf16.msra.mxu0 %v2306
        %3119 = vmatprep.subr.bf16.mxu0 %v2301
        %3120 = vmatpush1.bf16.msra.mxu0 %v2300
        %3121 = vmatprep.subr.bf16.mxu0 %v2391
        %3122 = vmatpush2.bf16.msra.mxu0 %v2390
        %3123 = vmatprep.subr.bf16.mxu0 %v2385
        %3124 = vmatpush2.bf16.msra.mxu0 %v2384
        %3125 = vmatprep.subr.bf16.mxu0 %v2379
        %3126 = vmatpush2.bf16.msra.mxu0 %v2378
        %3127 = vmatprep.subr.bf16.mxu0 %v2373
        %3128 = vmatpush2.bf16.msra.mxu0 %v2372
        %3129 = vmatprep.subr.bf16.mxu0 %v2367
        %3130 = vmatpush2.bf16.msra.mxu0 %v2366
        %3131 = vmatprep.subr.bf16.mxu0 %v2361
        %3132 = vmatpush2.bf16.msra.mxu0 %v2360
        %3133 = vmatprep.subr.bf16.mxu0 %v2355
        %3134 = vmatpush2.bf16.msra.mxu0 %v2354
        %3135 = vmatprep.subr.bf16.mxu0 %v2349
        %3136 = vmatpush2.bf16.msra.mxu0 %v2348
        %3137 = vmatprep.mubr.bf16.mxu0 %v463
        %3138 = vmatmul.mubr.bf16.gmra.mxu0 %v462
        %v3139 = vpop.f32.mrf.mxu0
        %v3140 = vadd.f32 %v3007, %v3139
        %v3141 = vpop.f32.mrf.mxu0
        %v3142 = vadd.f32 %v3009, %v3141
        %v3143 = vpop.f32.mrf.mxu0
        %v3144 = vadd.f32 %v3011, %v3143
        %v3145 = vpop.f32.mrf.mxu0
        %v3146 = vadd.f32 %v3013, %v3145
        %3147 = vmatprep.mubr.bf16.mxu0 %v471
        %3148 = vmatmul.mubr.bf16.gmra.mxu0 %v470
        %v3149 = vpop.f32.mrf.mxu0
        %v3150 = vadd.f32 %v3017, %v3149
        %v3151 = vpop.f32.mrf.mxu0
        %v3152 = vadd.f32 %v3019, %v3151
        %v3153 = vpop.f32.mrf.mxu0
        %v3154 = vadd.f32 %v3021, %v3153
        %v3155 = vpop.f32.mrf.mxu0
        %v3156 = vadd.f32 %v3023, %v3155
        %3157 = vmatprep.mubr.bf16.mxu0 %v479
        %3158 = vmatmul.mubr.bf16.gmra.mxu0 %v478
        %v3159 = vpop.f32.mrf.mxu0
        %v3160 = vadd.f32 %v3027, %v3159
        %v3161 = vpop.f32.mrf.mxu0
        %v3162 = vadd.f32 %v3029, %v3161
        %v3163 = vpop.f32.mrf.mxu0
        %v3164 = vadd.f32 %v3031, %v3163
        %v3165 = vpop.f32.mrf.mxu0
        %v3166 = vadd.f32 %v3033, %v3165
        %3167 = vmatprep.mubr.bf16.mxu0 %v487
        %3168 = vmatmul.mubr.bf16.gmra.mxu0 %v486
        %v3169 = vpop.f32.mrf.mxu0
        %v3170 = vadd.f32 %v3037, %v3169
        %v3171 = vpop.f32.mrf.mxu0
        %v3172 = vadd.f32 %v3039, %v3171
        %v3173 = vpop.f32.mrf.mxu0
        %v3174 = vadd.f32 %v3041, %v3173
        %v3175 = vpop.f32.mrf.mxu0
        %v3176 = vadd.f32 %v3043, %v3175
        %3177 = vmatprep.mubr.bf16.mxu0 %v495
        %3178 = vmatmul.mubr.bf16.gmra.mxu0 %v494
        %v3179 = vpop.f32.mrf.mxu0
        %v3180 = vadd.f32 %v3047, %v3179
        %v3181 = vpop.f32.mrf.mxu0
        %v3182 = vadd.f32 %v3049, %v3181
        %v3183 = vpop.f32.mrf.mxu0
        %v3184 = vadd.f32 %v3051, %v3183
        %v3185 = vpop.f32.mrf.mxu0
        %v3186 = vadd.f32 %v3053, %v3185
        %3187 = vmatprep.mubr.bf16.mxu0 %v503
        %3188 = vmatmul.mubr.bf16.gmra.mxu0 %v502
        %v3189 = vpop.f32.mrf.mxu0
        %v3190 = vadd.f32 %v3057, %v3189
        %v3191 = vpop.f32.mrf.mxu0
        %v3192 = vadd.f32 %v3059, %v3191
        %v3193 = vpop.f32.mrf.mxu0
        %v3194 = vadd.f32 %v3061, %v3193
        %v3195 = vpop.f32.mrf.mxu0
        %v3196 = vadd.f32 %v3063, %v3195
        %3197 = vmatprep.mubr.bf16.mxu0 %v511
        %3198 = vmatmul.mubr.bf16.gmra.mxu0 %v510
        %v3199 = vpop.f32.mrf.mxu0
        %v3200 = vadd.f32 %v3067, %v3199
        %v3201 = vpop.f32.mrf.mxu0
        %v3202 = vadd.f32 %v3069, %v3201
        %v3203 = vpop.f32.mrf.mxu0
        %v3204 = vadd.f32 %v3071, %v3203
        %v3205 = vpop.f32.mrf.mxu0
        %v3206 = vadd.f32 %v3073, %v3205
        %3207 = vmatprep.mubr.bf16.mxu0 %v519
        %3208 = vmatmul.mubr.bf16.gmra.mxu0 %v518
        %v3209 = vpop.f32.mrf.mxu0
        %v3210 = vadd.f32 %v3077, %v3209
        %v3211 = vpop.f32.mrf.mxu0
        %v3212 = vadd.f32 %v3079, %v3211
        %v3213 = vpop.f32.mrf.mxu0
        %v3214 = vadd.f32 %v3081, %v3213
        %v3215 = vpop.f32.mrf.mxu0
        %v3216 = vadd.f32 %v3083, %v3215
        %3217 = vmatprep.mubr.bf16.mxu0 %v527
        %3218 = vmatmul.mubr.bf16.gmra.mxu0 %v526
        %v3219 = vpop.f32.mrf.mxu0
        %v3220 = vadd.f32 %v3087, %v3219
        %v3221 = vpop.f32.mrf.mxu0
        %v3222 = vadd.f32 %v3089, %v3221
        %v3223 = vpop.f32.mrf.mxu0
        %v3224 = vadd.f32 %v3091, %v3223
        %v3225 = vpop.f32.mrf.mxu0
        %v3226 = vadd.f32 %v3093, %v3225
        %3227 = vmatprep.mubr.bf16.mxu0 %v535
        %3228 = vmatmul.mubr.bf16.gmra.mxu0 %v534
        %v3229 = vpop.f32.mrf.mxu0
        %v3230 = vadd.f32 %v3097, %v3229
        %v3231 = vpop.f32.mrf.mxu0
        %v3232 = vadd.f32 %v3099, %v3231
        %v3233 = vpop.f32.mrf.mxu0
        %v3234 = vadd.f32 %v3101, %v3233
        %v3235 = vpop.f32.mrf.mxu0
        %v3236 = vadd.f32 %v3103, %v3235
        %3237 = vdwg.mxu0
        %3238 = vmatprep.subr.bf16.mxu0 %v2439
        %3239 = vmatpush1.bf16.msra.mxu0 %v2438
        %3240 = vmatprep.subr.bf16.mxu0 %v2433
        %3241 = vmatpush1.bf16.msra.mxu0 %v2432
        %3242 = vmatprep.subr.bf16.mxu0 %v2427
        %3243 = vmatpush1.bf16.msra.mxu0 %v2426
        %3244 = vmatprep.subr.bf16.mxu0 %v2421
        %3245 = vmatpush1.bf16.msra.mxu0 %v2420
        %3246 = vmatprep.subr.bf16.mxu0 %v2415
        %3247 = vmatpush1.bf16.msra.mxu0 %v2414
        %3248 = vmatprep.subr.bf16.mxu0 %v2409
        %3249 = vmatpush1.bf16.msra.mxu0 %v2408
        %3250 = vmatprep.subr.bf16.mxu0 %v2403
        %3251 = vmatpush1.bf16.msra.mxu0 %v2402
        %3252 = vmatprep.subr.bf16.mxu0 %v2397
        %3253 = vmatpush1.bf16.msra.mxu0 %v2396
        %3254 = vmatprep.subr.bf16.mxu0 %v2487
        %3255 = vmatpush2.bf16.msra.mxu0 %v2486
        %3256 = vmatprep.subr.bf16.mxu0 %v2481
        %3257 = vmatpush2.bf16.msra.mxu0 %v2480
        %3258 = vmatprep.subr.bf16.mxu0 %v2475
        %3259 = vmatpush2.bf16.msra.mxu0 %v2474
        %3260 = vmatprep.subr.bf16.mxu0 %v2469
        %3261 = vmatpush2.bf16.msra.mxu0 %v2468
        %3262 = vmatprep.subr.bf16.mxu0 %v2463
        %3263 = vmatpush2.bf16.msra.mxu0 %v2462
        %3264 = vmatprep.subr.bf16.mxu0 %v2457
        %3265 = vmatpush2.bf16.msra.mxu0 %v2456
        %3266 = vmatprep.subr.bf16.mxu0 %v2451
        %3267 = vmatpush2.bf16.msra.mxu0 %v2450
        %3268 = vmatprep.subr.bf16.mxu0 %v2445
        %3269 = vmatpush2.bf16.msra.mxu0 %v2444
        %3270 = vmatprep.mubr.bf16.mxu0 %v465
        %3271 = vmatmul.mubr.bf16.gmra.mxu0 %v464
        %v3272 = vpop.f32.mrf.mxu0
        %v3273 = vadd.f32 %v3140, %v3272
        %v3274 = vpop.f32.mrf.mxu0
        %v3275 = vadd.f32 %v3142, %v3274
        %v3276 = vpop.f32.mrf.mxu0
        %v3277 = vadd.f32 %v3144, %v3276
        %v3278 = vpop.f32.mrf.mxu0
        %v3279 = vadd.f32 %v3146, %v3278
        %3280 = vmatprep.mubr.bf16.mxu0 %v473
        %3281 = vmatmul.mubr.bf16.gmra.mxu0 %v472
        %v3282 = vpop.f32.mrf.mxu0
        %v3283 = vadd.f32 %v3150, %v3282
        %v3284 = vpop.f32.mrf.mxu0
        %v3285 = vadd.f32 %v3152, %v3284
        %v3286 = vpop.f32.mrf.mxu0
        %v3287 = vadd.f32 %v3154, %v3286
        %v3288 = vpop.f32.mrf.mxu0
        %v3289 = vadd.f32 %v3156, %v3288
        %3290 = vmatprep.mubr.bf16.mxu0 %v481
        %3291 = vmatmul.mubr.bf16.gmra.mxu0 %v480
        %v3292 = vpop.f32.mrf.mxu0
        %v3293 = vadd.f32 %v3160, %v3292
        %v3294 = vpop.f32.mrf.mxu0
        %v3295 = vadd.f32 %v3162, %v3294
        %v3296 = vpop.f32.mrf.mxu0
        %v3297 = vadd.f32 %v3164, %v3296
        %v3298 = vpop.f32.mrf.mxu0
        %v3299 = vadd.f32 %v3166, %v3298
        %3300 = vmatprep.mubr.bf16.mxu0 %v489
        %3301 = vmatmul.mubr.bf16.gmra.mxu0 %v488
        %v3302 = vpop.f32.mrf.mxu0
        %v3303 = vadd.f32 %v3170, %v3302
        %v3304 = vpop.f32.mrf.mxu0
        %v3305 = vadd.f32 %v3172, %v3304
        %v3306 = vpop.f32.mrf.mxu0
        %v3307 = vadd.f32 %v3174, %v3306
        %v3308 = vpop.f32.mrf.mxu0
        %v3309 = vadd.f32 %v3176, %v3308
        %3310 = vmatprep.mubr.bf16.mxu0 %v497
        %3311 = vmatmul.mubr.bf16.gmra.mxu0 %v496
        %v3312 = vpop.f32.mrf.mxu0
        %v3313 = vadd.f32 %v3180, %v3312
        %v3314 = vpop.f32.mrf.mxu0
        %v3315 = vadd.f32 %v3182, %v3314
        %v3316 = vpop.f32.mrf.mxu0
        %v3317 = vadd.f32 %v3184, %v3316
        %v3318 = vpop.f32.mrf.mxu0
        %v3319 = vadd.f32 %v3186, %v3318
        %3320 = vmatprep.mubr.bf16.mxu0 %v505
        %3321 = vmatmul.mubr.bf16.gmra.mxu0 %v504
        %v3322 = vpop.f32.mrf.mxu0
        %v3323 = vadd.f32 %v3190, %v3322
        %v3324 = vpop.f32.mrf.mxu0
        %v3325 = vadd.f32 %v3192, %v3324
        %v3326 = vpop.f32.mrf.mxu0
        %v3327 = vadd.f32 %v3194, %v3326
        %v3328 = vpop.f32.mrf.mxu0
        %v3329 = vadd.f32 %v3196, %v3328
        %3330 = vmatprep.mubr.bf16.mxu0 %v513
        %3331 = vmatmul.mubr.bf16.gmra.mxu0 %v512
        %v3332 = vpop.f32.mrf.mxu0
        %v3333 = vadd.f32 %v3200, %v3332
        %v3334 = vpop.f32.mrf.mxu0
        %v3335 = vadd.f32 %v3202, %v3334
        %v3336 = vpop.f32.mrf.mxu0
        %v3337 = vadd.f32 %v3204, %v3336
        %v3338 = vpop.f32.mrf.mxu0
        %v3339 = vadd.f32 %v3206, %v3338
        %3340 = vmatprep.mubr.bf16.mxu0 %v521
        %3341 = vmatmul.mubr.bf16.gmra.mxu0 %v520
        %v3342 = vpop.f32.mrf.mxu0
        %v3343 = vadd.f32 %v3210, %v3342
        %v3344 = vpop.f32.mrf.mxu0
        %v3345 = vadd.f32 %v3212, %v3344
        %v3346 = vpop.f32.mrf.mxu0
        %v3347 = vadd.f32 %v3214, %v3346
        %v3348 = vpop.f32.mrf.mxu0
        %v3349 = vadd.f32 %v3216, %v3348
        %3350 = vmatprep.mubr.bf16.mxu0 %v529
        %3351 = vmatmul.mubr.bf16.gmra.mxu0 %v528
        %v3352 = vpop.f32.mrf.mxu0
        %v3353 = vadd.f32 %v3220, %v3352
        %v3354 = vpop.f32.mrf.mxu0
        %v3355 = vadd.f32 %v3222, %v3354
        %v3356 = vpop.f32.mrf.mxu0
        %v3357 = vadd.f32 %v3224, %v3356
        %v3358 = vpop.f32.mrf.mxu0
        %v3359 = vadd.f32 %v3226, %v3358
        %3360 = vmatprep.mubr.bf16.mxu0 %v537
        %3361 = vmatmul.mubr.bf16.gmra.mxu0 %v536
        %v3362 = vpop.f32.mrf.mxu0
        %v3363 = vadd.f32 %v3230, %v3362
        %v3364 = vpop.f32.mrf.mxu0
        %v3365 = vadd.f32 %v3232, %v3364
        %v3366 = vpop.f32.mrf.mxu0
        %v3367 = vadd.f32 %v3234, %v3366
        %v3368 = vpop.f32.mrf.mxu0
        %v3369 = vadd.f32 %v3236, %v3368
        %3370 = vdwg.mxu0
        %3371 = vmatprep.subr.bf16.mxu0 %v2535
        %3372 = vmatpush1.bf16.msra.mxu0 %v2534
        %3373 = vmatprep.subr.bf16.mxu0 %v2529
        %3374 = vmatpush1.bf16.msra.mxu0 %v2528
        %3375 = vmatprep.subr.bf16.mxu0 %v2523
        %3376 = vmatpush1.bf16.msra.mxu0 %v2522
        %3377 = vmatprep.subr.bf16.mxu0 %v2517
        %3378 = vmatpush1.bf16.msra.mxu0 %v2516
        %3379 = vmatprep.subr.bf16.mxu0 %v2511
        %3380 = vmatpush1.bf16.msra.mxu0 %v2510
        %3381 = vmatprep.subr.bf16.mxu0 %v2505
        %3382 = vmatpush1.bf16.msra.mxu0 %v2504
        %3383 = vmatprep.subr.bf16.mxu0 %v2499
        %3384 = vmatpush1.bf16.msra.mxu0 %v2498
        %3385 = vmatprep.subr.bf16.mxu0 %v2493
        %3386 = vmatpush1.bf16.msra.mxu0 %v2492
        %3387 = vmatprep.subr.bf16.mxu0 %v2583
        %3388 = vmatpush2.bf16.msra.mxu0 %v2582
        %3389 = vmatprep.subr.bf16.mxu0 %v2577
        %3390 = vmatpush2.bf16.msra.mxu0 %v2576
        %3391 = vmatprep.subr.bf16.mxu0 %v2571
        %3392 = vmatpush2.bf16.msra.mxu0 %v2570
        %3393 = vmatprep.subr.bf16.mxu0 %v2565
        %3394 = vmatpush2.bf16.msra.mxu0 %v2564
        %3395 = vmatprep.subr.bf16.mxu0 %v2559
        %3396 = vmatpush2.bf16.msra.mxu0 %v2558
        %3397 = vmatprep.subr.bf16.mxu0 %v2553
        %3398 = vmatpush2.bf16.msra.mxu0 %v2552
        %3399 = vmatprep.subr.bf16.mxu0 %v2547
        %3400 = vmatpush2.bf16.msra.mxu0 %v2546
        %3401 = vmatprep.subr.bf16.mxu0 %v2541
        %3402 = vmatpush2.bf16.msra.mxu0 %v2540
        %3403 = vmatprep.mubr.bf16.mxu0 %v467
        %3404 = vmatmul.mubr.bf16.gmra.mxu0 %v466
        %v3405 = vpop.f32.mrf.mxu0
        %v3406 = vadd.f32 %v3273, %v3405
        %v3407 = vpop.f32.mrf.mxu0
        %v3408 = vadd.f32 %v3275, %v3407
        %v3409 = vpop.f32.mrf.mxu0
        %v3410 = vadd.f32 %v3277, %v3409
        %v3411 = vpop.f32.mrf.mxu0
        %v3412 = vadd.f32 %v3279, %v3411
        %3413 = vmatprep.mubr.bf16.mxu0 %v475
        %3414 = vmatmul.mubr.bf16.gmra.mxu0 %v474
        %v3415 = vpop.f32.mrf.mxu0
        %v3416 = vadd.f32 %v3283, %v3415
        %v3417 = vpop.f32.mrf.mxu0
        %v3418 = vadd.f32 %v3285, %v3417
        %v3419 = vpop.f32.mrf.mxu0
        %v3420 = vadd.f32 %v3287, %v3419
        %v3421 = vpop.f32.mrf.mxu0
        %v3422 = vadd.f32 %v3289, %v3421
        %3423 = vmatprep.mubr.bf16.mxu0 %v483
        %3424 = vmatmul.mubr.bf16.gmra.mxu0 %v482
        %v3425 = vpop.f32.mrf.mxu0
        %v3426 = vadd.f32 %v3293, %v3425
        %v3427 = vpop.f32.mrf.mxu0
        %v3428 = vadd.f32 %v3295, %v3427
        %v3429 = vpop.f32.mrf.mxu0
        %v3430 = vadd.f32 %v3297, %v3429
        %v3431 = vpop.f32.mrf.mxu0
        %v3432 = vadd.f32 %v3299, %v3431
        %3433 = vmatprep.mubr.bf16.mxu0 %v491
        %3434 = vmatmul.mubr.bf16.gmra.mxu0 %v490
        %v3435 = vpop.f32.mrf.mxu0
        %v3436 = vadd.f32 %v3303, %v3435
        %v3437 = vpop.f32.mrf.mxu0
        %v3438 = vadd.f32 %v3305, %v3437
        %v3439 = vpop.f32.mrf.mxu0
        %v3440 = vadd.f32 %v3307, %v3439
        %v3441 = vpop.f32.mrf.mxu0
        %v3442 = vadd.f32 %v3309, %v3441
        %3443 = vmatprep.mubr.bf16.mxu0 %v499
        %3444 = vmatmul.mubr.bf16.gmra.mxu0 %v498
        %v3445 = vpop.f32.mrf.mxu0
        %v3446 = vadd.f32 %v3313, %v3445
        %v3447 = vpop.f32.mrf.mxu0
        %v3448 = vadd.f32 %v3315, %v3447
        %v3449 = vpop.f32.mrf.mxu0
        %v3450 = vadd.f32 %v3317, %v3449
        %v3451 = vpop.f32.mrf.mxu0
        %v3452 = vadd.f32 %v3319, %v3451
        %3453 = vmatprep.mubr.bf16.mxu0 %v507
        %3454 = vmatmul.mubr.bf16.gmra.mxu0 %v506
        %v3455 = vpop.f32.mrf.mxu0
        %v3456 = vadd.f32 %v3323, %v3455
        %v3457 = vpop.f32.mrf.mxu0
        %v3458 = vadd.f32 %v3325, %v3457
        %v3459 = vpop.f32.mrf.mxu0
        %v3460 = vadd.f32 %v3327, %v3459
        %v3461 = vpop.f32.mrf.mxu0
        %v3462 = vadd.f32 %v3329, %v3461
        %3463 = vmatprep.mubr.bf16.mxu0 %v515
        %3464 = vmatmul.mubr.bf16.gmra.mxu0 %v514
        %v3465 = vpop.f32.mrf.mxu0
        %v3466 = vadd.f32 %v3333, %v3465
        %v3467 = vpop.f32.mrf.mxu0
        %v3468 = vadd.f32 %v3335, %v3467
        %v3469 = vpop.f32.mrf.mxu0
        %v3470 = vadd.f32 %v3337, %v3469
        %v3471 = vpop.f32.mrf.mxu0
        %v3472 = vadd.f32 %v3339, %v3471
        %3473 = vmatprep.mubr.bf16.mxu0 %v523
        %3474 = vmatmul.mubr.bf16.gmra.mxu0 %v522
        %v3475 = vpop.f32.mrf.mxu0
        %v3476 = vadd.f32 %v3343, %v3475
        %v3477 = vpop.f32.mrf.mxu0
        %v3478 = vadd.f32 %v3345, %v3477
        %v3479 = vpop.f32.mrf.mxu0
        %v3480 = vadd.f32 %v3347, %v3479
        %v3481 = vpop.f32.mrf.mxu0
        %v3482 = vadd.f32 %v3349, %v3481
        %3483 = vmatprep.mubr.bf16.mxu0 %v531
        %3484 = vmatmul.mubr.bf16.gmra.mxu0 %v530
        %v3485 = vpop.f32.mrf.mxu0
        %v3486 = vadd.f32 %v3353, %v3485
        %v3487 = vpop.f32.mrf.mxu0
        %v3488 = vadd.f32 %v3355, %v3487
        %v3489 = vpop.f32.mrf.mxu0
        %v3490 = vadd.f32 %v3357, %v3489
        %v3491 = vpop.f32.mrf.mxu0
        %v3492 = vadd.f32 %v3359, %v3491
        %3493 = vmatprep.mubr.bf16.mxu0 %v539
        %3494 = vmatmul.mubr.bf16.gmra.mxu0 %v538
        %v3495 = vpop.f32.mrf.mxu0
        %v3496 = vadd.f32 %v3363, %v3495
        %v3497 = vpop.f32.mrf.mxu0
        %v3498 = vadd.f32 %v3365, %v3497
        %v3499 = vpop.f32.mrf.mxu0
        %v3500 = vadd.f32 %v3367, %v3499
        %v3501 = vpop.f32.mrf.mxu0
        %v3502 = vadd.f32 %v3369, %v3501
        %3503 = vdwg.mxu0
        %3504 = vmatprep.subr.bf16.mxu0 %v2249
        %3505 = vmatpush1.bf16.msra.mxu0 %v2248
        %3506 = vmatprep.subr.bf16.mxu0 %v2243
        %3507 = vmatpush1.bf16.msra.mxu0 %v2242
        %3508 = vmatprep.subr.bf16.mxu0 %v2237
        %3509 = vmatpush1.bf16.msra.mxu0 %v2236
        %3510 = vmatprep.subr.bf16.mxu0 %v2231
        %3511 = vmatpush1.bf16.msra.mxu0 %v2230
        %3512 = vmatprep.subr.bf16.mxu0 %v2225
        %3513 = vmatpush1.bf16.msra.mxu0 %v2224
        %3514 = vmatprep.subr.bf16.mxu0 %v2219
        %3515 = vmatpush1.bf16.msra.mxu0 %v2218
        %3516 = vmatprep.subr.bf16.mxu0 %v2213
        %3517 = vmatpush1.bf16.msra.mxu0 %v2212
        %3518 = vmatprep.subr.bf16.mxu0 %v2207
        %3519 = vmatpush1.bf16.msra.mxu0 %v2206
        %3520 = vmatprep.subr.bf16.mxu0 %v2297
        %3521 = vmatpush2.bf16.msra.mxu0 %v2296
        %3522 = vmatprep.subr.bf16.mxu0 %v2291
        %3523 = vmatpush2.bf16.msra.mxu0 %v2290
        %3524 = vmatprep.subr.bf16.mxu0 %v2285
        %3525 = vmatpush2.bf16.msra.mxu0 %v2284
        %3526 = vmatprep.subr.bf16.mxu0 %v2279
        %3527 = vmatpush2.bf16.msra.mxu0 %v2278
        %3528 = vmatprep.subr.bf16.mxu0 %v2273
        %3529 = vmatpush2.bf16.msra.mxu0 %v2272
        %3530 = vmatprep.subr.bf16.mxu0 %v2267
        %3531 = vmatpush2.bf16.msra.mxu0 %v2266
        %3532 = vmatprep.subr.bf16.mxu0 %v2261
        %3533 = vmatpush2.bf16.msra.mxu0 %v2260
        %3534 = vmatprep.subr.bf16.mxu0 %v2255
        %3535 = vmatpush2.bf16.msra.mxu0 %v2254
        %3536 = vmatprep.mubr.bf16.mxu0 %v461
        %3537 = vmatmul.mubr.bf16.gmra.mxu0 %v460
        %v3538 = vpop.f32.mrf.mxu0
        %v3539 = vadd.f32 %v1033, %v3538
        %v3540 = vpop.f32.mrf.mxu0
        %v3541 = vadd.f32 %v1037, %v3540
        %v3542 = vpop.f32.mrf.mxu0
        %v3543 = vadd.f32 %v1033, %v3542
        %v3544 = vpop.f32.mrf.mxu0
        %v3545 = vadd.f32 %v1037, %v3544
        %3546 = vmatprep.mubr.bf16.mxu0 %v469
        %3547 = vmatmul.mubr.bf16.gmra.mxu0 %v468
        %v3548 = vpop.f32.mrf.mxu0
        %v3549 = vadd.f32 %v1033, %v3548
        %v3550 = vpop.f32.mrf.mxu0
        %v3551 = vadd.f32 %v1037, %v3550
        %v3552 = vpop.f32.mrf.mxu0
        %v3553 = vadd.f32 %v1033, %v3552
        %v3554 = vpop.f32.mrf.mxu0
        %v3555 = vadd.f32 %v1037, %v3554
        %3556 = vmatprep.mubr.bf16.mxu0 %v477
        %3557 = vmatmul.mubr.bf16.gmra.mxu0 %v476
        %v3558 = vpop.f32.mrf.mxu0
        %v3559 = vadd.f32 %v1033, %v3558
        %v3560 = vpop.f32.mrf.mxu0
        %v3561 = vadd.f32 %v1037, %v3560
        %v3562 = vpop.f32.mrf.mxu0
        %v3563 = vadd.f32 %v1033, %v3562
        %v3564 = vpop.f32.mrf.mxu0
        %v3565 = vadd.f32 %v1037, %v3564
        %3566 = vmatprep.mubr.bf16.mxu0 %v485
        %3567 = vmatmul.mubr.bf16.gmra.mxu0 %v484
        %v3568 = vpop.f32.mrf.mxu0
        %v3569 = vadd.f32 %v1033, %v3568
        %v3570 = vpop.f32.mrf.mxu0
        %v3571 = vadd.f32 %v1037, %v3570
        %v3572 = vpop.f32.mrf.mxu0
        %v3573 = vadd.f32 %v1033, %v3572
        %v3574 = vpop.f32.mrf.mxu0
        %v3575 = vadd.f32 %v1037, %v3574
        %3576 = vmatprep.mubr.bf16.mxu0 %v493
        %3577 = vmatmul.mubr.bf16.gmra.mxu0 %v492
        %v3578 = vpop.f32.mrf.mxu0
        %v3579 = vadd.f32 %v1033, %v3578
        %v3580 = vpop.f32.mrf.mxu0
        %v3581 = vadd.f32 %v1037, %v3580
        %v3582 = vpop.f32.mrf.mxu0
        %v3583 = vadd.f32 %v1033, %v3582
        %v3584 = vpop.f32.mrf.mxu0
        %v3585 = vadd.f32 %v1037, %v3584
        %3586 = vmatprep.mubr.bf16.mxu0 %v501
        %3587 = vmatmul.mubr.bf16.gmra.mxu0 %v500
        %v3588 = vpop.f32.mrf.mxu0
        %v3589 = vadd.f32 %v1033, %v3588
        %v3590 = vpop.f32.mrf.mxu0
        %v3591 = vadd.f32 %v1037, %v3590
        %v3592 = vpop.f32.mrf.mxu0
        %v3593 = vadd.f32 %v1033, %v3592
        %v3594 = vpop.f32.mrf.mxu0
        %v3595 = vadd.f32 %v1037, %v3594
        %3596 = vmatprep.mubr.bf16.mxu0 %v509
        %3597 = vmatmul.mubr.bf16.gmra.mxu0 %v508
        %v3598 = vpop.f32.mrf.mxu0
        %v3599 = vadd.f32 %v1033, %v3598
        %v3600 = vpop.f32.mrf.mxu0
        %v3601 = vadd.f32 %v1037, %v3600
        %v3602 = vpop.f32.mrf.mxu0
        %v3603 = vadd.f32 %v1033, %v3602
        %v3604 = vpop.f32.mrf.mxu0
        %v3605 = vadd.f32 %v1037, %v3604
        %3606 = vmatprep.mubr.bf16.mxu0 %v517
        %3607 = vmatmul.mubr.bf16.gmra.mxu0 %v516
        %v3608 = vpop.f32.mrf.mxu0
        %v3609 = vadd.f32 %v1033, %v3608
        %v3610 = vpop.f32.mrf.mxu0
        %v3611 = vadd.f32 %v1037, %v3610
        %v3612 = vpop.f32.mrf.mxu0
        %v3613 = vadd.f32 %v1033, %v3612
        %v3614 = vpop.f32.mrf.mxu0
        %v3615 = vadd.f32 %v1037, %v3614
        %3616 = vmatprep.mubr.bf16.mxu0 %v525
        %3617 = vmatmul.mubr.bf16.gmra.mxu0 %v524
        %v3618 = vpop.f32.mrf.mxu0
        %v3619 = vadd.f32 %v1033, %v3618
        %v3620 = vpop.f32.mrf.mxu0
        %v3621 = vadd.f32 %v1037, %v3620
        %v3622 = vpop.f32.mrf.mxu0
        %v3623 = vadd.f32 %v1033, %v3622
        %v3624 = vpop.f32.mrf.mxu0
        %v3625 = vadd.f32 %v1037, %v3624
        %3626 = vmatprep.mubr.bf16.mxu0 %v533
        %3627 = vmatmul.mubr.bf16.gmra.mxu0 %v532
        %v3628 = vpop.f32.mrf.mxu0
        %v3629 = vadd.f32 %v1033, %v3628
        %v3630 = vpop.f32.mrf.mxu0
        %v3631 = vadd.f32 %v1037, %v3630
        %v3632 = vpop.f32.mrf.mxu0
        %v3633 = vadd.f32 %v1033, %v3632
        %v3634 = vpop.f32.mrf.mxu0
        %v3635 = vadd.f32 %v1037, %v3634
        %3636 = vdwg.mxu0
        %3637 = vmatprep.subr.bf16.mxu0 %v2345
        %3638 = vmatpush1.bf16.msra.mxu0 %v2344
        %3639 = vmatprep.subr.bf16.mxu0 %v2339
        %3640 = vmatpush1.bf16.msra.mxu0 %v2338
        %3641 = vmatprep.subr.bf16.mxu0 %v2333
        %3642 = vmatpush1.bf16.msra.mxu0 %v2332
        %3643 = vmatprep.subr.bf16.mxu0 %v2327
        %3644 = vmatpush1.bf16.msra.mxu0 %v2326
        %3645 = vmatprep.subr.bf16.mxu0 %v2321
        %3646 = vmatpush1.bf16.msra.mxu0 %v2320
        %3647 = vmatprep.subr.bf16.mxu0 %v2315
        %3648 = vmatpush1.bf16.msra.mxu0 %v2314
        %3649 = vmatprep.subr.bf16.mxu0 %v2309
        %3650 = vmatpush1.bf16.msra.mxu0 %v2308
        %3651 = vmatprep.subr.bf16.mxu0 %v2303
        %3652 = vmatpush1.bf16.msra.mxu0 %v2302
        %3653 = vmatprep.subr.bf16.mxu0 %v2393
        %3654 = vmatpush2.bf16.msra.mxu0 %v2392
        %3655 = vmatprep.subr.bf16.mxu0 %v2387
        %3656 = vmatpush2.bf16.msra.mxu0 %v2386
        %3657 = vmatprep.subr.bf16.mxu0 %v2381
        %3658 = vmatpush2.bf16.msra.mxu0 %v2380
        %3659 = vmatprep.subr.bf16.mxu0 %v2375
        %3660 = vmatpush2.bf16.msra.mxu0 %v2374
        %3661 = vmatprep.subr.bf16.mxu0 %v2369
        %3662 = vmatpush2.bf16.msra.mxu0 %v2368
        %3663 = vmatprep.subr.bf16.mxu0 %v2363
        %3664 = vmatpush2.bf16.msra.mxu0 %v2362
        %3665 = vmatprep.subr.bf16.mxu0 %v2357
        %3666 = vmatpush2.bf16.msra.mxu0 %v2356
        %3667 = vmatprep.subr.bf16.mxu0 %v2351
        %3668 = vmatpush2.bf16.msra.mxu0 %v2350
        %3669 = vmatprep.mubr.bf16.mxu0 %v463
        %3670 = vmatmul.mubr.bf16.gmra.mxu0 %v462
        %v3671 = vpop.f32.mrf.mxu0
        %v3672 = vadd.f32 %v3539, %v3671
        %v3673 = vpop.f32.mrf.mxu0
        %v3674 = vadd.f32 %v3541, %v3673
        %v3675 = vpop.f32.mrf.mxu0
        %v3676 = vadd.f32 %v3543, %v3675
        %v3677 = vpop.f32.mrf.mxu0
        %v3678 = vadd.f32 %v3545, %v3677
        %3679 = vmatprep.mubr.bf16.mxu0 %v471
        %3680 = vmatmul.mubr.bf16.gmra.mxu0 %v470
        %v3681 = vpop.f32.mrf.mxu0
        %v3682 = vadd.f32 %v3549, %v3681
        %v3683 = vpop.f32.mrf.mxu0
        %v3684 = vadd.f32 %v3551, %v3683
        %v3685 = vpop.f32.mrf.mxu0
        %v3686 = vadd.f32 %v3553, %v3685
        %v3687 = vpop.f32.mrf.mxu0
        %v3688 = vadd.f32 %v3555, %v3687
        %3689 = vmatprep.mubr.bf16.mxu0 %v479
        %3690 = vmatmul.mubr.bf16.gmra.mxu0 %v478
        %v3691 = vpop.f32.mrf.mxu0
        %v3692 = vadd.f32 %v3559, %v3691
        %v3693 = vpop.f32.mrf.mxu0
        %v3694 = vadd.f32 %v3561, %v3693
        %v3695 = vpop.f32.mrf.mxu0
        %v3696 = vadd.f32 %v3563, %v3695
        %v3697 = vpop.f32.mrf.mxu0
        %v3698 = vadd.f32 %v3565, %v3697
        %3699 = vmatprep.mubr.bf16.mxu0 %v487
        %3700 = vmatmul.mubr.bf16.gmra.mxu0 %v486
        %v3701 = vpop.f32.mrf.mxu0
        %v3702 = vadd.f32 %v3569, %v3701
        %v3703 = vpop.f32.mrf.mxu0
        %v3704 = vadd.f32 %v3571, %v3703
        %v3705 = vpop.f32.mrf.mxu0
        %v3706 = vadd.f32 %v3573, %v3705
        %v3707 = vpop.f32.mrf.mxu0
        %v3708 = vadd.f32 %v3575, %v3707
        %3709 = vmatprep.mubr.bf16.mxu0 %v495
        %3710 = vmatmul.mubr.bf16.gmra.mxu0 %v494
        %v3711 = vpop.f32.mrf.mxu0
        %v3712 = vadd.f32 %v3579, %v3711
        %v3713 = vpop.f32.mrf.mxu0
        %v3714 = vadd.f32 %v3581, %v3713
        %v3715 = vpop.f32.mrf.mxu0
        %v3716 = vadd.f32 %v3583, %v3715
        %v3717 = vpop.f32.mrf.mxu0
        %v3718 = vadd.f32 %v3585, %v3717
        %3719 = vmatprep.mubr.bf16.mxu0 %v503
        %3720 = vmatmul.mubr.bf16.gmra.mxu0 %v502
        %v3721 = vpop.f32.mrf.mxu0
        %v3722 = vadd.f32 %v3589, %v3721
        %v3723 = vpop.f32.mrf.mxu0
        %v3724 = vadd.f32 %v3591, %v3723
        %v3725 = vpop.f32.mrf.mxu0
        %v3726 = vadd.f32 %v3593, %v3725
        %v3727 = vpop.f32.mrf.mxu0
        %v3728 = vadd.f32 %v3595, %v3727
        %3729 = vmatprep.mubr.bf16.mxu0 %v511
        %3730 = vmatmul.mubr.bf16.gmra.mxu0 %v510
        %v3731 = vpop.f32.mrf.mxu0
        %v3732 = vadd.f32 %v3599, %v3731
        %v3733 = vpop.f32.mrf.mxu0
        %v3734 = vadd.f32 %v3601, %v3733
        %v3735 = vpop.f32.mrf.mxu0
        %v3736 = vadd.f32 %v3603, %v3735
        %v3737 = vpop.f32.mrf.mxu0
        %v3738 = vadd.f32 %v3605, %v3737
        %3739 = vmatprep.mubr.bf16.mxu0 %v519
        %3740 = vmatmul.mubr.bf16.gmra.mxu0 %v518
        %v3741 = vpop.f32.mrf.mxu0
        %v3742 = vadd.f32 %v3609, %v3741
        %v3743 = vpop.f32.mrf.mxu0
        %v3744 = vadd.f32 %v3611, %v3743
        %v3745 = vpop.f32.mrf.mxu0
        %v3746 = vadd.f32 %v3613, %v3745
        %v3747 = vpop.f32.mrf.mxu0
        %v3748 = vadd.f32 %v3615, %v3747
        %3749 = vmatprep.mubr.bf16.mxu0 %v527
        %3750 = vmatmul.mubr.bf16.gmra.mxu0 %v526
        %v3751 = vpop.f32.mrf.mxu0
        %v3752 = vadd.f32 %v3619, %v3751
        %v3753 = vpop.f32.mrf.mxu0
        %v3754 = vadd.f32 %v3621, %v3753
        %v3755 = vpop.f32.mrf.mxu0
        %v3756 = vadd.f32 %v3623, %v3755
        %v3757 = vpop.f32.mrf.mxu0
        %v3758 = vadd.f32 %v3625, %v3757
        %3759 = vmatprep.mubr.bf16.mxu0 %v535
        %3760 = vmatmul.mubr.bf16.gmra.mxu0 %v534
        %v3761 = vpop.f32.mrf.mxu0
        %v3762 = vadd.f32 %v3629, %v3761
        %v3763 = vpop.f32.mrf.mxu0
        %v3764 = vadd.f32 %v3631, %v3763
        %v3765 = vpop.f32.mrf.mxu0
        %v3766 = vadd.f32 %v3633, %v3765
        %v3767 = vpop.f32.mrf.mxu0
        %v3768 = vadd.f32 %v3635, %v3767
        %3769 = vdwg.mxu0
        %3770 = vmatprep.subr.bf16.mxu0 %v2441
        %3771 = vmatpush1.bf16.msra.mxu0 %v2440
        %3772 = vmatprep.subr.bf16.mxu0 %v2435
        %3773 = vmatpush1.bf16.msra.mxu0 %v2434
        %3774 = vmatprep.subr.bf16.mxu0 %v2429
        %3775 = vmatpush1.bf16.msra.mxu0 %v2428
        %3776 = vmatprep.subr.bf16.mxu0 %v2423
        %3777 = vmatpush1.bf16.msra.mxu0 %v2422
        %3778 = vmatprep.subr.bf16.mxu0 %v2417
        %3779 = vmatpush1.bf16.msra.mxu0 %v2416
        %3780 = vmatprep.subr.bf16.mxu0 %v2411
        %3781 = vmatpush1.bf16.msra.mxu0 %v2410
        %3782 = vmatprep.subr.bf16.mxu0 %v2405
        %3783 = vmatpush1.bf16.msra.mxu0 %v2404
        %3784 = vmatprep.subr.bf16.mxu0 %v2399
        %3785 = vmatpush1.bf16.msra.mxu0 %v2398
        %3786 = vmatprep.subr.bf16.mxu0 %v2489
        %3787 = vmatpush2.bf16.msra.mxu0 %v2488
        %3788 = vmatprep.subr.bf16.mxu0 %v2483
        %3789 = vmatpush2.bf16.msra.mxu0 %v2482
        %3790 = vmatprep.subr.bf16.mxu0 %v2477
        %3791 = vmatpush2.bf16.msra.mxu0 %v2476
        %3792 = vmatprep.subr.bf16.mxu0 %v2471
        %3793 = vmatpush2.bf16.msra.mxu0 %v2470
        %3794 = vmatprep.subr.bf16.mxu0 %v2465
        %3795 = vmatpush2.bf16.msra.mxu0 %v2464
        %3796 = vmatprep.subr.bf16.mxu0 %v2459
        %3797 = vmatpush2.bf16.msra.mxu0 %v2458
        %3798 = vmatprep.subr.bf16.mxu0 %v2453
        %3799 = vmatpush2.bf16.msra.mxu0 %v2452
        %3800 = vmatprep.subr.bf16.mxu0 %v2447
        %3801 = vmatpush2.bf16.msra.mxu0 %v2446
        %3802 = vmatprep.mubr.bf16.mxu0 %v465
        %3803 = vmatmul.mubr.bf16.gmra.mxu0 %v464
        %v3804 = vpop.f32.mrf.mxu0
        %v3805 = vadd.f32 %v3672, %v3804
        %v3806 = vpop.f32.mrf.mxu0
        %v3807 = vadd.f32 %v3674, %v3806
        %v3808 = vpop.f32.mrf.mxu0
        %v3809 = vadd.f32 %v3676, %v3808
        %v3810 = vpop.f32.mrf.mxu0
        %v3811 = vadd.f32 %v3678, %v3810
        %3812 = vmatprep.mubr.bf16.mxu0 %v473
        %3813 = vmatmul.mubr.bf16.gmra.mxu0 %v472
        %v3814 = vpop.f32.mrf.mxu0
        %v3815 = vadd.f32 %v3682, %v3814
        %v3816 = vpop.f32.mrf.mxu0
        %v3817 = vadd.f32 %v3684, %v3816
        %v3818 = vpop.f32.mrf.mxu0
        %v3819 = vadd.f32 %v3686, %v3818
        %v3820 = vpop.f32.mrf.mxu0
        %v3821 = vadd.f32 %v3688, %v3820
        %3822 = vmatprep.mubr.bf16.mxu0 %v481
        %3823 = vmatmul.mubr.bf16.gmra.mxu0 %v480
        %v3824 = vpop.f32.mrf.mxu0
        %v3825 = vadd.f32 %v3692, %v3824
        %v3826 = vpop.f32.mrf.mxu0
        %v3827 = vadd.f32 %v3694, %v3826
        %v3828 = vpop.f32.mrf.mxu0
        %v3829 = vadd.f32 %v3696, %v3828
        %v3830 = vpop.f32.mrf.mxu0
        %v3831 = vadd.f32 %v3698, %v3830
        %3832 = vmatprep.mubr.bf16.mxu0 %v489
        %3833 = vmatmul.mubr.bf16.gmra.mxu0 %v488
        %v3834 = vpop.f32.mrf.mxu0
        %v3835 = vadd.f32 %v3702, %v3834
        %v3836 = vpop.f32.mrf.mxu0
        %v3837 = vadd.f32 %v3704, %v3836
        %v3838 = vpop.f32.mrf.mxu0
        %v3839 = vadd.f32 %v3706, %v3838
        %v3840 = vpop.f32.mrf.mxu0
        %v3841 = vadd.f32 %v3708, %v3840
        %3842 = vmatprep.mubr.bf16.mxu0 %v497
        %3843 = vmatmul.mubr.bf16.gmra.mxu0 %v496
        %v3844 = vpop.f32.mrf.mxu0
        %v3845 = vadd.f32 %v3712, %v3844
        %v3846 = vpop.f32.mrf.mxu0
        %v3847 = vadd.f32 %v3714, %v3846
        %v3848 = vpop.f32.mrf.mxu0
        %v3849 = vadd.f32 %v3716, %v3848
        %v3850 = vpop.f32.mrf.mxu0
        %v3851 = vadd.f32 %v3718, %v3850
        %3852 = vmatprep.mubr.bf16.mxu0 %v505
        %3853 = vmatmul.mubr.bf16.gmra.mxu0 %v504
        %v3854 = vpop.f32.mrf.mxu0
        %v3855 = vadd.f32 %v3722, %v3854
        %v3856 = vpop.f32.mrf.mxu0
        %v3857 = vadd.f32 %v3724, %v3856
        %v3858 = vpop.f32.mrf.mxu0
        %v3859 = vadd.f32 %v3726, %v3858
        %v3860 = vpop.f32.mrf.mxu0
        %v3861 = vadd.f32 %v3728, %v3860
        %3862 = vmatprep.mubr.bf16.mxu0 %v513
        %3863 = vmatmul.mubr.bf16.gmra.mxu0 %v512
        %v3864 = vpop.f32.mrf.mxu0
        %v3865 = vadd.f32 %v3732, %v3864
        %v3866 = vpop.f32.mrf.mxu0
        %v3867 = vadd.f32 %v3734, %v3866
        %v3868 = vpop.f32.mrf.mxu0
        %v3869 = vadd.f32 %v3736, %v3868
        %v3870 = vpop.f32.mrf.mxu0
        %v3871 = vadd.f32 %v3738, %v3870
        %3872 = vmatprep.mubr.bf16.mxu0 %v521
        %3873 = vmatmul.mubr.bf16.gmra.mxu0 %v520
        %v3874 = vpop.f32.mrf.mxu0
        %v3875 = vadd.f32 %v3742, %v3874
        %v3876 = vpop.f32.mrf.mxu0
        %v3877 = vadd.f32 %v3744, %v3876
        %v3878 = vpop.f32.mrf.mxu0
        %v3879 = vadd.f32 %v3746, %v3878
        %v3880 = vpop.f32.mrf.mxu0
        %v3881 = vadd.f32 %v3748, %v3880
        %3882 = vmatprep.mubr.bf16.mxu0 %v529
        %3883 = vmatmul.mubr.bf16.gmra.mxu0 %v528
        %v3884 = vpop.f32.mrf.mxu0
        %v3885 = vadd.f32 %v3752, %v3884
        %v3886 = vpop.f32.mrf.mxu0
        %v3887 = vadd.f32 %v3754, %v3886
        %v3888 = vpop.f32.mrf.mxu0
        %v3889 = vadd.f32 %v3756, %v3888
        %v3890 = vpop.f32.mrf.mxu0
        %v3891 = vadd.f32 %v3758, %v3890
        %3892 = vmatprep.mubr.bf16.mxu0 %v537
        %3893 = vmatmul.mubr.bf16.gmra.mxu0 %v536
        %v3894 = vpop.f32.mrf.mxu0
        %v3895 = vadd.f32 %v3762, %v3894
        %v3896 = vpop.f32.mrf.mxu0
        %v3897 = vadd.f32 %v3764, %v3896
        %v3898 = vpop.f32.mrf.mxu0
        %v3899 = vadd.f32 %v3766, %v3898
        %v3900 = vpop.f32.mrf.mxu0
        %v3901 = vadd.f32 %v3768, %v3900
        %3902 = vdwg.mxu0
        %3903 = vmatprep.subr.bf16.mxu0 %v2537
        %3904 = vmatpush1.bf16.msra.mxu0 %v2536
        %3905 = vmatprep.subr.bf16.mxu0 %v2531
        %3906 = vmatpush1.bf16.msra.mxu0 %v2530
        %3907 = vmatprep.subr.bf16.mxu0 %v2525
        %3908 = vmatpush1.bf16.msra.mxu0 %v2524
        %3909 = vmatprep.subr.bf16.mxu0 %v2519
        %3910 = vmatpush1.bf16.msra.mxu0 %v2518
        %3911 = vmatprep.subr.bf16.mxu0 %v2513
        %3912 = vmatpush1.bf16.msra.mxu0 %v2512
        %3913 = vmatprep.subr.bf16.mxu0 %v2507
        %3914 = vmatpush1.bf16.msra.mxu0 %v2506
        %3915 = vmatprep.subr.bf16.mxu0 %v2501
        %3916 = vmatpush1.bf16.msra.mxu0 %v2500
        %3917 = vmatprep.subr.bf16.mxu0 %v2495
        %3918 = vmatpush1.bf16.msra.mxu0 %v2494
        %3919 = vmatprep.subr.bf16.mxu0 %v2585
        %3920 = vmatpush2.bf16.msra.mxu0 %v2584
        %3921 = vmatprep.subr.bf16.mxu0 %v2579
        %3922 = vmatpush2.bf16.msra.mxu0 %v2578
        %3923 = vmatprep.subr.bf16.mxu0 %v2573
        %3924 = vmatpush2.bf16.msra.mxu0 %v2572
        %3925 = vmatprep.subr.bf16.mxu0 %v2567
        %3926 = vmatpush2.bf16.msra.mxu0 %v2566
        %3927 = vmatprep.subr.bf16.mxu0 %v2561
        %3928 = vmatpush2.bf16.msra.mxu0 %v2560
        %3929 = vmatprep.subr.bf16.mxu0 %v2555
        %3930 = vmatpush2.bf16.msra.mxu0 %v2554
        %3931 = vmatprep.subr.bf16.mxu0 %v2549
        %3932 = vmatpush2.bf16.msra.mxu0 %v2548
        %3933 = vmatprep.subr.bf16.mxu0 %v2543
        %3934 = vmatpush2.bf16.msra.mxu0 %v2542
        %3935 = vmatprep.mubr.bf16.mxu0 %v467
        %3936 = vmatmul.mubr.bf16.gmra.mxu0 %v466
        %v3937 = vpop.f32.mrf.mxu0
        %v3938 = vadd.f32 %v3805, %v3937
        %v3939 = vpop.f32.mrf.mxu0
        %v3940 = vadd.f32 %v3807, %v3939
        %v3941 = vpop.f32.mrf.mxu0
        %v3942 = vadd.f32 %v3809, %v3941
        %v3943 = vpop.f32.mrf.mxu0
        %v3944 = vadd.f32 %v3811, %v3943
        %3945 = vmatprep.mubr.bf16.mxu0 %v475
        %3946 = vmatmul.mubr.bf16.gmra.mxu0 %v474
        %v3947 = vpop.f32.mrf.mxu0
        %v3948 = vadd.f32 %v3815, %v3947
        %v3949 = vpop.f32.mrf.mxu0
        %v3950 = vadd.f32 %v3817, %v3949
        %v3951 = vpop.f32.mrf.mxu0
        %v3952 = vadd.f32 %v3819, %v3951
        %v3953 = vpop.f32.mrf.mxu0
        %v3954 = vadd.f32 %v3821, %v3953
        %3955 = vmatprep.mubr.bf16.mxu0 %v483
        %3956 = vmatmul.mubr.bf16.gmra.mxu0 %v482
        %v3957 = vpop.f32.mrf.mxu0
        %v3958 = vadd.f32 %v3825, %v3957
        %v3959 = vpop.f32.mrf.mxu0
        %v3960 = vadd.f32 %v3827, %v3959
        %v3961 = vpop.f32.mrf.mxu0
        %v3962 = vadd.f32 %v3829, %v3961
        %v3963 = vpop.f32.mrf.mxu0
        %v3964 = vadd.f32 %v3831, %v3963
        %3965 = vmatprep.mubr.bf16.mxu0 %v491
        %3966 = vmatmul.mubr.bf16.gmra.mxu0 %v490
        %v3967 = vpop.f32.mrf.mxu0
        %v3968 = vadd.f32 %v3835, %v3967
        %v3969 = vpop.f32.mrf.mxu0
        %v3970 = vadd.f32 %v3837, %v3969
        %v3971 = vpop.f32.mrf.mxu0
        %v3972 = vadd.f32 %v3839, %v3971
        %v3973 = vpop.f32.mrf.mxu0
        %v3974 = vadd.f32 %v3841, %v3973
        %3975 = vmatprep.mubr.bf16.mxu0 %v499
        %3976 = vmatmul.mubr.bf16.gmra.mxu0 %v498
        %v3977 = vpop.f32.mrf.mxu0
        %v3978 = vadd.f32 %v3845, %v3977
        %v3979 = vpop.f32.mrf.mxu0
        %v3980 = vadd.f32 %v3847, %v3979
        %v3981 = vpop.f32.mrf.mxu0
        %v3982 = vadd.f32 %v3849, %v3981
        %v3983 = vpop.f32.mrf.mxu0
        %v3984 = vadd.f32 %v3851, %v3983
        %3985 = vmatprep.mubr.bf16.mxu0 %v507
        %3986 = vmatmul.mubr.bf16.gmra.mxu0 %v506
        %v3987 = vpop.f32.mrf.mxu0
        %v3988 = vadd.f32 %v3855, %v3987
        %v3989 = vpop.f32.mrf.mxu0
        %v3990 = vadd.f32 %v3857, %v3989
        %v3991 = vpop.f32.mrf.mxu0
        %v3992 = vadd.f32 %v3859, %v3991
        %v3993 = vpop.f32.mrf.mxu0
        %v3994 = vadd.f32 %v3861, %v3993
        %3995 = vmatprep.mubr.bf16.mxu0 %v515
        %3996 = vmatmul.mubr.bf16.gmra.mxu0 %v514
        %v3997 = vpop.f32.mrf.mxu0
        %v3998 = vadd.f32 %v3865, %v3997
        %v3999 = vpop.f32.mrf.mxu0
        %v4000 = vadd.f32 %v3867, %v3999
        %v4001 = vpop.f32.mrf.mxu0
        %v4002 = vadd.f32 %v3869, %v4001
        %v4003 = vpop.f32.mrf.mxu0
        %v4004 = vadd.f32 %v3871, %v4003
        %4005 = vmatprep.mubr.bf16.mxu0 %v523
        %4006 = vmatmul.mubr.bf16.gmra.mxu0 %v522
        %v4007 = vpop.f32.mrf.mxu0
        %v4008 = vadd.f32 %v3875, %v4007
        %v4009 = vpop.f32.mrf.mxu0
        %v4010 = vadd.f32 %v3877, %v4009
        %v4011 = vpop.f32.mrf.mxu0
        %v4012 = vadd.f32 %v3879, %v4011
        %v4013 = vpop.f32.mrf.mxu0
        %v4014 = vadd.f32 %v3881, %v4013
        %4015 = vmatprep.mubr.bf16.mxu0 %v531
        %4016 = vmatmul.mubr.bf16.gmra.mxu0 %v530
        %v4017 = vpop.f32.mrf.mxu0
        %v4018 = vadd.f32 %v3885, %v4017
        %v4019 = vpop.f32.mrf.mxu0
        %v4020 = vadd.f32 %v3887, %v4019
        %v4021 = vpop.f32.mrf.mxu0
        %v4022 = vadd.f32 %v3889, %v4021
        %v4023 = vpop.f32.mrf.mxu0
        %v4024 = vadd.f32 %v3891, %v4023
        %4025 = vmatprep.mubr.bf16.mxu0 %v539
        %4026 = vmatmul.mubr.bf16.gmra.mxu0 %v538
        %v4027 = vpop.f32.mrf.mxu0
        %v4028 = vadd.f32 %v3895, %v4027
        %v4029 = vpop.f32.mrf.mxu0
        %v4030 = vadd.f32 %v3897, %v4029
        %v4031 = vpop.f32.mrf.mxu0
        %v4032 = vadd.f32 %v3899, %v4031
        %v4033 = vpop.f32.mrf.mxu0
        %v4034 = vadd.f32 %v3901, %v4033
        %4035 = vdwg.mxu0
        %4036 = vmatprep.subr.bf16.mxu0 %v2251
        %4037 = vmatpush1.bf16.msra.mxu0 %v2250
        %4038 = vmatprep.subr.bf16.mxu0 %v2245
        %4039 = vmatpush1.bf16.msra.mxu0 %v2244
        %4040 = vmatprep.subr.bf16.mxu0 %v2239
        %4041 = vmatpush1.bf16.msra.mxu0 %v2238
        %4042 = vmatprep.subr.bf16.mxu0 %v2233
        %4043 = vmatpush1.bf16.msra.mxu0 %v2232
        %4044 = vmatprep.subr.bf16.mxu0 %v2227
        %4045 = vmatpush1.bf16.msra.mxu0 %v2226
        %4046 = vmatprep.subr.bf16.mxu0 %v2221
        %4047 = vmatpush1.bf16.msra.mxu0 %v2220
        %4048 = vmatprep.subr.bf16.mxu0 %v2215
        %4049 = vmatpush1.bf16.msra.mxu0 %v2214
        %4050 = vmatprep.subr.bf16.mxu0 %v2209
        %4051 = vmatpush1.bf16.msra.mxu0 %v2208
        %4052 = vmatprep.subr.bf16.mxu0 %v2299
        %4053 = vmatpush2.bf16.msra.mxu0 %v2298
        %4054 = vmatprep.subr.bf16.mxu0 %v2293
        %4055 = vmatpush2.bf16.msra.mxu0 %v2292
        %4056 = vmatprep.subr.bf16.mxu0 %v2287
        %4057 = vmatpush2.bf16.msra.mxu0 %v2286
        %4058 = vmatprep.subr.bf16.mxu0 %v2281
        %4059 = vmatpush2.bf16.msra.mxu0 %v2280
        %4060 = vmatprep.subr.bf16.mxu0 %v2275
        %4061 = vmatpush2.bf16.msra.mxu0 %v2274
        %4062 = vmatprep.subr.bf16.mxu0 %v2269
        %4063 = vmatpush2.bf16.msra.mxu0 %v2268
        %4064 = vmatprep.subr.bf16.mxu0 %v2263
        %4065 = vmatpush2.bf16.msra.mxu0 %v2262
        %4066 = vmatprep.subr.bf16.mxu0 %v2257
        %4067 = vmatpush2.bf16.msra.mxu0 %v2256
        %4068 = vmatprep.mubr.bf16.mxu0 %v461
        %4069 = vmatmul.mubr.bf16.gmra.mxu0 %v460
        %v4070 = vpop.f32.mrf.mxu0
        %v4071 = vadd.f32 %v1041, %v4070
        %v4072 = vpop.f32.mrf.mxu0
        %v4073 = vadd.f32 %v1045, %v4072
        %v4074 = vpop.f32.mrf.mxu0
        %v4075 = vadd.f32 %v1041, %v4074
        %v4076 = vpop.f32.mrf.mxu0
        %v4077 = vadd.f32 %v1045, %v4076
        %4078 = vmatprep.mubr.bf16.mxu0 %v469
        %4079 = vmatmul.mubr.bf16.gmra.mxu0 %v468
        %v4080 = vpop.f32.mrf.mxu0
        %v4081 = vadd.f32 %v1041, %v4080
        %v4082 = vpop.f32.mrf.mxu0
        %v4083 = vadd.f32 %v1045, %v4082
        %v4084 = vpop.f32.mrf.mxu0
        %v4085 = vadd.f32 %v1041, %v4084
        %v4086 = vpop.f32.mrf.mxu0
        %v4087 = vadd.f32 %v1045, %v4086
        %4088 = vmatprep.mubr.bf16.mxu0 %v477
        %4089 = vmatmul.mubr.bf16.gmra.mxu0 %v476
        %v4090 = vpop.f32.mrf.mxu0
        %v4091 = vadd.f32 %v1041, %v4090
        %v4092 = vpop.f32.mrf.mxu0
        %v4093 = vadd.f32 %v1045, %v4092
        %v4094 = vpop.f32.mrf.mxu0
        %v4095 = vadd.f32 %v1041, %v4094
        %v4096 = vpop.f32.mrf.mxu0
        %v4097 = vadd.f32 %v1045, %v4096
        %4098 = vmatprep.mubr.bf16.mxu0 %v485
        %4099 = vmatmul.mubr.bf16.gmra.mxu0 %v484
        %v4100 = vpop.f32.mrf.mxu0
        %v4101 = vadd.f32 %v1041, %v4100
        %v4102 = vpop.f32.mrf.mxu0
        %v4103 = vadd.f32 %v1045, %v4102
        %v4104 = vpop.f32.mrf.mxu0
        %v4105 = vadd.f32 %v1041, %v4104
        %v4106 = vpop.f32.mrf.mxu0
        %v4107 = vadd.f32 %v1045, %v4106
        %4108 = vmatprep.mubr.bf16.mxu0 %v493
        %4109 = vmatmul.mubr.bf16.gmra.mxu0 %v492
        %v4110 = vpop.f32.mrf.mxu0
        %v4111 = vadd.f32 %v1041, %v4110
        %v4112 = vpop.f32.mrf.mxu0
        %v4113 = vadd.f32 %v1045, %v4112
        %v4114 = vpop.f32.mrf.mxu0
        %v4115 = vadd.f32 %v1041, %v4114
        %v4116 = vpop.f32.mrf.mxu0
        %v4117 = vadd.f32 %v1045, %v4116
        %4118 = vmatprep.mubr.bf16.mxu0 %v501
        %4119 = vmatmul.mubr.bf16.gmra.mxu0 %v500
        %v4120 = vpop.f32.mrf.mxu0
        %v4121 = vadd.f32 %v1041, %v4120
        %v4122 = vpop.f32.mrf.mxu0
        %v4123 = vadd.f32 %v1045, %v4122
        %v4124 = vpop.f32.mrf.mxu0
        %v4125 = vadd.f32 %v1041, %v4124
        %v4126 = vpop.f32.mrf.mxu0
        %v4127 = vadd.f32 %v1045, %v4126
        %4128 = vmatprep.mubr.bf16.mxu0 %v509
        %4129 = vmatmul.mubr.bf16.gmra.mxu0 %v508
        %v4130 = vpop.f32.mrf.mxu0
        %v4131 = vadd.f32 %v1041, %v4130
        %v4132 = vpop.f32.mrf.mxu0
        %v4133 = vadd.f32 %v1045, %v4132
        %v4134 = vpop.f32.mrf.mxu0
        %v4135 = vadd.f32 %v1041, %v4134
        %v4136 = vpop.f32.mrf.mxu0
        %v4137 = vadd.f32 %v1045, %v4136
        %4138 = vmatprep.mubr.bf16.mxu0 %v517
        %4139 = vmatmul.mubr.bf16.gmra.mxu0 %v516
        %v4140 = vpop.f32.mrf.mxu0
        %v4141 = vadd.f32 %v1041, %v4140
        %v4142 = vpop.f32.mrf.mxu0
        %v4143 = vadd.f32 %v1045, %v4142
        %v4144 = vpop.f32.mrf.mxu0
        %v4145 = vadd.f32 %v1041, %v4144
        %v4146 = vpop.f32.mrf.mxu0
        %v4147 = vadd.f32 %v1045, %v4146
        %4148 = vmatprep.mubr.bf16.mxu0 %v525
        %4149 = vmatmul.mubr.bf16.gmra.mxu0 %v524
        %v4150 = vpop.f32.mrf.mxu0
        %v4151 = vadd.f32 %v1041, %v4150
        %v4152 = vpop.f32.mrf.mxu0
        %v4153 = vadd.f32 %v1045, %v4152
        %v4154 = vpop.f32.mrf.mxu0
        %v4155 = vadd.f32 %v1041, %v4154
        %v4156 = vpop.f32.mrf.mxu0
        %v4157 = vadd.f32 %v1045, %v4156
        %4158 = vmatprep.mubr.bf16.mxu0 %v533
        %4159 = vmatmul.mubr.bf16.gmra.mxu0 %v532
        %v4160 = vpop.f32.mrf.mxu0
        %v4161 = vadd.f32 %v1041, %v4160
        %v4162 = vpop.f32.mrf.mxu0
        %v4163 = vadd.f32 %v1045, %v4162
        %v4164 = vpop.f32.mrf.mxu0
        %v4165 = vadd.f32 %v1041, %v4164
        %v4166 = vpop.f32.mrf.mxu0
        %v4167 = vadd.f32 %v1045, %v4166
        %4168 = vdwg.mxu0
        %4169 = vmatprep.subr.bf16.mxu0 %v2347
        %4170 = vmatpush1.bf16.msra.mxu0 %v2346
        %4171 = vmatprep.subr.bf16.mxu0 %v2341
        %4172 = vmatpush1.bf16.msra.mxu0 %v2340
        %4173 = vmatprep.subr.bf16.mxu0 %v2335
        %4174 = vmatpush1.bf16.msra.mxu0 %v2334
        %4175 = vmatprep.subr.bf16.mxu0 %v2329
        %4176 = vmatpush1.bf16.msra.mxu0 %v2328
        %4177 = vmatprep.subr.bf16.mxu0 %v2323
        %4178 = vmatpush1.bf16.msra.mxu0 %v2322
        %4179 = vmatprep.subr.bf16.mxu0 %v2317
        %4180 = vmatpush1.bf16.msra.mxu0 %v2316
        %4181 = vmatprep.subr.bf16.mxu0 %v2311
        %4182 = vmatpush1.bf16.msra.mxu0 %v2310
        %4183 = vmatprep.subr.bf16.mxu0 %v2305
        %4184 = vmatpush1.bf16.msra.mxu0 %v2304
        %4185 = vmatprep.subr.bf16.mxu0 %v2395
        %4186 = vmatpush2.bf16.msra.mxu0 %v2394
        %4187 = vmatprep.subr.bf16.mxu0 %v2389
        %4188 = vmatpush2.bf16.msra.mxu0 %v2388
        %4189 = vmatprep.subr.bf16.mxu0 %v2383
        %4190 = vmatpush2.bf16.msra.mxu0 %v2382
        %4191 = vmatprep.subr.bf16.mxu0 %v2377
        %4192 = vmatpush2.bf16.msra.mxu0 %v2376
        %4193 = vmatprep.subr.bf16.mxu0 %v2371
        %4194 = vmatpush2.bf16.msra.mxu0 %v2370
        %4195 = vmatprep.subr.bf16.mxu0 %v2365
        %4196 = vmatpush2.bf16.msra.mxu0 %v2364
        %4197 = vmatprep.subr.bf16.mxu0 %v2359
        %4198 = vmatpush2.bf16.msra.mxu0 %v2358
        %4199 = vmatprep.subr.bf16.mxu0 %v2353
        %4200 = vmatpush2.bf16.msra.mxu0 %v2352
        %4201 = vmatprep.mubr.bf16.mxu0 %v463
        %4202 = vmatmul.mubr.bf16.gmra.mxu0 %v462
        %v4203 = vpop.f32.mrf.mxu0
        %v4204 = vadd.f32 %v4071, %v4203
        %v4205 = vpop.f32.mrf.mxu0
        %v4206 = vadd.f32 %v4073, %v4205
        %v4207 = vpop.f32.mrf.mxu0
        %v4208 = vadd.f32 %v4075, %v4207
        %v4209 = vpop.f32.mrf.mxu0
        %v4210 = vadd.f32 %v4077, %v4209
        %4211 = vmatprep.mubr.bf16.mxu0 %v471
        %4212 = vmatmul.mubr.bf16.gmra.mxu0 %v470
        %v4213 = vpop.f32.mrf.mxu0
        %v4214 = vadd.f32 %v4081, %v4213
        %v4215 = vpop.f32.mrf.mxu0
        %v4216 = vadd.f32 %v4083, %v4215
        %v4217 = vpop.f32.mrf.mxu0
        %v4218 = vadd.f32 %v4085, %v4217
        %v4219 = vpop.f32.mrf.mxu0
        %v4220 = vadd.f32 %v4087, %v4219
        %4221 = vmatprep.mubr.bf16.mxu0 %v479
        %4222 = vmatmul.mubr.bf16.gmra.mxu0 %v478
        %v4223 = vpop.f32.mrf.mxu0
        %v4224 = vadd.f32 %v4091, %v4223
        %v4225 = vpop.f32.mrf.mxu0
        %v4226 = vadd.f32 %v4093, %v4225
        %v4227 = vpop.f32.mrf.mxu0
        %v4228 = vadd.f32 %v4095, %v4227
        %v4229 = vpop.f32.mrf.mxu0
        %v4230 = vadd.f32 %v4097, %v4229
        %4231 = vmatprep.mubr.bf16.mxu0 %v487
        %4232 = vmatmul.mubr.bf16.gmra.mxu0 %v486
        %v4233 = vpop.f32.mrf.mxu0
        %v4234 = vadd.f32 %v4101, %v4233
        %v4235 = vpop.f32.mrf.mxu0
        %v4236 = vadd.f32 %v4103, %v4235
        %v4237 = vpop.f32.mrf.mxu0
        %v4238 = vadd.f32 %v4105, %v4237
        %v4239 = vpop.f32.mrf.mxu0
        %v4240 = vadd.f32 %v4107, %v4239
        %4241 = vmatprep.mubr.bf16.mxu0 %v495
        %4242 = vmatmul.mubr.bf16.gmra.mxu0 %v494
        %v4243 = vpop.f32.mrf.mxu0
        %v4244 = vadd.f32 %v4111, %v4243
        %v4245 = vpop.f32.mrf.mxu0
        %v4246 = vadd.f32 %v4113, %v4245
        %v4247 = vpop.f32.mrf.mxu0
        %v4248 = vadd.f32 %v4115, %v4247
        %v4249 = vpop.f32.mrf.mxu0
        %v4250 = vadd.f32 %v4117, %v4249
        %4251 = vmatprep.mubr.bf16.mxu0 %v503
        %4252 = vmatmul.mubr.bf16.gmra.mxu0 %v502
        %v4253 = vpop.f32.mrf.mxu0
        %v4254 = vadd.f32 %v4121, %v4253
        %v4255 = vpop.f32.mrf.mxu0
        %v4256 = vadd.f32 %v4123, %v4255
        %v4257 = vpop.f32.mrf.mxu0
        %v4258 = vadd.f32 %v4125, %v4257
        %v4259 = vpop.f32.mrf.mxu0
        %v4260 = vadd.f32 %v4127, %v4259
        %4261 = vmatprep.mubr.bf16.mxu0 %v511
        %4262 = vmatmul.mubr.bf16.gmra.mxu0 %v510
        %v4263 = vpop.f32.mrf.mxu0
        %v4264 = vadd.f32 %v4131, %v4263
        %v4265 = vpop.f32.mrf.mxu0
        %v4266 = vadd.f32 %v4133, %v4265
        %v4267 = vpop.f32.mrf.mxu0
        %v4268 = vadd.f32 %v4135, %v4267
        %v4269 = vpop.f32.mrf.mxu0
        %v4270 = vadd.f32 %v4137, %v4269
        %4271 = vmatprep.mubr.bf16.mxu0 %v519
        %4272 = vmatmul.mubr.bf16.gmra.mxu0 %v518
        %v4273 = vpop.f32.mrf.mxu0
        %v4274 = vadd.f32 %v4141, %v4273
        %v4275 = vpop.f32.mrf.mxu0
        %v4276 = vadd.f32 %v4143, %v4275
        %v4277 = vpop.f32.mrf.mxu0
        %v4278 = vadd.f32 %v4145, %v4277
        %v4279 = vpop.f32.mrf.mxu0
        %v4280 = vadd.f32 %v4147, %v4279
        %4281 = vmatprep.mubr.bf16.mxu0 %v527
        %4282 = vmatmul.mubr.bf16.gmra.mxu0 %v526
        %v4283 = vpop.f32.mrf.mxu0
        %v4284 = vadd.f32 %v4151, %v4283
        %v4285 = vpop.f32.mrf.mxu0
        %v4286 = vadd.f32 %v4153, %v4285
        %v4287 = vpop.f32.mrf.mxu0
        %v4288 = vadd.f32 %v4155, %v4287
        %v4289 = vpop.f32.mrf.mxu0
        %v4290 = vadd.f32 %v4157, %v4289
        %4291 = vmatprep.mubr.bf16.mxu0 %v535
        %4292 = vmatmul.mubr.bf16.gmra.mxu0 %v534
        %v4293 = vpop.f32.mrf.mxu0
        %v4294 = vadd.f32 %v4161, %v4293
        %v4295 = vpop.f32.mrf.mxu0
        %v4296 = vadd.f32 %v4163, %v4295
        %v4297 = vpop.f32.mrf.mxu0
        %v4298 = vadd.f32 %v4165, %v4297
        %v4299 = vpop.f32.mrf.mxu0
        %v4300 = vadd.f32 %v4167, %v4299
        %4301 = vdwg.mxu0
        %4302 = vmatprep.subr.bf16.mxu0 %v2443
        %4303 = vmatpush1.bf16.msra.mxu0 %v2442
        %4304 = vmatprep.subr.bf16.mxu0 %v2437
        %4305 = vmatpush1.bf16.msra.mxu0 %v2436
        %4306 = vmatprep.subr.bf16.mxu0 %v2431
        %4307 = vmatpush1.bf16.msra.mxu0 %v2430
        %4308 = vmatprep.subr.bf16.mxu0 %v2425
        %4309 = vmatpush1.bf16.msra.mxu0 %v2424
        %4310 = vmatprep.subr.bf16.mxu0 %v2419
        %4311 = vmatpush1.bf16.msra.mxu0 %v2418
        %4312 = vmatprep.subr.bf16.mxu0 %v2413
        %4313 = vmatpush1.bf16.msra.mxu0 %v2412
        %4314 = vmatprep.subr.bf16.mxu0 %v2407
        %4315 = vmatpush1.bf16.msra.mxu0 %v2406
        %4316 = vmatprep.subr.bf16.mxu0 %v2401
        %4317 = vmatpush1.bf16.msra.mxu0 %v2400
        %4318 = vmatprep.subr.bf16.mxu0 %v2491
        %4319 = vmatpush2.bf16.msra.mxu0 %v2490
        %4320 = vmatprep.subr.bf16.mxu0 %v2485
        %4321 = vmatpush2.bf16.msra.mxu0 %v2484
        %4322 = vmatprep.subr.bf16.mxu0 %v2479
        %4323 = vmatpush2.bf16.msra.mxu0 %v2478
        %4324 = vmatprep.subr.bf16.mxu0 %v2473
        %4325 = vmatpush2.bf16.msra.mxu0 %v2472
        %4326 = vmatprep.subr.bf16.mxu0 %v2467
        %4327 = vmatpush2.bf16.msra.mxu0 %v2466
        %4328 = vmatprep.subr.bf16.mxu0 %v2461
        %4329 = vmatpush2.bf16.msra.mxu0 %v2460
        %4330 = vmatprep.subr.bf16.mxu0 %v2455
        %4331 = vmatpush2.bf16.msra.mxu0 %v2454
        %4332 = vmatprep.subr.bf16.mxu0 %v2449
        %4333 = vmatpush2.bf16.msra.mxu0 %v2448
        %4334 = vmatprep.mubr.bf16.mxu0 %v465
        %4335 = vmatmul.mubr.bf16.gmra.mxu0 %v464
        %v4336 = vpop.f32.mrf.mxu0
        %v4337 = vadd.f32 %v4204, %v4336
        %v4338 = vpop.f32.mrf.mxu0
        %v4339 = vadd.f32 %v4206, %v4338
        %v4340 = vpop.f32.mrf.mxu0
        %v4341 = vadd.f32 %v4208, %v4340
        %v4342 = vpop.f32.mrf.mxu0
        %v4343 = vadd.f32 %v4210, %v4342
        %4344 = vmatprep.mubr.bf16.mxu0 %v473
        %4345 = vmatmul.mubr.bf16.gmra.mxu0 %v472
        %v4346 = vpop.f32.mrf.mxu0
        %v4347 = vadd.f32 %v4214, %v4346
        %v4348 = vpop.f32.mrf.mxu0
        %v4349 = vadd.f32 %v4216, %v4348
        %v4350 = vpop.f32.mrf.mxu0
        %v4351 = vadd.f32 %v4218, %v4350
        %v4352 = vpop.f32.mrf.mxu0
        %v4353 = vadd.f32 %v4220, %v4352
        %4354 = vmatprep.mubr.bf16.mxu0 %v481
        %4355 = vmatmul.mubr.bf16.gmra.mxu0 %v480
        %v4356 = vpop.f32.mrf.mxu0
        %v4357 = vadd.f32 %v4224, %v4356
        %v4358 = vpop.f32.mrf.mxu0
        %v4359 = vadd.f32 %v4226, %v4358
        %v4360 = vpop.f32.mrf.mxu0
        %v4361 = vadd.f32 %v4228, %v4360
        %v4362 = vpop.f32.mrf.mxu0
        %v4363 = vadd.f32 %v4230, %v4362
        %4364 = vmatprep.mubr.bf16.mxu0 %v489
        %4365 = vmatmul.mubr.bf16.gmra.mxu0 %v488
        %v4366 = vpop.f32.mrf.mxu0
        %v4367 = vadd.f32 %v4234, %v4366
        %v4368 = vpop.f32.mrf.mxu0
        %v4369 = vadd.f32 %v4236, %v4368
        %v4370 = vpop.f32.mrf.mxu0
        %v4371 = vadd.f32 %v4238, %v4370
        %v4372 = vpop.f32.mrf.mxu0
        %v4373 = vadd.f32 %v4240, %v4372
        %4374 = vmatprep.mubr.bf16.mxu0 %v497
        %4375 = vmatmul.mubr.bf16.gmra.mxu0 %v496
        %v4376 = vpop.f32.mrf.mxu0
        %v4377 = vadd.f32 %v4244, %v4376
        %v4378 = vpop.f32.mrf.mxu0
        %v4379 = vadd.f32 %v4246, %v4378
        %v4380 = vpop.f32.mrf.mxu0
        %v4381 = vadd.f32 %v4248, %v4380
        %v4382 = vpop.f32.mrf.mxu0
        %v4383 = vadd.f32 %v4250, %v4382
        %4384 = vmatprep.mubr.bf16.mxu0 %v505
        %4385 = vmatmul.mubr.bf16.gmra.mxu0 %v504
        %v4386 = vpop.f32.mrf.mxu0
        %v4387 = vadd.f32 %v4254, %v4386
        %v4388 = vpop.f32.mrf.mxu0
        %v4389 = vadd.f32 %v4256, %v4388
        %v4390 = vpop.f32.mrf.mxu0
        %v4391 = vadd.f32 %v4258, %v4390
        %v4392 = vpop.f32.mrf.mxu0
        %v4393 = vadd.f32 %v4260, %v4392
        %4394 = vmatprep.mubr.bf16.mxu0 %v513
        %4395 = vmatmul.mubr.bf16.gmra.mxu0 %v512
        %v4396 = vpop.f32.mrf.mxu0
        %v4397 = vadd.f32 %v4264, %v4396
        %v4398 = vpop.f32.mrf.mxu0
        %v4399 = vadd.f32 %v4266, %v4398
        %v4400 = vpop.f32.mrf.mxu0
        %v4401 = vadd.f32 %v4268, %v4400
        %v4402 = vpop.f32.mrf.mxu0
        %v4403 = vadd.f32 %v4270, %v4402
        %4404 = vmatprep.mubr.bf16.mxu0 %v521
        %4405 = vmatmul.mubr.bf16.gmra.mxu0 %v520
        %v4406 = vpop.f32.mrf.mxu0
        %v4407 = vadd.f32 %v4274, %v4406
        %v4408 = vpop.f32.mrf.mxu0
        %v4409 = vadd.f32 %v4276, %v4408
        %v4410 = vpop.f32.mrf.mxu0
        %v4411 = vadd.f32 %v4278, %v4410
        %v4412 = vpop.f32.mrf.mxu0
        %v4413 = vadd.f32 %v4280, %v4412
        %4414 = vmatprep.mubr.bf16.mxu0 %v529
        %4415 = vmatmul.mubr.bf16.gmra.mxu0 %v528
        %v4416 = vpop.f32.mrf.mxu0
        %v4417 = vadd.f32 %v4284, %v4416
        %v4418 = vpop.f32.mrf.mxu0
        %v4419 = vadd.f32 %v4286, %v4418
        %v4420 = vpop.f32.mrf.mxu0
        %v4421 = vadd.f32 %v4288, %v4420
        %v4422 = vpop.f32.mrf.mxu0
        %v4423 = vadd.f32 %v4290, %v4422
        %4424 = vmatprep.mubr.bf16.mxu0 %v537
        %4425 = vmatmul.mubr.bf16.gmra.mxu0 %v536
        %v4426 = vpop.f32.mrf.mxu0
        %v4427 = vadd.f32 %v4294, %v4426
        %v4428 = vpop.f32.mrf.mxu0
        %v4429 = vadd.f32 %v4296, %v4428
        %v4430 = vpop.f32.mrf.mxu0
        %v4431 = vadd.f32 %v4298, %v4430
        %v4432 = vpop.f32.mrf.mxu0
        %v4433 = vadd.f32 %v4300, %v4432
        %4434 = vdwg.mxu0
        %4435 = vmatprep.subr.bf16.mxu0 %v2539
        %4436 = vmatpush1.bf16.msra.mxu0 %v2538
        %4437 = vmatprep.subr.bf16.mxu0 %v2533
        %4438 = vmatpush1.bf16.msra.mxu0 %v2532
        %4439 = vmatprep.subr.bf16.mxu0 %v2527
        %4440 = vmatpush1.bf16.msra.mxu0 %v2526
        %4441 = vmatprep.subr.bf16.mxu0 %v2521
        %4442 = vmatpush1.bf16.msra.mxu0 %v2520
        %4443 = vmatprep.subr.bf16.mxu0 %v2515
        %4444 = vmatpush1.bf16.msra.mxu0 %v2514
        %4445 = vmatprep.subr.bf16.mxu0 %v2509
        %4446 = vmatpush1.bf16.msra.mxu0 %v2508
        %4447 = vmatprep.subr.bf16.mxu0 %v2503
        %4448 = vmatpush1.bf16.msra.mxu0 %v2502
        %4449 = vmatprep.subr.bf16.mxu0 %v2497
        %4450 = vmatpush1.bf16.msra.mxu0 %v2496
        %4451 = vmatprep.subr.bf16.mxu0 %v2587
        %4452 = vmatpush2.bf16.msra.mxu0 %v2586
        %4453 = vmatprep.subr.bf16.mxu0 %v2581
        %4454 = vmatpush2.bf16.msra.mxu0 %v2580
        %4455 = vmatprep.subr.bf16.mxu0 %v2575
        %4456 = vmatpush2.bf16.msra.mxu0 %v2574
        %4457 = vmatprep.subr.bf16.mxu0 %v2569
        %4458 = vmatpush2.bf16.msra.mxu0 %v2568
        %4459 = vmatprep.subr.bf16.mxu0 %v2563
        %4460 = vmatpush2.bf16.msra.mxu0 %v2562
        %4461 = vmatprep.subr.bf16.mxu0 %v2557
        %4462 = vmatpush2.bf16.msra.mxu0 %v2556
        %4463 = vmatprep.subr.bf16.mxu0 %v2551
        %4464 = vmatpush2.bf16.msra.mxu0 %v2550
        %4465 = vmatprep.subr.bf16.mxu0 %v2545
        %4466 = vmatpush2.bf16.msra.mxu0 %v2544
        %4467 = vmatprep.mubr.bf16.mxu0 %v467
        %4468 = vmatmul.mubr.bf16.gmra.mxu0 %v466
        %v4469 = vpop.f32.mrf.mxu0
        %v4470 = vadd.f32 %v4337, %v4469
        %v4471 = vpop.f32.mrf.mxu0
        %v4472 = vadd.f32 %v4339, %v4471
        %v4473 = vpop.f32.mrf.mxu0
        %v4474 = vadd.f32 %v4341, %v4473
        %v4475 = vpop.f32.mrf.mxu0
        %v4476 = vadd.f32 %v4343, %v4475
        %4477 = vmatprep.mubr.bf16.mxu0 %v475
        %4478 = vmatmul.mubr.bf16.gmra.mxu0 %v474
        %v4479 = vpop.f32.mrf.mxu0
        %v4480 = vadd.f32 %v4347, %v4479
        %v4481 = vpop.f32.mrf.mxu0
        %v4482 = vadd.f32 %v4349, %v4481
        %v4483 = vpop.f32.mrf.mxu0
        %v4484 = vadd.f32 %v4351, %v4483
        %v4485 = vpop.f32.mrf.mxu0
        %v4486 = vadd.f32 %v4353, %v4485
        %4487 = vmatprep.mubr.bf16.mxu0 %v483
        %4488 = vmatmul.mubr.bf16.gmra.mxu0 %v482
        %v4489 = vpop.f32.mrf.mxu0
        %v4490 = vadd.f32 %v4357, %v4489
        %v4491 = vpop.f32.mrf.mxu0
        %v4492 = vadd.f32 %v4359, %v4491
        %v4493 = vpop.f32.mrf.mxu0
        %v4494 = vadd.f32 %v4361, %v4493
        %v4495 = vpop.f32.mrf.mxu0
        %v4496 = vadd.f32 %v4363, %v4495
        %4497 = vmatprep.mubr.bf16.mxu0 %v491
        %4498 = vmatmul.mubr.bf16.gmra.mxu0 %v490
        %v4499 = vpop.f32.mrf.mxu0
        %v4500 = vadd.f32 %v4367, %v4499
        %v4501 = vpop.f32.mrf.mxu0
        %v4502 = vadd.f32 %v4369, %v4501
        %v4503 = vpop.f32.mrf.mxu0
        %v4504 = vadd.f32 %v4371, %v4503
        %v4505 = vpop.f32.mrf.mxu0
        %v4506 = vadd.f32 %v4373, %v4505
        %4507 = vmatprep.mubr.bf16.mxu0 %v499
        %4508 = vmatmul.mubr.bf16.gmra.mxu0 %v498
        %v4509 = vpop.f32.mrf.mxu0
        %v4510 = vadd.f32 %v4377, %v4509
        %v4511 = vpop.f32.mrf.mxu0
        %v4512 = vadd.f32 %v4379, %v4511
        %v4513 = vpop.f32.mrf.mxu0
        %v4514 = vadd.f32 %v4381, %v4513
        %v4515 = vpop.f32.mrf.mxu0
        %v4516 = vadd.f32 %v4383, %v4515
        %4517 = vmatprep.mubr.bf16.mxu0 %v507
        %4518 = vmatmul.mubr.bf16.gmra.mxu0 %v506
        %v4519 = vpop.f32.mrf.mxu0
        %v4520 = vadd.f32 %v4387, %v4519
        %v4521 = vpop.f32.mrf.mxu0
        %v4522 = vadd.f32 %v4389, %v4521
        %v4523 = vpop.f32.mrf.mxu0
        %v4524 = vadd.f32 %v4391, %v4523
        %v4525 = vpop.f32.mrf.mxu0
        %v4526 = vadd.f32 %v4393, %v4525
        %4527 = vmatprep.mubr.bf16.mxu0 %v515
        %4528 = vmatmul.mubr.bf16.gmra.mxu0 %v514
        %v4529 = vpop.f32.mrf.mxu0
        %v4530 = vadd.f32 %v4397, %v4529
        %v4531 = vpop.f32.mrf.mxu0
        %v4532 = vadd.f32 %v4399, %v4531
        %v4533 = vpop.f32.mrf.mxu0
        %v4534 = vadd.f32 %v4401, %v4533
        %v4535 = vpop.f32.mrf.mxu0
        %v4536 = vadd.f32 %v4403, %v4535
        %4537 = vmatprep.mubr.bf16.mxu0 %v523
        %4538 = vmatmul.mubr.bf16.gmra.mxu0 %v522
        %v4539 = vpop.f32.mrf.mxu0
        %v4540 = vadd.f32 %v4407, %v4539
        %v4541 = vpop.f32.mrf.mxu0
        %v4542 = vadd.f32 %v4409, %v4541
        %v4543 = vpop.f32.mrf.mxu0
        %v4544 = vadd.f32 %v4411, %v4543
        %v4545 = vpop.f32.mrf.mxu0
        %v4546 = vadd.f32 %v4413, %v4545
        %4547 = vmatprep.mubr.bf16.mxu0 %v531
        %4548 = vmatmul.mubr.bf16.gmra.mxu0 %v530
        %v4549 = vpop.f32.mrf.mxu0
        %v4550 = vadd.f32 %v4417, %v4549
        %v4551 = vpop.f32.mrf.mxu0
        %v4552 = vadd.f32 %v4419, %v4551
        %v4553 = vpop.f32.mrf.mxu0
        %v4554 = vadd.f32 %v4421, %v4553
        %v4555 = vpop.f32.mrf.mxu0
        %v4556 = vadd.f32 %v4423, %v4555
        %4557 = vmatprep.mubr.bf16.mxu0 %v539
        %4558 = vmatmul.mubr.bf16.gmra.mxu0 %v538
        %v4559 = vpop.f32.mrf.mxu0
        %v4560 = vadd.f32 %v4427, %v4559
        %v4561 = vpop.f32.mrf.mxu0
        %v4562 = vadd.f32 %v4429, %v4561
        %v4563 = vpop.f32.mrf.mxu0
        %v4564 = vadd.f32 %v4431, %v4563
        %v4565 = vpop.f32.mrf.mxu0
        %v4566 = vadd.f32 %v4433, %v4565
        %4567 = vdwg.mxu0
        %v4568 = vmax.f32 %v3406, 0.0
        %v4569 = vmax.f32 %v3408, 0.0
        %v4570 = vmax.f32 %v3938, 0.0
        %v4571 = vmax.f32 %v3940, 0.0
        %v4572 = vmax.f32 %v4470, 0.0
        %v4573 = vmax.f32 %v4472, 0.0
        %v4574 = vmax.f32 %v3410, 0.0
        %v4575 = vmax.f32 %v3412, 0.0
        %v4576 = vmax.f32 %v3942, 0.0
        %v4577 = vmax.f32 %v3944, 0.0
        %v4578 = vmax.f32 %v4474, 0.0
        %v4579 = vmax.f32 %v4476, 0.0
        %v4580 = vmax.f32 %v3416, 0.0
        %v4581 = vmax.f32 %v3418, 0.0
        %v4582 = vmax.f32 %v3948, 0.0
        %v4583 = vmax.f32 %v3950, 0.0
        %v4584 = vmax.f32 %v4480, 0.0
        %v4585 = vmax.f32 %v4482, 0.0
        %v4586 = vmax.f32 %v3420, 0.0
        %v4587 = vmax.f32 %v3422, 0.0
        %v4588 = vmax.f32 %v3952, 0.0
        %v4589 = vmax.f32 %v3954, 0.0
        %v4590 = vmax.f32 %v4484, 0.0
        %v4591 = vmax.f32 %v4486, 0.0
        %v4592 = vmax.f32 %v3426, 0.0
        %v4593 = vmax.f32 %v3428, 0.0
        %v4594 = vmax.f32 %v3958, 0.0
        %v4595 = vmax.f32 %v3960, 0.0
        %v4596 = vmax.f32 %v4490, 0.0
        %v4597 = vmax.f32 %v4492, 0.0
        %v4598 = vmax.f32 %v3430, 0.0
        %v4599 = vmax.f32 %v3432, 0.0
        %v4600 = vmax.f32 %v3962, 0.0
        %v4601 = vmax.f32 %v3964, 0.0
        %v4602 = vmax.f32 %v4494, 0.0
        %v4603 = vmax.f32 %v4496, 0.0
        %v4604 = vmax.f32 %v3436, 0.0
        %v4605 = vmax.f32 %v3438, 0.0
        %v4606 = vmax.f32 %v3968, 0.0
        %v4607 = vmax.f32 %v3970, 0.0
        %v4608 = vmax.f32 %v4500, 0.0
        %v4609 = vmax.f32 %v4502, 0.0
        %v4610 = vmax.f32 %v3440, 0.0
        %v4611 = vmax.f32 %v3442, 0.0
        %v4612 = vmax.f32 %v3972, 0.0
        %v4613 = vmax.f32 %v3974, 0.0
        %v4614 = vmax.f32 %v4504, 0.0
        %v4615 = vmax.f32 %v4506, 0.0
        %v4616 = vmax.f32 %v3446, 0.0
        %v4617 = vmax.f32 %v3448, 0.0
        %v4618 = vmax.f32 %v3978, 0.0
        %v4619 = vmax.f32 %v3980, 0.0
        %v4620 = vmax.f32 %v4510, 0.0
        %v4621 = vmax.f32 %v4512, 0.0
        %v4622 = vmax.f32 %v3450, 0.0
        %v4623 = vmax.f32 %v3452, 0.0
        %v4624 = vmax.f32 %v3982, 0.0
        %v4625 = vmax.f32 %v3984, 0.0
        %v4626 = vmax.f32 %v4514, 0.0
        %v4627 = vmax.f32 %v4516, 0.0
        %v4628 = vmax.f32 %v3456, 0.0
        %v4629 = vmax.f32 %v3458, 0.0
        %v4630 = vmax.f32 %v3988, 0.0
        %v4631 = vmax.f32 %v3990, 0.0
        %v4632 = vmax.f32 %v4520, 0.0
        %v4633 = vmax.f32 %v4522, 0.0
        %v4634 = vmax.f32 %v3460, 0.0
        %v4635 = vmax.f32 %v3462, 0.0
        %v4636 = vmax.f32 %v3992, 0.0
        %v4637 = vmax.f32 %v3994, 0.0
        %v4638 = vmax.f32 %v4524, 0.0
        %v4639 = vmax.f32 %v4526, 0.0
        %v4640 = vmax.f32 %v3466, 0.0
        %v4641 = vmax.f32 %v3468, 0.0
        %v4642 = vmax.f32 %v3998, 0.0
        %v4643 = vmax.f32 %v4000, 0.0
        %v4644 = vmax.f32 %v4530, 0.0
        %v4645 = vmax.f32 %v4532, 0.0
        %v4646 = vmax.f32 %v3470, 0.0
        %v4647 = vmax.f32 %v3472, 0.0
        %v4648 = vmax.f32 %v4002, 0.0
        %v4649 = vmax.f32 %v4004, 0.0
        %v4650 = vmax.f32 %v4534, 0.0
        %v4651 = vmax.f32 %v4536, 0.0
        %v4652 = vmax.f32 %v3476, 0.0
        %v4653 = vmax.f32 %v3478, 0.0
        %v4654 = vmax.f32 %v4008, 0.0
        %v4655 = vmax.f32 %v4010, 0.0
        %v4656 = vmax.f32 %v4540, 0.0
        %v4657 = vmax.f32 %v4542, 0.0
        %v4658 = vmax.f32 %v3480, 0.0
        %v4659 = vmax.f32 %v3482, 0.0
        %v4660 = vmax.f32 %v4012, 0.0
        %v4661 = vmax.f32 %v4014, 0.0
        %v4662 = vmax.f32 %v4544, 0.0
        %v4663 = vmax.f32 %v4546, 0.0
        %v4664 = vmax.f32 %v3486, 0.0
        %v4665 = vmax.f32 %v3488, 0.0
        %v4666 = vmax.f32 %v4018, 0.0
        %v4667 = vmax.f32 %v4020, 0.0
        %v4668 = vmax.f32 %v4550, 0.0
        %v4669 = vmax.f32 %v4552, 0.0
        %v4670 = vmax.f32 %v3490, 0.0
        %v4671 = vmax.f32 %v3492, 0.0
        %v4672 = vmax.f32 %v4022, 0.0
        %v4673 = vmax.f32 %v4024, 0.0
        %v4674 = vmax.f32 %v4554, 0.0
        %v4675 = vmax.f32 %v4556, 0.0
        %v4676 = vmax.f32 %v3496, 0.0
        %v4677 = vmax.f32 %v3498, 0.0
        %v4678 = vmax.f32 %v4028, 0.0
        %v4679 = vmax.f32 %v4030, 0.0
        %v4680 = vmax.f32 %v4560, 0.0
        %v4681 = vmax.f32 %v4562, 0.0
        %v4682 = vmax.f32 %v3500, 0.0
        %v4683 = vmax.f32 %v3502, 0.0
        %v4684 = vmax.f32 %v4032, 0.0
        %v4685 = vmax.f32 %v4034, 0.0
        %v4686 = vmax.f32 %v4564, 0.0
        %v4687 = vmax.f32 %v4566, 0.0
        %v4688 = vpack.c.bf16 %v4574, %v4568
        %v4689 = vpack.c.bf16 %v4575, %v4569
        %v4690 = vpack.c.bf16 %v4576, %v4570
        %v4691 = vpack.c.bf16 %v4577, %v4571
        %v4692 = vpack.c.bf16 %v4578, %v4572
        %v4693 = vpack.c.bf16 %v4579, %v4573
        %v4694 = vpack.c.bf16 %v4586, %v4580
        %v4695 = vpack.c.bf16 %v4587, %v4581
        %v4696 = vpack.c.bf16 %v4588, %v4582
        %v4697 = vpack.c.bf16 %v4589, %v4583
        %v4698 = vpack.c.bf16 %v4590, %v4584
        %v4699 = vpack.c.bf16 %v4591, %v4585
        %v4700 = vpack.c.bf16 %v4598, %v4592
        %v4701 = vpack.c.bf16 %v4599, %v4593
        %v4702 = vpack.c.bf16 %v4600, %v4594
        %v4703 = vpack.c.bf16 %v4601, %v4595
        %v4704 = vpack.c.bf16 %v4602, %v4596
        %v4705 = vpack.c.bf16 %v4603, %v4597
        %v4706 = vpack.c.bf16 %v4610, %v4604
        %v4707 = vpack.c.bf16 %v4611, %v4605
        %v4708 = vpack.c.bf16 %v4612, %v4606
        %v4709 = vpack.c.bf16 %v4613, %v4607
        %v4710 = vpack.c.bf16 %v4614, %v4608
        %v4711 = vpack.c.bf16 %v4615, %v4609
        %v4712 = vpack.c.bf16 %v4622, %v4616
        %v4713 = vpack.c.bf16 %v4623, %v4617
        %v4714 = vpack.c.bf16 %v4624, %v4618
        %v4715 = vpack.c.bf16 %v4625, %v4619
        %v4716 = vpack.c.bf16 %v4626, %v4620
        %v4717 = vpack.c.bf16 %v4627, %v4621
        %v4718 = vpack.c.bf16 %v4634, %v4628
        %v4719 = vpack.c.bf16 %v4635, %v4629
        %v4720 = vpack.c.bf16 %v4636, %v4630
        %v4721 = vpack.c.bf16 %v4637, %v4631
        %v4722 = vpack.c.bf16 %v4638, %v4632
        %v4723 = vpack.c.bf16 %v4639, %v4633
        %v4724 = vpack.c.bf16 %v4646, %v4640
        %v4725 = vpack.c.bf16 %v4647, %v4641
        %v4726 = vpack.c.bf16 %v4648, %v4642
        %v4727 = vpack.c.bf16 %v4649, %v4643
        %v4728 = vpack.c.bf16 %v4650, %v4644
        %v4729 = vpack.c.bf16 %v4651, %v4645
        %v4730 = vpack.c.bf16 %v4658, %v4652
        %v4731 = vpack.c.bf16 %v4659, %v4653
        %v4732 = vpack.c.bf16 %v4660, %v4654
        %v4733 = vpack.c.bf16 %v4661, %v4655
        %v4734 = vpack.c.bf16 %v4662, %v4656
        %v4735 = vpack.c.bf16 %v4663, %v4657
        %v4736 = vpack.c.bf16 %v4670, %v4664
        %v4737 = vpack.c.bf16 %v4671, %v4665
        %v4738 = vpack.c.bf16 %v4672, %v4666
        %v4739 = vpack.c.bf16 %v4673, %v4667
        %v4740 = vpack.c.bf16 %v4674, %v4668
        %v4741 = vpack.c.bf16 %v4675, %v4669
        %v4742 = vpack.c.bf16 %v4682, %v4676
        %v4743 = vpack.c.bf16 %v4683, %v4677
        %v4744 = vpack.c.bf16 %v4684, %v4678
        %v4745 = vpack.c.bf16 %v4685, %v4679
        %v4746 = vpack.c.bf16 %v4686, %v4680
        %v4747 = vpack.c.bf16 %v4687, %v4681
        %v4748 = vld [vmem:[#allocation10] sm:$0x3]
        %v4750 = vlaneseq
        %v4751 = vshrl.u32 %v4750, 7
        %v4752 = vsub.s32 0, %v4751
        %v4753 = vrot.slane %v4748, %v4752
        %v4754 = vlaneseq
        %v4755 = vshrl.u32 %v4754, 7
        %v4756 = vsub.s32 1, %v4755
        %v4757 = vrot.slane %v4748, %v4756
        %v4856 = vunpack.c.l.b16 %v924
        %v4857 = vunpack.c.h.b16 %v924
        %v4858 = vunpack.c.l.b16 %v925
        %v4859 = vunpack.c.h.b16 %v925
        %v4860 = vunpack.c.l.b16 %v926
        %v4861 = vunpack.c.h.b16 %v926
        %v4862 = vunpack.c.l.b16 %v927
        %v4863 = vunpack.c.h.b16 %v927
        %v4864 = vunpack.c.l.b16 %v928
        %v4865 = vunpack.c.h.b16 %v928
        %v4866 = vunpack.c.l.b16 %v929
        %v4867 = vunpack.c.h.b16 %v929
        %v4868 = vunpack.c.l.b16 %v930
        %v4869 = vunpack.c.h.b16 %v930
        %v4870 = vunpack.c.l.b16 %v931
        %v4871 = vunpack.c.h.b16 %v931
        %v4872 = vunpack.c.l.b16 %v932
        %v4873 = vunpack.c.h.b16 %v932
        %v4874 = vunpack.c.l.b16 %v933
        %v4875 = vunpack.c.h.b16 %v933
        %v4876 = vunpack.c.l.b16 %v934
        %v4877 = vunpack.c.h.b16 %v934
        %v4878 = vunpack.c.l.b16 %v935
        %v4879 = vunpack.c.h.b16 %v935
        %v4880 = vunpack.c.l.b16 %v936
        %v4881 = vunpack.c.h.b16 %v936
        %v4882 = vunpack.c.l.b16 %v937
        %v4883 = vunpack.c.h.b16 %v937
        %v4884 = vunpack.c.l.b16 %v938
        %v4885 = vunpack.c.h.b16 %v938
        %v4886 = vunpack.c.l.b16 %v939
        %v4887 = vunpack.c.h.b16 %v939
        %v4888 = vunpack.c.l.b16 %v940
        %v4889 = vunpack.c.h.b16 %v940
        %v4890 = vunpack.c.l.b16 %v941
        %v4891 = vunpack.c.h.b16 %v941
        %v4892 = vunpack.c.l.b16 %v942
        %v4893 = vunpack.c.h.b16 %v942
        %v4894 = vunpack.c.l.b16 %v943
        %v4895 = vunpack.c.h.b16 %v943
        %v4896 = vunpack.c.l.b16 %v944
        %v4897 = vunpack.c.h.b16 %v944
        %v4898 = vunpack.c.l.b16 %v945
        %v4899 = vunpack.c.h.b16 %v945
        %v4900 = vunpack.c.l.b16 %v946
        %v4901 = vunpack.c.h.b16 %v946
        %v4902 = vunpack.c.l.b16 %v947
        %v4903 = vunpack.c.h.b16 %v947
        %v4904 = vunpack.c.l.b16 %v948
        %v4905 = vunpack.c.h.b16 %v948
        %v4906 = vunpack.c.l.b16 %v949
        %v4907 = vunpack.c.h.b16 %v949
        %v4908 = vunpack.c.l.b16 %v950
        %v4909 = vunpack.c.h.b16 %v950
        %v4910 = vunpack.c.l.b16 %v951
        %v4911 = vunpack.c.h.b16 %v951
        %v4912 = vunpack.c.l.b16 %v952
        %v4913 = vunpack.c.h.b16 %v952
        %v4914 = vunpack.c.l.b16 %v953
        %v4915 = vunpack.c.h.b16 %v953
        %v4916 = vunpack.c.l.b16 %v954
        %v4917 = vunpack.c.h.b16 %v954
        %v4918 = vunpack.c.l.b16 %v955
        %v4919 = vunpack.c.h.b16 %v955
        %v4920 = vunpack.c.l.b16 %v956
        %v4921 = vunpack.c.h.b16 %v956
        %v4922 = vunpack.c.l.b16 %v957
        %v4923 = vunpack.c.h.b16 %v957
        %v4924 = vunpack.c.l.b16 %v958
        %v4925 = vunpack.c.h.b16 %v958
        %v4926 = vunpack.c.l.b16 %v959
        %v4927 = vunpack.c.h.b16 %v959
        %v4928 = vunpack.c.l.b16 %v960
        %v4929 = vunpack.c.h.b16 %v960
        %v4930 = vunpack.c.l.b16 %v961
        %v4931 = vunpack.c.h.b16 %v961
        %v4932 = vunpack.c.l.b16 %v962
        %v4933 = vunpack.c.h.b16 %v962
        %v4934 = vunpack.c.l.b16 %v963
        %v4935 = vunpack.c.h.b16 %v963
        %v4936 = vunpack.c.l.b16 %v964
        %v4937 = vunpack.c.h.b16 %v964
        %v4938 = vunpack.c.l.b16 %v965
        %v4939 = vunpack.c.h.b16 %v965
        %v4940 = vunpack.c.l.b16 %v966
        %v4941 = vunpack.c.h.b16 %v966
        %v4942 = vunpack.c.l.b16 %v967
        %v4943 = vunpack.c.h.b16 %v967
        %v4944 = vunpack.c.l.b16 %v968
        %v4945 = vunpack.c.h.b16 %v968
        %v4946 = vunpack.c.l.b16 %v969
        %v4947 = vunpack.c.h.b16 %v969
        %v4948 = vunpack.c.l.b16 %v970
        %v4949 = vunpack.c.h.b16 %v970
        %v4950 = vunpack.c.l.b16 %v971
        %v4951 = vunpack.c.h.b16 %v971
        %v4952 = vunpack.c.l.b16 %v972
        %v4953 = vunpack.c.h.b16 %v972
        %v4954 = vunpack.c.l.b16 %v973
        %v4955 = vunpack.c.h.b16 %v973
        %v4956 = vunpack.c.l.b16 %v974
        %v4957 = vunpack.c.h.b16 %v974
        %v4958 = vunpack.c.l.b16 %v975
        %v4959 = vunpack.c.h.b16 %v975
        %v4960 = vunpack.c.l.b16 %v976
        %v4961 = vunpack.c.h.b16 %v976
        %v4962 = vunpack.c.l.b16 %v977
        %v4963 = vunpack.c.h.b16 %v977
        %v4964 = vunpack.c.l.b16 %v978
        %v4965 = vunpack.c.h.b16 %v978
        %v4966 = vunpack.c.l.b16 %v979
        %v4967 = vunpack.c.h.b16 %v979
        %v4968 = vunpack.c.l.b16 %v980
        %v4969 = vunpack.c.h.b16 %v980
        %v4970 = vunpack.c.l.b16 %v981
        %v4971 = vunpack.c.h.b16 %v981
        %v4972 = vunpack.c.l.b16 %v982
        %v4973 = vunpack.c.h.b16 %v982
        %v4974 = vunpack.c.l.b16 %v983
        %v4975 = vunpack.c.h.b16 %v983
        %v4976 = vunpack.c.l.b16 %v984
        %v4977 = vunpack.c.h.b16 %v984
        %v4978 = vunpack.c.l.b16 %v985
        %v4979 = vunpack.c.h.b16 %v985
        %v4980 = vunpack.c.l.b16 %v986
        %v4981 = vunpack.c.h.b16 %v986
        %v4982 = vunpack.c.l.b16 %v987
        %v4983 = vunpack.c.h.b16 %v987
        %v4984 = vunpack.c.l.b16 %v988
        %v4985 = vunpack.c.h.b16 %v988
        %v4986 = vunpack.c.l.b16 %v989
        %v4987 = vunpack.c.h.b16 %v989
        %v4988 = vunpack.c.l.b16 %v990
        %v4989 = vunpack.c.h.b16 %v990
        %v4990 = vunpack.c.l.b16 %v991
        %v4991 = vunpack.c.h.b16 %v991
        %v4992 = vunpack.c.l.b16 %v992
        %v4993 = vunpack.c.h.b16 %v992
        %v4994 = vunpack.c.l.b16 %v993
        %v4995 = vunpack.c.h.b16 %v993
        %v4996 = vunpack.c.l.b16 %v994
        %v4997 = vunpack.c.h.b16 %v994
        %v4998 = vunpack.c.l.b16 %v995
        %v4999 = vunpack.c.h.b16 %v995
        %v5000 = vunpack.c.l.b16 %v996
        %v5001 = vunpack.c.h.b16 %v996
        %v5002 = vunpack.c.l.b16 %v997
        %v5003 = vunpack.c.h.b16 %v997
        %v5004 = vunpack.c.l.b16 %v998
        %v5005 = vunpack.c.h.b16 %v998
        %v5006 = vunpack.c.l.b16 %v999
        %v5007 = vunpack.c.h.b16 %v999
        %v5008 = vunpack.c.l.b16 %v1000
        %v5009 = vunpack.c.h.b16 %v1000
        %v5010 = vunpack.c.l.b16 %v1001
        %v5011 = vunpack.c.h.b16 %v1001
        %v5012 = vunpack.c.l.b16 %v1002
        %v5013 = vunpack.c.h.b16 %v1002
        %v5014 = vunpack.c.l.b16 %v1003
        %v5015 = vunpack.c.h.b16 %v1003
        %v5016 = vunpack.c.l.b16 %v1004
        %v5017 = vunpack.c.h.b16 %v1004
        %v5018 = vunpack.c.l.b16 %v1005
        %v5019 = vunpack.c.h.b16 %v1005
        %v5020 = vunpack.c.l.b16 %v1006
        %v5021 = vunpack.c.h.b16 %v1006
        %v5022 = vunpack.c.l.b16 %v1007
        %v5023 = vunpack.c.h.b16 %v1007
        %v5024 = vunpack.c.l.b16 %v1008
        %v5025 = vunpack.c.h.b16 %v1008
        %v5026 = vunpack.c.l.b16 %v1009
        %v5027 = vunpack.c.h.b16 %v1009
        %v5028 = vunpack.c.l.b16 %v1010
        %v5029 = vunpack.c.h.b16 %v1010
        %v5030 = vunpack.c.l.b16 %v1011
        %v5031 = vunpack.c.h.b16 %v1011
        %v5032 = vunpack.c.l.b16 %v1012
        %v5033 = vunpack.c.h.b16 %v1012
        %v5034 = vunpack.c.l.b16 %v1013
        %v5035 = vunpack.c.h.b16 %v1013
        %v5036 = vunpack.c.l.b16 %v1014
        %v5037 = vunpack.c.h.b16 %v1014
        %v5038 = vunpack.c.l.b16 %v1015
        %v5039 = vunpack.c.h.b16 %v1015
        %v5040 = vunpack.c.l.b16 %v1016
        %v5041 = vunpack.c.h.b16 %v1016
        %v5042 = vunpack.c.l.b16 %v1017
        %v5043 = vunpack.c.h.b16 %v1017
        %v5044 = vunpack.c.l.b16 %v1018
        %v5045 = vunpack.c.h.b16 %v1018
        %v5046 = vunpack.c.l.b16 %v1019
        %v5047 = vunpack.c.h.b16 %v1019
        %v5048 = vpack.c.b16 %v4858, %v4856
        %v5049 = vpack.c.b16 %v4859, %v4857
        %v5050 = vpack.c.b16 %v4862, %v4860
        %v5051 = vpack.c.b16 %v4863, %v4861
        %v5052 = vpack.c.b16 %v4866, %v4864
        %v5053 = vpack.c.b16 %v4867, %v4865
        %v5054 = vpack.c.b16 %v4870, %v4868
        %v5055 = vpack.c.b16 %v4871, %v4869
        %v5056 = vpack.c.b16 %v4874, %v4872
        %v5057 = vpack.c.b16 %v4875, %v4873
        %v5058 = vpack.c.b16 %v4878, %v4876
        %v5059 = vpack.c.b16 %v4879, %v4877
        %v5060 = vpack.c.b16 %v4882, %v4880
        %v5061 = vpack.c.b16 %v4883, %v4881
        %v5062 = vpack.c.b16 %v4886, %v4884
        %v5063 = vpack.c.b16 %v4887, %v4885
        %v5064 = vpack.c.b16 %v4890, %v4888
        %v5065 = vpack.c.b16 %v4891, %v4889
        %v5066 = vpack.c.b16 %v4894, %v4892
        %v5067 = vpack.c.b16 %v4895, %v4893
        %v5068 = vpack.c.b16 %v4898, %v4896
        %v5069 = vpack.c.b16 %v4899, %v4897
        %v5070 = vpack.c.b16 %v4902, %v4900
        %v5071 = vpack.c.b16 %v4903, %v4901
        %v5072 = vpack.c.b16 %v4906, %v4904
        %v5073 = vpack.c.b16 %v4907, %v4905
        %v5074 = vpack.c.b16 %v4910, %v4908
        %v5075 = vpack.c.b16 %v4911, %v4909
        %v5076 = vpack.c.b16 %v4914, %v4912
        %v5077 = vpack.c.b16 %v4915, %v4913
        %v5078 = vpack.c.b16 %v4918, %v4916
        %v5079 = vpack.c.b16 %v4919, %v4917
        %v5080 = vpack.c.b16 %v4922, %v4920
        %v5081 = vpack.c.b16 %v4923, %v4921
        %v5082 = vpack.c.b16 %v4926, %v4924
        %v5083 = vpack.c.b16 %v4927, %v4925
        %v5084 = vpack.c.b16 %v4930, %v4928
        %v5085 = vpack.c.b16 %v4931, %v4929
        %v5086 = vpack.c.b16 %v4934, %v4932
        %v5087 = vpack.c.b16 %v4935, %v4933
        %v5088 = vpack.c.b16 %v4938, %v4936
        %v5089 = vpack.c.b16 %v4939, %v4937
        %v5090 = vpack.c.b16 %v4942, %v4940
        %v5091 = vpack.c.b16 %v4943, %v4941
        %v5092 = vpack.c.b16 %v4946, %v4944
        %v5093 = vpack.c.b16 %v4947, %v4945
        %v5094 = vpack.c.b16 %v4950, %v4948
        %v5095 = vpack.c.b16 %v4951, %v4949
        %v5096 = vpack.c.b16 %v4954, %v4952
        %v5097 = vpack.c.b16 %v4955, %v4953
        %v5098 = vpack.c.b16 %v4958, %v4956
        %v5099 = vpack.c.b16 %v4959, %v4957
        %v5100 = vpack.c.b16 %v4962, %v4960
        %v5101 = vpack.c.b16 %v4963, %v4961
        %v5102 = vpack.c.b16 %v4966, %v4964
        %v5103 = vpack.c.b16 %v4967, %v4965
        %v5104 = vpack.c.b16 %v4970, %v4968
        %v5105 = vpack.c.b16 %v4971, %v4969
        %v5106 = vpack.c.b16 %v4974, %v4972
        %v5107 = vpack.c.b16 %v4975, %v4973
        %v5108 = vpack.c.b16 %v4978, %v4976
        %v5109 = vpack.c.b16 %v4979, %v4977
        %v5110 = vpack.c.b16 %v4982, %v4980
        %v5111 = vpack.c.b16 %v4983, %v4981
        %v5112 = vpack.c.b16 %v4986, %v4984
        %v5113 = vpack.c.b16 %v4987, %v4985
        %v5114 = vpack.c.b16 %v4990, %v4988
        %v5115 = vpack.c.b16 %v4991, %v4989
        %v5116 = vpack.c.b16 %v4994, %v4992
        %v5117 = vpack.c.b16 %v4995, %v4993
        %v5118 = vpack.c.b16 %v4998, %v4996
        %v5119 = vpack.c.b16 %v4999, %v4997
        %v5120 = vpack.c.b16 %v5002, %v5000
        %v5121 = vpack.c.b16 %v5003, %v5001
        %v5122 = vpack.c.b16 %v5006, %v5004
        %v5123 = vpack.c.b16 %v5007, %v5005
        %v5124 = vpack.c.b16 %v5010, %v5008
        %v5125 = vpack.c.b16 %v5011, %v5009
        %v5126 = vpack.c.b16 %v5014, %v5012
        %v5127 = vpack.c.b16 %v5015, %v5013
        %v5128 = vpack.c.b16 %v5018, %v5016
        %v5129 = vpack.c.b16 %v5019, %v5017
        %v5130 = vpack.c.b16 %v5022, %v5020
        %v5131 = vpack.c.b16 %v5023, %v5021
        %v5132 = vpack.c.b16 %v5026, %v5024
        %v5133 = vpack.c.b16 %v5027, %v5025
        %v5134 = vpack.c.b16 %v5030, %v5028
        %v5135 = vpack.c.b16 %v5031, %v5029
        %v5136 = vpack.c.b16 %v5034, %v5032
        %v5137 = vpack.c.b16 %v5035, %v5033
        %v5138 = vpack.c.b16 %v5038, %v5036
        %v5139 = vpack.c.b16 %v5039, %v5037
        %v5140 = vpack.c.b16 %v5042, %v5040
        %v5141 = vpack.c.b16 %v5043, %v5041
        %v5142 = vpack.c.b16 %v5046, %v5044
        %v5143 = vpack.c.b16 %v5047, %v5045
        %5240 = vmatprep.subr.bf16.mxu0 %v5063
        %5241 = vmatpush1.bf16.msra.mxu0 %v5062
        %5242 = vmatprep.subr.bf16.mxu0 %v5061
        %5243 = vmatpush1.bf16.msra.mxu0 %v5060
        %5244 = vmatprep.subr.bf16.mxu0 %v5059
        %5245 = vmatpush1.bf16.msra.mxu0 %v5058
        %5246 = vmatprep.subr.bf16.mxu0 %v5057
        %5247 = vmatpush1.bf16.msra.mxu0 %v5056
        %5248 = vmatprep.subr.bf16.mxu0 %v5055
        %5249 = vmatpush1.bf16.msra.mxu0 %v5054
        %5250 = vmatprep.subr.bf16.mxu0 %v5053
        %5251 = vmatpush1.bf16.msra.mxu0 %v5052
        %5252 = vmatprep.subr.bf16.mxu0 %v5051
        %5253 = vmatpush1.bf16.msra.mxu0 %v5050
        %5254 = vmatprep.subr.bf16.mxu0 %v5049
        %5255 = vmatpush1.bf16.msra.mxu0 %v5048
        %5256 = vmatprep.subr.bf16.mxu0 %v5079
        %5257 = vmatpush2.bf16.msra.mxu0 %v5078
        %5258 = vmatprep.subr.bf16.mxu0 %v5077
        %5259 = vmatpush2.bf16.msra.mxu0 %v5076
        %5260 = vmatprep.subr.bf16.mxu0 %v5075
        %5261 = vmatpush2.bf16.msra.mxu0 %v5074
        %5262 = vmatprep.subr.bf16.mxu0 %v5073
        %5263 = vmatpush2.bf16.msra.mxu0 %v5072
        %5264 = vmatprep.subr.bf16.mxu0 %v5071
        %5265 = vmatpush2.bf16.msra.mxu0 %v5070
        %5266 = vmatprep.subr.bf16.mxu0 %v5069
        %5267 = vmatpush2.bf16.msra.mxu0 %v5068
        %5268 = vmatprep.subr.bf16.mxu0 %v5067
        %5269 = vmatpush2.bf16.msra.mxu0 %v5066
        %5270 = vmatprep.subr.bf16.mxu0 %v5065
        %5271 = vmatpush2.bf16.msra.mxu0 %v5064
        %5272 = vmatprep.mubr.bf16.mxu0 %v4689
        %5273 = vmatmul.mubr.bf16.gmra.mxu0 %v4688
        %v5274 = vpop.f32.mrf.mxu0
        %v5275 = vadd.f32 %v4753, %v5274
        %v5276 = vpop.f32.mrf.mxu0
        %v5277 = vadd.f32 %v4757, %v5276
        %v5278 = vpop.f32.mrf.mxu0
        %v5279 = vadd.f32 %v4753, %v5278
        %v5280 = vpop.f32.mrf.mxu0
        %v5281 = vadd.f32 %v4757, %v5280
        %5282 = vmatprep.mubr.bf16.mxu0 %v4695
        %5283 = vmatmul.mubr.bf16.gmra.mxu0 %v4694
        %v5284 = vpop.f32.mrf.mxu0
        %v5285 = vadd.f32 %v4753, %v5284
        %v5286 = vpop.f32.mrf.mxu0
        %v5287 = vadd.f32 %v4757, %v5286
        %v5288 = vpop.f32.mrf.mxu0
        %v5289 = vadd.f32 %v4753, %v5288
        %v5290 = vpop.f32.mrf.mxu0
        %v5291 = vadd.f32 %v4757, %v5290
        %5292 = vmatprep.mubr.bf16.mxu0 %v4701
        %5293 = vmatmul.mubr.bf16.gmra.mxu0 %v4700
        %v5294 = vpop.f32.mrf.mxu0
        %v5295 = vadd.f32 %v4753, %v5294
        %v5296 = vpop.f32.mrf.mxu0
        %v5297 = vadd.f32 %v4757, %v5296
        %v5298 = vpop.f32.mrf.mxu0
        %v5299 = vadd.f32 %v4753, %v5298
        %v5300 = vpop.f32.mrf.mxu0
        %v5301 = vadd.f32 %v4757, %v5300
        %5302 = vmatprep.mubr.bf16.mxu0 %v4707
        %5303 = vmatmul.mubr.bf16.gmra.mxu0 %v4706
        %v5304 = vpop.f32.mrf.mxu0
        %v5305 = vadd.f32 %v4753, %v5304
        %v5306 = vpop.f32.mrf.mxu0
        %v5307 = vadd.f32 %v4757, %v5306
        %v5308 = vpop.f32.mrf.mxu0
        %v5309 = vadd.f32 %v4753, %v5308
        %v5310 = vpop.f32.mrf.mxu0
        %v5311 = vadd.f32 %v4757, %v5310
        %5312 = vmatprep.mubr.bf16.mxu0 %v4713
        %5313 = vmatmul.mubr.bf16.gmra.mxu0 %v4712
        %v5314 = vpop.f32.mrf.mxu0
        %v5315 = vadd.f32 %v4753, %v5314
        %v5316 = vpop.f32.mrf.mxu0
        %v5317 = vadd.f32 %v4757, %v5316
        %v5318 = vpop.f32.mrf.mxu0
        %v5319 = vadd.f32 %v4753, %v5318
        %v5320 = vpop.f32.mrf.mxu0
        %v5321 = vadd.f32 %v4757, %v5320
        %5322 = vmatprep.mubr.bf16.mxu0 %v4719
        %5323 = vmatmul.mubr.bf16.gmra.mxu0 %v4718
        %v5324 = vpop.f32.mrf.mxu0
        %v5325 = vadd.f32 %v4753, %v5324
        %v5326 = vpop.f32.mrf.mxu0
        %v5327 = vadd.f32 %v4757, %v5326
        %v5328 = vpop.f32.mrf.mxu0
        %v5329 = vadd.f32 %v4753, %v5328
        %v5330 = vpop.f32.mrf.mxu0
        %v5331 = vadd.f32 %v4757, %v5330
        %5332 = vmatprep.mubr.bf16.mxu0 %v4725
        %5333 = vmatmul.mubr.bf16.gmra.mxu0 %v4724
        %v5334 = vpop.f32.mrf.mxu0
        %v5335 = vadd.f32 %v4753, %v5334
        %v5336 = vpop.f32.mrf.mxu0
        %v5337 = vadd.f32 %v4757, %v5336
        %v5338 = vpop.f32.mrf.mxu0
        %v5339 = vadd.f32 %v4753, %v5338
        %v5340 = vpop.f32.mrf.mxu0
        %v5341 = vadd.f32 %v4757, %v5340
        %5342 = vmatprep.mubr.bf16.mxu0 %v4731
        %5343 = vmatmul.mubr.bf16.gmra.mxu0 %v4730
        %v5344 = vpop.f32.mrf.mxu0
        %v5345 = vadd.f32 %v4753, %v5344
        %v5346 = vpop.f32.mrf.mxu0
        %v5347 = vadd.f32 %v4757, %v5346
        %v5348 = vpop.f32.mrf.mxu0
        %v5349 = vadd.f32 %v4753, %v5348
        %v5350 = vpop.f32.mrf.mxu0
        %v5351 = vadd.f32 %v4757, %v5350
        %5352 = vmatprep.mubr.bf16.mxu0 %v4737
        %5353 = vmatmul.mubr.bf16.gmra.mxu0 %v4736
        %v5354 = vpop.f32.mrf.mxu0
        %v5355 = vadd.f32 %v4753, %v5354
        %v5356 = vpop.f32.mrf.mxu0
        %v5357 = vadd.f32 %v4757, %v5356
        %v5358 = vpop.f32.mrf.mxu0
        %v5359 = vadd.f32 %v4753, %v5358
        %v5360 = vpop.f32.mrf.mxu0
        %v5361 = vadd.f32 %v4757, %v5360
        %5362 = vmatprep.mubr.bf16.mxu0 %v4743
        %5363 = vmatmul.mubr.bf16.gmra.mxu0 %v4742
        %v5364 = vpop.f32.mrf.mxu0
        %v5365 = vadd.f32 %v4753, %v5364
        %v5366 = vpop.f32.mrf.mxu0
        %v5367 = vadd.f32 %v4757, %v5366
        %v5368 = vpop.f32.mrf.mxu0
        %v5369 = vadd.f32 %v4753, %v5368
        %v5370 = vpop.f32.mrf.mxu0
        %v5371 = vadd.f32 %v4757, %v5370
        %5372 = vdwg.mxu0
        %5373 = vmatprep.subr.bf16.mxu0 %v5095
        %5374 = vmatpush1.bf16.msra.mxu0 %v5094
        %5375 = vmatprep.subr.bf16.mxu0 %v5093
        %5376 = vmatpush1.bf16.msra.mxu0 %v5092
        %5377 = vmatprep.subr.bf16.mxu0 %v5091
        %5378 = vmatpush1.bf16.msra.mxu0 %v5090
        %5379 = vmatprep.subr.bf16.mxu0 %v5089
        %5380 = vmatpush1.bf16.msra.mxu0 %v5088
        %5381 = vmatprep.subr.bf16.mxu0 %v5087
        %5382 = vmatpush1.bf16.msra.mxu0 %v5086
        %5383 = vmatprep.subr.bf16.mxu0 %v5085
        %5384 = vmatpush1.bf16.msra.mxu0 %v5084
        %5385 = vmatprep.subr.bf16.mxu0 %v5083
        %5386 = vmatpush1.bf16.msra.mxu0 %v5082
        %5387 = vmatprep.subr.bf16.mxu0 %v5081
        %5388 = vmatpush1.bf16.msra.mxu0 %v5080
        %5389 = vmatprep.subr.bf16.mxu0 %v5111
        %5390 = vmatpush2.bf16.msra.mxu0 %v5110
        %5391 = vmatprep.subr.bf16.mxu0 %v5109
        %5392 = vmatpush2.bf16.msra.mxu0 %v5108
        %5393 = vmatprep.subr.bf16.mxu0 %v5107
        %5394 = vmatpush2.bf16.msra.mxu0 %v5106
        %5395 = vmatprep.subr.bf16.mxu0 %v5105
        %5396 = vmatpush2.bf16.msra.mxu0 %v5104
        %5397 = vmatprep.subr.bf16.mxu0 %v5103
        %5398 = vmatpush2.bf16.msra.mxu0 %v5102
        %5399 = vmatprep.subr.bf16.mxu0 %v5101
        %5400 = vmatpush2.bf16.msra.mxu0 %v5100
        %5401 = vmatprep.subr.bf16.mxu0 %v5099
        %5402 = vmatpush2.bf16.msra.mxu0 %v5098
        %5403 = vmatprep.subr.bf16.mxu0 %v5097
        %5404 = vmatpush2.bf16.msra.mxu0 %v5096
        %5405 = vmatprep.mubr.bf16.mxu0 %v4691
        %5406 = vmatmul.mubr.bf16.gmra.mxu0 %v4690
        %v5407 = vpop.f32.mrf.mxu0
        %v5408 = vadd.f32 %v5275, %v5407
        %v5409 = vpop.f32.mrf.mxu0
        %v5410 = vadd.f32 %v5277, %v5409
        %v5411 = vpop.f32.mrf.mxu0
        %v5412 = vadd.f32 %v5279, %v5411
        %v5413 = vpop.f32.mrf.mxu0
        %v5414 = vadd.f32 %v5281, %v5413
        %5415 = vmatprep.mubr.bf16.mxu0 %v4697
        %5416 = vmatmul.mubr.bf16.gmra.mxu0 %v4696
        %v5417 = vpop.f32.mrf.mxu0
        %v5418 = vadd.f32 %v5285, %v5417
        %v5419 = vpop.f32.mrf.mxu0
        %v5420 = vadd.f32 %v5287, %v5419
        %v5421 = vpop.f32.mrf.mxu0
        %v5422 = vadd.f32 %v5289, %v5421
        %v5423 = vpop.f32.mrf.mxu0
        %v5424 = vadd.f32 %v5291, %v5423
        %5425 = vmatprep.mubr.bf16.mxu0 %v4703
        %5426 = vmatmul.mubr.bf16.gmra.mxu0 %v4702
        %v5427 = vpop.f32.mrf.mxu0
        %v5428 = vadd.f32 %v5295, %v5427
        %v5429 = vpop.f32.mrf.mxu0
        %v5430 = vadd.f32 %v5297, %v5429
        %v5431 = vpop.f32.mrf.mxu0
        %v5432 = vadd.f32 %v5299, %v5431
        %v5433 = vpop.f32.mrf.mxu0
        %v5434 = vadd.f32 %v5301, %v5433
        %5435 = vmatprep.mubr.bf16.mxu0 %v4709
        %5436 = vmatmul.mubr.bf16.gmra.mxu0 %v4708
        %v5437 = vpop.f32.mrf.mxu0
        %v5438 = vadd.f32 %v5305, %v5437
        %v5439 = vpop.f32.mrf.mxu0
        %v5440 = vadd.f32 %v5307, %v5439
        %v5441 = vpop.f32.mrf.mxu0
        %v5442 = vadd.f32 %v5309, %v5441
        %v5443 = vpop.f32.mrf.mxu0
        %v5444 = vadd.f32 %v5311, %v5443
        %5445 = vmatprep.mubr.bf16.mxu0 %v4715
        %5446 = vmatmul.mubr.bf16.gmra.mxu0 %v4714
        %v5447 = vpop.f32.mrf.mxu0
        %v5448 = vadd.f32 %v5315, %v5447
        %v5449 = vpop.f32.mrf.mxu0
        %v5450 = vadd.f32 %v5317, %v5449
        %v5451 = vpop.f32.mrf.mxu0
        %v5452 = vadd.f32 %v5319, %v5451
        %v5453 = vpop.f32.mrf.mxu0
        %v5454 = vadd.f32 %v5321, %v5453
        %5455 = vmatprep.mubr.bf16.mxu0 %v4721
        %5456 = vmatmul.mubr.bf16.gmra.mxu0 %v4720
        %v5457 = vpop.f32.mrf.mxu0
        %v5458 = vadd.f32 %v5325, %v5457
        %v5459 = vpop.f32.mrf.mxu0
        %v5460 = vadd.f32 %v5327, %v5459
        %v5461 = vpop.f32.mrf.mxu0
        %v5462 = vadd.f32 %v5329, %v5461
        %v5463 = vpop.f32.mrf.mxu0
        %v5464 = vadd.f32 %v5331, %v5463
        %5465 = vmatprep.mubr.bf16.mxu0 %v4727
        %5466 = vmatmul.mubr.bf16.gmra.mxu0 %v4726
        %v5467 = vpop.f32.mrf.mxu0
        %v5468 = vadd.f32 %v5335, %v5467
        %v5469 = vpop.f32.mrf.mxu0
        %v5470 = vadd.f32 %v5337, %v5469
        %v5471 = vpop.f32.mrf.mxu0
        %v5472 = vadd.f32 %v5339, %v5471
        %v5473 = vpop.f32.mrf.mxu0
        %v5474 = vadd.f32 %v5341, %v5473
        %5475 = vmatprep.mubr.bf16.mxu0 %v4733
        %5476 = vmatmul.mubr.bf16.gmra.mxu0 %v4732
        %v5477 = vpop.f32.mrf.mxu0
        %v5478 = vadd.f32 %v5345, %v5477
        %v5479 = vpop.f32.mrf.mxu0
        %v5480 = vadd.f32 %v5347, %v5479
        %v5481 = vpop.f32.mrf.mxu0
        %v5482 = vadd.f32 %v5349, %v5481
        %v5483 = vpop.f32.mrf.mxu0
        %v5484 = vadd.f32 %v5351, %v5483
        %5485 = vmatprep.mubr.bf16.mxu0 %v4739
        %5486 = vmatmul.mubr.bf16.gmra.mxu0 %v4738
        %v5487 = vpop.f32.mrf.mxu0
        %v5488 = vadd.f32 %v5355, %v5487
        %v5489 = vpop.f32.mrf.mxu0
        %v5490 = vadd.f32 %v5357, %v5489
        %v5491 = vpop.f32.mrf.mxu0
        %v5492 = vadd.f32 %v5359, %v5491
        %v5493 = vpop.f32.mrf.mxu0
        %v5494 = vadd.f32 %v5361, %v5493
        %5495 = vmatprep.mubr.bf16.mxu0 %v4745
        %5496 = vmatmul.mubr.bf16.gmra.mxu0 %v4744
        %v5497 = vpop.f32.mrf.mxu0
        %v5498 = vadd.f32 %v5365, %v5497
        %v5499 = vpop.f32.mrf.mxu0
        %v5500 = vadd.f32 %v5367, %v5499
        %v5501 = vpop.f32.mrf.mxu0
        %v5502 = vadd.f32 %v5369, %v5501
        %v5503 = vpop.f32.mrf.mxu0
        %v5504 = vadd.f32 %v5371, %v5503
        %5505 = vdwg.mxu0
        %5506 = vmatprep.subr.bf16.mxu0 %v5127
        %5507 = vmatpush1.bf16.msra.mxu0 %v5126
        %5508 = vmatprep.subr.bf16.mxu0 %v5125
        %5509 = vmatpush1.bf16.msra.mxu0 %v5124
        %5510 = vmatprep.subr.bf16.mxu0 %v5123
        %5511 = vmatpush1.bf16.msra.mxu0 %v5122
        %5512 = vmatprep.subr.bf16.mxu0 %v5121
        %5513 = vmatpush1.bf16.msra.mxu0 %v5120
        %5514 = vmatprep.subr.bf16.mxu0 %v5119
        %5515 = vmatpush1.bf16.msra.mxu0 %v5118
        %5516 = vmatprep.subr.bf16.mxu0 %v5117
        %5517 = vmatpush1.bf16.msra.mxu0 %v5116
        %5518 = vmatprep.subr.bf16.mxu0 %v5115
        %5519 = vmatpush1.bf16.msra.mxu0 %v5114
        %5520 = vmatprep.subr.bf16.mxu0 %v5113
        %5521 = vmatpush1.bf16.msra.mxu0 %v5112
        %5522 = vmatprep.subr.bf16.mxu0 %v5143
        %5523 = vmatpush2.bf16.msra.mxu0 %v5142
        %5524 = vmatprep.subr.bf16.mxu0 %v5141
        %5525 = vmatpush2.bf16.msra.mxu0 %v5140
        %5526 = vmatprep.subr.bf16.mxu0 %v5139
        %5527 = vmatpush2.bf16.msra.mxu0 %v5138
        %5528 = vmatprep.subr.bf16.mxu0 %v5137
        %5529 = vmatpush2.bf16.msra.mxu0 %v5136
        %5530 = vmatprep.subr.bf16.mxu0 %v5135
        %5531 = vmatpush2.bf16.msra.mxu0 %v5134
        %5532 = vmatprep.subr.bf16.mxu0 %v5133
        %5533 = vmatpush2.bf16.msra.mxu0 %v5132
        %5534 = vmatprep.subr.bf16.mxu0 %v5131
        %5535 = vmatpush2.bf16.msra.mxu0 %v5130
        %5536 = vmatprep.subr.bf16.mxu0 %v5129
        %5537 = vmatpush2.bf16.msra.mxu0 %v5128
        %5538 = vmatprep.mubr.bf16.mxu0 %v4693
        %5539 = vmatmul.mubr.bf16.gmra.mxu0 %v4692
        %v5540 = vpop.f32.mrf.mxu0
        %v5541 = vadd.f32 %v5408, %v5540
        %v5542 = vpop.f32.mrf.mxu0
        %v5543 = vadd.f32 %v5410, %v5542
        %v5544 = vpop.f32.mrf.mxu0
        %v5545 = vadd.f32 %v5412, %v5544
        %v5546 = vpop.f32.mrf.mxu0
        %v5547 = vadd.f32 %v5414, %v5546
        %5548 = vmatprep.mubr.bf16.mxu0 %v4699
        %5549 = vmatmul.mubr.bf16.gmra.mxu0 %v4698
        %v5550 = vpop.f32.mrf.mxu0
        %v5551 = vadd.f32 %v5418, %v5550
        %v5552 = vpop.f32.mrf.mxu0
        %v5553 = vadd.f32 %v5420, %v5552
        %v5554 = vpop.f32.mrf.mxu0
        %v5555 = vadd.f32 %v5422, %v5554
        %v5556 = vpop.f32.mrf.mxu0
        %v5557 = vadd.f32 %v5424, %v5556
        %5558 = vmatprep.mubr.bf16.mxu0 %v4705
        %5559 = vmatmul.mubr.bf16.gmra.mxu0 %v4704
        %v5560 = vpop.f32.mrf.mxu0
        %v5561 = vadd.f32 %v5428, %v5560
        %v5562 = vpop.f32.mrf.mxu0
        %v5563 = vadd.f32 %v5430, %v5562
        %v5564 = vpop.f32.mrf.mxu0
        %v5565 = vadd.f32 %v5432, %v5564
        %v5566 = vpop.f32.mrf.mxu0
        %v5567 = vadd.f32 %v5434, %v5566
        %5568 = vmatprep.mubr.bf16.mxu0 %v4711
        %5569 = vmatmul.mubr.bf16.gmra.mxu0 %v4710
        %v5570 = vpop.f32.mrf.mxu0
        %v5571 = vadd.f32 %v5438, %v5570
        %v5572 = vpop.f32.mrf.mxu0
        %v5573 = vadd.f32 %v5440, %v5572
        %v5574 = vpop.f32.mrf.mxu0
        %v5575 = vadd.f32 %v5442, %v5574
        %v5576 = vpop.f32.mrf.mxu0
        %v5577 = vadd.f32 %v5444, %v5576
        %5578 = vmatprep.mubr.bf16.mxu0 %v4717
        %5579 = vmatmul.mubr.bf16.gmra.mxu0 %v4716
        %v5580 = vpop.f32.mrf.mxu0
        %v5581 = vadd.f32 %v5448, %v5580
        %v5582 = vpop.f32.mrf.mxu0
        %v5583 = vadd.f32 %v5450, %v5582
        %v5584 = vpop.f32.mrf.mxu0
        %v5585 = vadd.f32 %v5452, %v5584
        %v5586 = vpop.f32.mrf.mxu0
        %v5587 = vadd.f32 %v5454, %v5586
        %5588 = vmatprep.mubr.bf16.mxu0 %v4723
        %5589 = vmatmul.mubr.bf16.gmra.mxu0 %v4722
        %v5590 = vpop.f32.mrf.mxu0
        %v5591 = vadd.f32 %v5458, %v5590
        %v5592 = vpop.f32.mrf.mxu0
        %v5593 = vadd.f32 %v5460, %v5592
        %v5594 = vpop.f32.mrf.mxu0
        %v5595 = vadd.f32 %v5462, %v5594
        %v5596 = vpop.f32.mrf.mxu0
        %v5597 = vadd.f32 %v5464, %v5596
        %5598 = vmatprep.mubr.bf16.mxu0 %v4729
        %5599 = vmatmul.mubr.bf16.gmra.mxu0 %v4728
        %v5600 = vpop.f32.mrf.mxu0
        %v5601 = vadd.f32 %v5468, %v5600
        %v5602 = vpop.f32.mrf.mxu0
        %v5603 = vadd.f32 %v5470, %v5602
        %v5604 = vpop.f32.mrf.mxu0
        %v5605 = vadd.f32 %v5472, %v5604
        %v5606 = vpop.f32.mrf.mxu0
        %v5607 = vadd.f32 %v5474, %v5606
        %5608 = vmatprep.mubr.bf16.mxu0 %v4735
        %5609 = vmatmul.mubr.bf16.gmra.mxu0 %v4734
        %v5610 = vpop.f32.mrf.mxu0
        %v5611 = vadd.f32 %v5478, %v5610
        %v5612 = vpop.f32.mrf.mxu0
        %v5613 = vadd.f32 %v5480, %v5612
        %v5614 = vpop.f32.mrf.mxu0
        %v5615 = vadd.f32 %v5482, %v5614
        %v5616 = vpop.f32.mrf.mxu0
        %v5617 = vadd.f32 %v5484, %v5616
        %5618 = vmatprep.mubr.bf16.mxu0 %v4741
        %5619 = vmatmul.mubr.bf16.gmra.mxu0 %v4740
        %v5620 = vpop.f32.mrf.mxu0
        %v5621 = vadd.f32 %v5488, %v5620
        %v5622 = vpop.f32.mrf.mxu0
        %v5623 = vadd.f32 %v5490, %v5622
        %v5624 = vpop.f32.mrf.mxu0
        %v5625 = vadd.f32 %v5492, %v5624
        %v5626 = vpop.f32.mrf.mxu0
        %v5627 = vadd.f32 %v5494, %v5626
        %5628 = vmatprep.mubr.bf16.mxu0 %v4747
        %5629 = vmatmul.mubr.bf16.gmra.mxu0 %v4746
        %v5630 = vpop.f32.mrf.mxu0
        %v5631 = vadd.f32 %v5498, %v5630
        %v5632 = vpop.f32.mrf.mxu0
        %v5633 = vadd.f32 %v5500, %v5632
        %v5634 = vpop.f32.mrf.mxu0
        %v5635 = vadd.f32 %v5502, %v5634
        %v5636 = vpop.f32.mrf.mxu0
        %v5637 = vadd.f32 %v5504, %v5636
        %5638 = vdwg.mxu0
        %v5639 = vmax.f32 %v5541, 0.0
        %v5640 = vmax.f32 %v5543, 0.0
        %v5641 = vmax.f32 %v5545, 0.0
        %v5642 = vmax.f32 %v5547, 0.0
        %v5643 = vmax.f32 %v5551, 0.0
        %v5644 = vmax.f32 %v5553, 0.0
        %v5645 = vmax.f32 %v5555, 0.0
        %v5646 = vmax.f32 %v5557, 0.0
        %v5647 = vmax.f32 %v5561, 0.0
        %v5648 = vmax.f32 %v5563, 0.0
        %v5649 = vmax.f32 %v5565, 0.0
        %v5650 = vmax.f32 %v5567, 0.0
        %v5651 = vmax.f32 %v5571, 0.0
        %v5652 = vmax.f32 %v5573, 0.0
        %v5653 = vmax.f32 %v5575, 0.0
        %v5654 = vmax.f32 %v5577, 0.0
        %v5655 = vmax.f32 %v5581, 0.0
        %v5656 = vmax.f32 %v5583, 0.0
        %v5657 = vmax.f32 %v5585, 0.0
        %v5658 = vmax.f32 %v5587, 0.0
        %v5659 = vmax.f32 %v5591, 0.0
        %v5660 = vmax.f32 %v5593, 0.0
        %v5661 = vmax.f32 %v5595, 0.0
        %v5662 = vmax.f32 %v5597, 0.0
        %v5663 = vmax.f32 %v5601, 0.0
        %v5664 = vmax.f32 %v5603, 0.0
        %v5665 = vmax.f32 %v5605, 0.0
        %v5666 = vmax.f32 %v5607, 0.0
        %v5667 = vmax.f32 %v5611, 0.0
        %v5668 = vmax.f32 %v5613, 0.0
        %v5669 = vmax.f32 %v5615, 0.0
        %v5670 = vmax.f32 %v5617, 0.0
        %v5671 = vmax.f32 %v5621, 0.0
        %v5672 = vmax.f32 %v5623, 0.0
        %v5673 = vmax.f32 %v5625, 0.0
        %v5674 = vmax.f32 %v5627, 0.0
        %v5675 = vmax.f32 %v5631, 0.0
        %v5676 = vmax.f32 %v5633, 0.0
        %v5677 = vmax.f32 %v5635, 0.0
        %v5678 = vmax.f32 %v5637, 0.0
        %v5679 = vmul.f32 %v5639, %v5639
        %v5680 = vmul.f32 %v5640, %v5640
        %v5681 = vmul.f32 %v5641, %v5641
        %v5682 = vmul.f32 %v5642, %v5642
        %v5683 = vmul.f32 %v5643, %v5643
        %v5684 = vmul.f32 %v5644, %v5644
        %v5685 = vmul.f32 %v5645, %v5645
        %v5686 = vmul.f32 %v5646, %v5646
        %v5687 = vmul.f32 %v5647, %v5647
        %v5688 = vmul.f32 %v5648, %v5648
        %v5689 = vmul.f32 %v5649, %v5649
        %v5690 = vmul.f32 %v5650, %v5650
        %v5691 = vmul.f32 %v5651, %v5651
        %v5692 = vmul.f32 %v5652, %v5652
        %v5693 = vmul.f32 %v5653, %v5653
        %v5694 = vmul.f32 %v5654, %v5654
        %v5695 = vmul.f32 %v5655, %v5655
        %v5696 = vmul.f32 %v5656, %v5656
        %v5697 = vmul.f32 %v5657, %v5657
        %v5698 = vmul.f32 %v5658, %v5658
        %v5699 = vmul.f32 %v5659, %v5659
        %v5700 = vmul.f32 %v5660, %v5660
        %v5701 = vmul.f32 %v5661, %v5661
        %v5702 = vmul.f32 %v5662, %v5662
        %v5703 = vmul.f32 %v5663, %v5663
        %v5704 = vmul.f32 %v5664, %v5664
        %v5705 = vmul.f32 %v5665, %v5665
        %v5706 = vmul.f32 %v5666, %v5666
        %v5707 = vmul.f32 %v5667, %v5667
        %v5708 = vmul.f32 %v5668, %v5668
        %v5709 = vmul.f32 %v5669, %v5669
        %v5710 = vmul.f32 %v5670, %v5670
        %v5711 = vmul.f32 %v5671, %v5671
        %v5712 = vmul.f32 %v5672, %v5672
        %v5713 = vmul.f32 %v5673, %v5673
        %v5714 = vmul.f32 %v5674, %v5674
        %v5715 = vmul.f32 %v5675, %v5675
        %v5716 = vmul.f32 %v5676, %v5676
        %v5717 = vmul.f32 %v5677, %v5677
        %v5718 = vmul.f32 %v5678, %v5678
        %v5719 = vadd.f32 %v5679, %v5680
        %5720 = vadd.xlane.f32.xlu0 %v5719
        %v5721 = vpop.xlane.xlu0 %5720
        %v5722 = vadd.f32 %v5681, %v5682
        %5723 = vadd.xlane.f32.xlu0 %v5722
        %v5724 = vpop.xlane.xlu0 %5723
        %v5725 = vadd.f32 %v5683, %v5684
        %5726 = vadd.xlane.f32.xlu0 %v5725
        %v5727 = vpop.xlane.xlu0 %5726
        %v5728 = vadd.f32 %v5685, %v5686
        %5729 = vadd.xlane.f32.xlu0 %v5728
        %v5730 = vpop.xlane.xlu0 %5729
        %v5731 = vadd.f32 %v5687, %v5688
        %5732 = vadd.xlane.f32.xlu0 %v5731
        %v5733 = vpop.xlane.xlu0 %5732
        %v5734 = vadd.f32 %v5689, %v5690
        %5735 = vadd.xlane.f32.xlu0 %v5734
        %v5736 = vpop.xlane.xlu0 %5735
        %v5737 = vadd.f32 %v5691, %v5692
        %5738 = vadd.xlane.f32.xlu0 %v5737
        %v5739 = vpop.xlane.xlu0 %5738
        %v5740 = vadd.f32 %v5693, %v5694
        %5741 = vadd.xlane.f32.xlu0 %v5740
        %v5742 = vpop.xlane.xlu0 %5741
        %v5743 = vadd.f32 %v5695, %v5696
        %5744 = vadd.xlane.f32.xlu0 %v5743
        %v5745 = vpop.xlane.xlu0 %5744
        %v5746 = vadd.f32 %v5697, %v5698
        %5747 = vadd.xlane.f32.xlu0 %v5746
        %v5748 = vpop.xlane.xlu0 %5747
        %v5749 = vadd.f32 %v5699, %v5700
        %5750 = vadd.xlane.f32.xlu0 %v5749
        %v5751 = vpop.xlane.xlu0 %5750
        %v5752 = vadd.f32 %v5701, %v5702
        %5753 = vadd.xlane.f32.xlu0 %v5752
        %v5754 = vpop.xlane.xlu0 %5753
        %v5755 = vadd.f32 %v5703, %v5704
        %5756 = vadd.xlane.f32.xlu0 %v5755
        %v5757 = vpop.xlane.xlu0 %5756
        %v5758 = vadd.f32 %v5705, %v5706
        %5759 = vadd.xlane.f32.xlu0 %v5758
        %v5760 = vpop.xlane.xlu0 %5759
        %v5761 = vadd.f32 %v5707, %v5708
        %5762 = vadd.xlane.f32.xlu0 %v5761
        %v5763 = vpop.xlane.xlu0 %5762
        %v5764 = vadd.f32 %v5709, %v5710
        %5765 = vadd.xlane.f32.xlu0 %v5764
        %v5766 = vpop.xlane.xlu0 %5765
        %v5767 = vadd.f32 %v5711, %v5712
        %5768 = vadd.xlane.f32.xlu0 %v5767
        %v5769 = vpop.xlane.xlu0 %5768
        %v5770 = vadd.f32 %v5713, %v5714
        %5771 = vadd.xlane.f32.xlu0 %v5770
        %v5772 = vpop.xlane.xlu0 %5771
        %v5773 = vadd.f32 %v5715, %v5716
        %5774 = vadd.xlane.f32.xlu0 %v5773
        %v5775 = vpop.xlane.xlu0 %5774
        %v5776 = vadd.f32 %v5717, %v5718
        %5777 = vadd.xlane.f32.xlu0 %v5776
        %v5778 = vpop.xlane.xlu0 %5777
        %v5779 = vmax.f32 %v5721, 1e-24
        %v5780 = vmax.f32 %v5724, 1e-24
        %v5781 = vmax.f32 %v5727, 1e-24
        %v5782 = vmax.f32 %v5730, 1e-24
        %v5783 = vmax.f32 %v5733, 1e-24
        %v5784 = vmax.f32 %v5736, 1e-24
        %v5785 = vmax.f32 %v5739, 1e-24
        %v5786 = vmax.f32 %v5742, 1e-24
        %v5787 = vmax.f32 %v5745, 1e-24
        %v5788 = vmax.f32 %v5748, 1e-24
        %v5789 = vmax.f32 %v5751, 1e-24
        %v5790 = vmax.f32 %v5754, 1e-24
        %v5791 = vmax.f32 %v5757, 1e-24
        %v5792 = vmax.f32 %v5760, 1e-24
        %v5793 = vmax.f32 %v5763, 1e-24
        %v5794 = vmax.f32 %v5766, 1e-24
        %v5795 = vmax.f32 %v5769, 1e-24
        %v5796 = vmax.f32 %v5772, 1e-24
        %v5797 = vmax.f32 %v5775, 1e-24
        %v5798 = vmax.f32 %v5778, 1e-24
        %v5799 = vrsqrt.pop %v5779
        %v5800 = vrsqrt.pop %v5780
        %v5801 = vrsqrt.pop %v5781
        %v5802 = vrsqrt.pop %v5782
        %v5803 = vrsqrt.pop %v5783
        %v5804 = vrsqrt.pop %v5784
        %v5805 = vrsqrt.pop %v5785
        %v5806 = vrsqrt.pop %v5786
        %v5807 = vrsqrt.pop %v5787
        %v5808 = vrsqrt.pop %v5788
        %v5809 = vrsqrt.pop %v5789
        %v5810 = vrsqrt.pop %v5790
        %v5811 = vrsqrt.pop %v5791
        %v5812 = vrsqrt.pop %v5792
        %v5813 = vrsqrt.pop %v5793
        %v5814 = vrsqrt.pop %v5794
        %v5815 = vrsqrt.pop %v5795
        %v5816 = vrsqrt.pop %v5796
        %v5817 = vrsqrt.pop %v5797
        %v5818 = vrsqrt.pop %v5798
        %v5819 = vmul.f32 %v5639, %v5799
        %v5820 = vmul.f32 %v5640, %v5799
        %v5821 = vmul.f32 %v5641, %v5800
        %v5822 = vmul.f32 %v5642, %v5800
        %v5823 = vmul.f32 %v5643, %v5801
        %v5824 = vmul.f32 %v5644, %v5801
        %v5825 = vmul.f32 %v5645, %v5802
        %v5826 = vmul.f32 %v5646, %v5802
        %v5827 = vmul.f32 %v5647, %v5803
        %v5828 = vmul.f32 %v5648, %v5803
        %v5829 = vmul.f32 %v5649, %v5804
        %v5830 = vmul.f32 %v5650, %v5804
        %v5831 = vmul.f32 %v5651, %v5805
        %v5832 = vmul.f32 %v5652, %v5805
        %v5833 = vmul.f32 %v5653, %v5806
        %v5834 = vmul.f32 %v5654, %v5806
        %v5835 = vmul.f32 %v5655, %v5807
        %v5836 = vmul.f32 %v5656, %v5807
        %v5837 = vmul.f32 %v5657, %v5808
        %v5838 = vmul.f32 %v5658, %v5808
        %v5839 = vmul.f32 %v5659, %v5809
        %v5840 = vmul.f32 %v5660, %v5809
        %v5841 = vmul.f32 %v5661, %v5810
        %v5842 = vmul.f32 %v5662, %v5810
        %v5843 = vmul.f32 %v5663, %v5811
        %v5844 = vmul.f32 %v5664, %v5811
        %v5845 = vmul.f32 %v5665, %v5812
        %v5846 = vmul.f32 %v5666, %v5812
        %v5847 = vmul.f32 %v5667, %v5813
        %v5848 = vmul.f32 %v5668, %v5813
        %v5849 = vmul.f32 %v5669, %v5814
        %v5850 = vmul.f32 %v5670, %v5814
        %v5851 = vmul.f32 %v5671, %v5815
        %v5852 = vmul.f32 %v5672, %v5815
        %v5853 = vmul.f32 %v5673, %v5816
        %v5854 = vmul.f32 %v5674, %v5816
        %v5855 = vmul.f32 %v5675, %v5817
        %v5856 = vmul.f32 %v5676, %v5817
        %v5857 = vmul.f32 %v5677, %v5818
        %v5858 = vmul.f32 %v5678, %v5818
        %vm5859 = vcmp.ne.f32.partialorder %v5819, %v5819
        %vm5860 = vcmp.ne.f32.partialorder %v5820, %v5820
        %vm5861 = vcmp.ne.f32.partialorder %v5821, %v5821
        %vm5862 = vcmp.ne.f32.partialorder %v5822, %v5822
        %vm5863 = vcmp.ne.f32.partialorder %v5823, %v5823
        %vm5864 = vcmp.ne.f32.partialorder %v5824, %v5824
        %vm5865 = vcmp.ne.f32.partialorder %v5825, %v5825
        %vm5866 = vcmp.ne.f32.partialorder %v5826, %v5826
        %vm5867 = vcmp.ne.f32.partialorder %v5827, %v5827
        %vm5868 = vcmp.ne.f32.partialorder %v5828, %v5828
        %vm5869 = vcmp.ne.f32.partialorder %v5829, %v5829
        %vm5870 = vcmp.ne.f32.partialorder %v5830, %v5830
        %vm5871 = vcmp.ne.f32.partialorder %v5831, %v5831
        %vm5872 = vcmp.ne.f32.partialorder %v5832, %v5832
        %vm5873 = vcmp.ne.f32.partialorder %v5833, %v5833
        %vm5874 = vcmp.ne.f32.partialorder %v5834, %v5834
        %vm5875 = vcmp.ne.f32.partialorder %v5835, %v5835
        %vm5876 = vcmp.ne.f32.partialorder %v5836, %v5836
        %vm5877 = vcmp.ne.f32.partialorder %v5837, %v5837
        %vm5878 = vcmp.ne.f32.partialorder %v5838, %v5838
        %vm5879 = vcmp.ne.f32.partialorder %v5839, %v5839
        %vm5880 = vcmp.ne.f32.partialorder %v5840, %v5840
        %vm5881 = vcmp.ne.f32.partialorder %v5841, %v5841
        %vm5882 = vcmp.ne.f32.partialorder %v5842, %v5842
        %vm5883 = vcmp.ne.f32.partialorder %v5843, %v5843
        %vm5884 = vcmp.ne.f32.partialorder %v5844, %v5844
        %vm5885 = vcmp.ne.f32.partialorder %v5845, %v5845
        %vm5886 = vcmp.ne.f32.partialorder %v5846, %v5846
        %vm5887 = vcmp.ne.f32.partialorder %v5847, %v5847
        %vm5888 = vcmp.ne.f32.partialorder %v5848, %v5848
        %vm5889 = vcmp.ne.f32.partialorder %v5849, %v5849
        %vm5890 = vcmp.ne.f32.partialorder %v5850, %v5850
        %vm5891 = vcmp.ne.f32.partialorder %v5851, %v5851
        %vm5892 = vcmp.ne.f32.partialorder %v5852, %v5852
        %vm5893 = vcmp.ne.f32.partialorder %v5853, %v5853
        %vm5894 = vcmp.ne.f32.partialorder %v5854, %v5854
        %vm5895 = vcmp.ne.f32.partialorder %v5855, %v5855
        %vm5896 = vcmp.ne.f32.partialorder %v5856, %v5856
        %vm5897 = vcmp.ne.f32.partialorder %v5857, %v5857
        %vm5898 = vcmp.ne.f32.partialorder %v5858, %v5858
        %v5899 = vsel %vm5859, 0.0, %v5819
        %v5900 = vsel %vm5860, 0.0, %v5820
        %v5901 = vsel %vm5861, 0.0, %v5821
        %v5902 = vsel %vm5862, 0.0, %v5822
        %v5903 = vsel %vm5863, 0.0, %v5823
        %v5904 = vsel %vm5864, 0.0, %v5824
        %v5905 = vsel %vm5865, 0.0, %v5825
        %v5906 = vsel %vm5866, 0.0, %v5826
        %v5907 = vsel %vm5867, 0.0, %v5827
        %v5908 = vsel %vm5868, 0.0, %v5828
        %v5909 = vsel %vm5869, 0.0, %v5829
        %v5910 = vsel %vm5870, 0.0, %v5830
        %v5911 = vsel %vm5871, 0.0, %v5831
        %v5912 = vsel %vm5872, 0.0, %v5832
        %v5913 = vsel %vm5873, 0.0, %v5833
        %v5914 = vsel %vm5874, 0.0, %v5834
        %v5915 = vsel %vm5875, 0.0, %v5835
        %v5916 = vsel %vm5876, 0.0, %v5836
        %v5917 = vsel %vm5877, 0.0, %v5837
        %v5918 = vsel %vm5878, 0.0, %v5838
        %v5919 = vsel %vm5879, 0.0, %v5839
        %v5920 = vsel %vm5880, 0.0, %v5840
        %v5921 = vsel %vm5881, 0.0, %v5841
        %v5922 = vsel %vm5882, 0.0, %v5842
        %v5923 = vsel %vm5883, 0.0, %v5843
        %v5924 = vsel %vm5884, 0.0, %v5844
        %v5925 = vsel %vm5885, 0.0, %v5845
        %v5926 = vsel %vm5886, 0.0, %v5846
        %v5927 = vsel %vm5887, 0.0, %v5847
        %v5928 = vsel %vm5888, 0.0, %v5848
        %v5929 = vsel %vm5889, 0.0, %v5849
        %v5930 = vsel %vm5890, 0.0, %v5850
        %v5931 = vsel %vm5891, 0.0, %v5851
        %v5932 = vsel %vm5892, 0.0, %v5852
        %v5933 = vsel %vm5893, 0.0, %v5853
        %v5934 = vsel %vm5894, 0.0, %v5854
        %v5935 = vsel %vm5895, 0.0, %v5855
        %v5936 = vsel %vm5896, 0.0, %v5856
        %v5937 = vsel %vm5897, 0.0, %v5857
        %v5938 = vsel %vm5898, 0.0, %v5858
        %5939 = vst [vmem:[%s297] sm:$0xff] %v5899
        %5940 = vst [vmem:[%s297 + $0x8] sm:$0xff] %v5900
        %5941 = vst [vmem:[%s297 + $0x10] sm:$0xff] %v5901
        %5942 = vst [vmem:[%s297 + $0x18] sm:$0xff] %v5902
        %5943 = vst [vmem:[%s297 + $0x20] sm:$0xff] %v5903
        %5944 = vst [vmem:[%s297 + $0x28] sm:$0xff] %v5904
        %5945 = vst [vmem:[%s297 + $0x30] sm:$0xff] %v5905
        %5946 = vst [vmem:[%s297 + $0x38] sm:$0xff] %v5906
        %5947 = vst [vmem:[%s297 + $0x40] sm:$0xff] %v5907
        %5948 = vst [vmem:[%s297 + $0x48] sm:$0xff] %v5908
        %5949 = vst [vmem:[%s297 + $0x50] sm:$0xff] %v5909
        %5950 = vst [vmem:[%s297 + $0x58] sm:$0xff] %v5910
        %5951 = vst [vmem:[%s297 + $0x60] sm:$0xff] %v5911
        %5952 = vst [vmem:[%s297 + $0x68] sm:$0xff] %v5912
        %5953 = vst [vmem:[%s297 + $0x70] sm:$0xff] %v5913
        %5954 = vst [vmem:[%s297 + $0x78] sm:$0xff] %v5914
        %5955 = vst [vmem:[%s297 + $0x80] sm:$0xff] %v5915
        %5956 = vst [vmem:[%s297 + $0x88] sm:$0xff] %v5916
        %5957 = vst [vmem:[%s297 + $0x90] sm:$0xff] %v5917
        %5958 = vst [vmem:[%s297 + $0x98] sm:$0xff] %v5918
        %5959 = vst [vmem:[%s297 + $0xa0] sm:$0xff] %v5919
        %5960 = vst [vmem:[%s297 + $0xa8] sm:$0xff] %v5920
        %5961 = vst [vmem:[%s297 + $0xb0] sm:$0xff] %v5921
        %5962 = vst [vmem:[%s297 + $0xb8] sm:$0xff] %v5922
        %5963 = vst [vmem:[%s297 + $0xc0] sm:$0xff] %v5923
        %5964 = vst [vmem:[%s297 + $0xc8] sm:$0xff] %v5924
        %5965 = vst [vmem:[%s297 + $0xd0] sm:$0xff] %v5925
        %5966 = vst [vmem:[%s297 + $0xd8] sm:$0xff] %v5926
        %5967 = vst [vmem:[%s297 + $0xe0] sm:$0xff] %v5927
        %5968 = vst [vmem:[%s297 + $0xe8] sm:$0xff] %v5928
        %5969 = vst [vmem:[%s297 + $0xf0] sm:$0xff] %v5929
        %5970 = vst [vmem:[%s297 + $0xf8] sm:$0xff] %v5930
        %5971 = vst [vmem:[%s297 + $0x100] sm:$0xff] %v5931
        %5972 = vst [vmem:[%s297 + $0x108] sm:$0xff] %v5932
        %5973 = vst [vmem:[%s297 + $0x110] sm:$0xff] %v5933
        %5974 = vst [vmem:[%s297 + $0x118] sm:$0xff] %v5934
        %5975 = vst [vmem:[%s297 + $0x120] sm:$0xff] %v5935
        %5976 = vst [vmem:[%s297 + $0x128] sm:$0xff] %v5936
        %5977 = vst [vmem:[%s297 + $0x130] sm:$0xff] %v5937
        %5978 = vst [vmem:[%s297 + $0x138] sm:$0xff] %v5938
        %s5979 = sand.u32 %s142, 1
        %s5980 = scalar_lea.sflag [#allocation4], %s5979
        %s5981 = sand.u32 %s142, 1
        %s5982 = smul.addr %s5981, 320
        %s5983 = scalar_lea.vmem [#allocation11], %s5982
        // Predicated region
        $region61: #{tpu_custom_call.1} parent=39 // pred_check
          %p5984 = pneg %p152
        $region62: #{tpu_custom_call.1} parent=39 // pred_check_branch
          %5986 = sbr.rel (%p5984) target = $region64
        $region63: #{tpu_custom_call.1} parent=39 // pred_region
          %s5987 = smul.u32 20, %s24
          %s5989 = ssub.s32 5120, 5120
          %5990 = vsyncadd %s5980, %s5989
          %s5991 = smul.addr %s5987, 2
          %s5992 = smul.addr %s5991, 128
          %s5993 = scalar_lea.hbm %s5, %s5992
          %s5994 = sshll.u32 %s5983, 4
          %s5995 = int_to_ptr.vmem [resolvable:$true] %s5994
          %6000 = dma.vmem_to_hbm [thread:$0]  %s5995, 5120, %s5993, %s5980, 256, 256, 16
        $region64: #{tpu_custom_call.1} parent=39 // pred_fallthru
          _
      $region40: #{tpu_custom_call.1} parent=5 // pred_fallthru
        _
      %p6001 = scmp.le.s32.totalorder 2, %s19
      // Predicated region
      $region65: #{tpu_custom_call.1} parent=5 // pred_check
        %p6002 = pneg %p6001
      $region66: #{tpu_custom_call.1} parent=5 // pred_check_branch
        %6004 = sbr.rel (%p6002) target = $region68
      $region67: #{tpu_custom_call.1} parent=5 // pred_region
        %s6005 = ssub.s32 %s19, 2
        // Predicated region
        $region69: #{tpu_custom_call.1} parent=67 // pred_check
          %p6006 = pneg %p158
        $region70: #{tpu_custom_call.1} parent=67 // pred_check_branch
          %6008 = sbr.rel (%p6006) target = $region72
        $region71: #{tpu_custom_call.1} parent=67 // pred_region
          %s6009 = sand.u32 %s143, 1
          %s6010 = scalar_lea.sflag [#allocation4], %s6009
          %s6011 = sand.u32 %s143, 1
          %s6012 = smul.addr %s6011, 320
          %s6013 = scalar_lea.vmem [#allocation11], %s6012
          %6014 = dma.done %s6010, 5120
        $region72: #{tpu_custom_call.1} parent=67 // pred_fallthru
          _
      $region68: #{tpu_custom_call.1} parent=5 // pred_fallthru
        _
    $region6: #{tpu_custom_call.1} parent=1 // loop_footer
      %s23 = sadd.s32 1, %s19
    $region7: #{tpu_custom_call.1} parent=1 // loop_footer_branch
      %18 = sbr.rel target = $region3
    $region8: #{tpu_custom_call.1} parent=1 // loop_exit
      _
    %6015 = vsyncpa [#allocation3], 1
    %s6016 = scalar_lea.sflag [#allocation3], 1
    %6017 = vsyncpa %s6016, 1
    %6018 = vsyncpa [#allocation6], 1
    %6019 = vsyncpa [#allocation9], 1
    %6020 = vsyncpa [#allocation4], 1
    %s6021 = scalar_lea.sflag [#allocation4], 1
    %6022 = vsyncpa %s6021, 1

</llo_original>
